<compile_context>
chip_gen: v7x
topology: tpu7x:2x2x1
jax: 0.10.0
libtpu: 0.0.40
codegen_flags: <defaults>
</compile_context>

<pallas_src>
import functools

import jax
import jax.numpy as jnp
from jax.experimental import pallas as pl
from jax.experimental.pallas import tpu as pltpu


def _round_up(x, m):
    return ((x + m - 1) // m) * m


def _pad2(x, rows, cols):
    r, c = x.shape
    return jnp.pad(x, ((0, rows - r), (0, cols - c)))


# --------------------------------------------------------------------------
# Pass 1: per-layer, per-row projections (run ONCE per row tile).
# --------------------------------------------------------------------------
def _proj_kernel(write_emb, x_ref, e_ref, wl_ref, wr_ref, we_ref,
                 bl_ref, be_ref, *out_refs):
    if write_emb:
        z_ref, p_ref, emb_ref = out_refs
    else:
        (z_ref, p_ref), emb_ref = out_refs, None

    z = jnp.dot(x_ref[...], wl_ref[...], preferred_element_type=jnp.float32)
    z_ref[...] = z.astype(z_ref.dtype)

    emb = (jnp.dot(e_ref[...], we_ref[...], preferred_element_type=jnp.float32)
           + be_ref[...])
    p = (jnp.dot(x_ref[...], wr_ref[...], preferred_element_type=jnp.float32)
         + bl_ref[...] + emb)
    p_ref[...] = p.astype(p_ref.dtype)
    if write_emb:
        emb_ref[...] = emb.astype(emb_ref.dtype)


def projection_pass(x, e, wl_t, wr_t, we_t, bl, be, *, return_emb, tp):
    n_pad, fin_p = x.shape
    ein_p = e.shape[1]
    fout_p = wl_t.shape[1]

    row_spec = pl.BlockSpec((tp, fout_p), lambda i: (i, 0))
    z_shape = jax.ShapeDtypeStruct((n_pad, fout_p), jnp.bfloat16)
    p_shape = jax.ShapeDtypeStruct((n_pad, fout_p), jnp.float32)
    if return_emb:
        out_shape = (z_shape, p_shape,
                     jax.ShapeDtypeStruct((n_pad, fout_p), jnp.bfloat16))
        out_specs = (row_spec, row_spec, row_spec)
    else:
        out_shape = (z_shape, p_shape)
        out_specs = (row_spec, row_spec)

    vmem_est = 2 * (tp * (fin_p + ein_p) * 2                 # X, E tiles (bf16)
                    + (2 * fin_p + ein_p) * fout_p * 2       # Wl, Wr, We (bf16)
                    + 2 * fout_p * 4                         # biases (f32)
                    + tp * fout_p * (2 + 4 + 2))             # Z, P, emb outs
    vmem_limit = int(min(max(4 * vmem_est, 8 << 20), 48 << 20))

    return pl.pallas_call(
        functools.partial(_proj_kernel, return_emb),
        out_shape=out_shape,
        grid_spec=pltpu.PrefetchScalarGridSpec(
            num_scalar_prefetch=0,
            grid=(n_pad // tp,),
            in_specs=[
                pl.BlockSpec((tp, fin_p), lambda i: (i, 0)),       # X rows
                pl.BlockSpec((tp, ein_p), lambda i: (i, 0)),       # E rows
                pl.BlockSpec((fin_p, fout_p), lambda i: (0, 0)),   # Wl^T
                pl.BlockSpec((fin_p, fout_p), lambda i: (0, 0)),   # Wr^T
                pl.BlockSpec((ein_p, fout_p), lambda i: (0, 0)),   # We^T
                pl.BlockSpec((1, fout_p), lambda i: (0, 0)),       # bl
                pl.BlockSpec((1, fout_p), lambda i: (0, 0)),       # be
            ],
            out_specs=out_specs),
        compiler_params=pltpu.CompilerParams(
            dimension_semantics=("parallel",),
            vmem_limit_bytes=vmem_limit),
    )(x, e, wl_t, wr_t, we_t, bl, be)


# --------------------------------------------------------------------------
# Pass 2: streaming mean-aggregation  acc += A_tile @ Z_tile  (+ epilogue)
# --------------------------------------------------------------------------
def _aggr_kernel(apply_relu, b_ref, z_ref, p_ref, dinv_ref, o_ref, acc_ref):
    k = pl.program_id(1)

    @pl.when(k == 0)
    def _():
        acc_ref[...] = jnp.zeros_like(acc_ref)

    # A stored as 8-bit edge counts in HBM; upcast to bf16 on the VPU (slack in
    # this DMA-bound kernel). MXU runs bf16 on every generation (v7x has no
    # int8 MXU path, so no integer matmul is ever emitted).
    a_tile = b_ref[...].astype(jnp.bfloat16)
    acc_ref[...] += jnp.dot(a_tile, z_ref[...],
                            preferred_element_type=jnp.float32)

    @pl.when(k == pl.num_programs(1) - 1)
    def _():
        # mean aggregation = f32 1/deg row-scale; lin_l bias + lin_r(x) +
        # Linear(emb) + biases were all pre-folded into P by the projection.
        h = acc_ref[...] * dinv_ref[...] + p_ref[...]
        if apply_relu:
            h = jnp.maximum(h, 0.0)      # dropout p=0.0 -> identity
        o_ref[...] = h.astype(o_ref.dtype)


def aggregation_pass(adj8, z, p, dinv, *, apply_relu, tm, tk, out_dtype):
    n_pad = adj8.shape[0]
    fout_p = z.shape[1]
    grid = (n_pad // tm, n_pad // tk)

    vmem_est = (2 * tm * tk * 1          # A int8 (double buffered)
                + tm * tk * 2            # bf16 upcast temp (worst case)
                + 2 * tk * fout_p * 2    # Z tiles
                + 2 * tm * fout_p * 4    # P tiles
                + 2 * tm * 4             # 1/deg tiles
                + tm * fout_p * 4        # f32 accumulator scratch
                + 2 * tm * fout_p * 4)   # output tiles
    vmem_limit = int(min(max(4 * vmem_est, 8 << 20), 48 << 20))

    return pl.pallas_call(
        functools.partial(_aggr_kernel, apply_relu),
        out_shape=jax.ShapeDtypeStruct((n_pad, fout_p), out_dtype),
        grid_spec=pltpu.PrefetchScalarGridSpec(
            num_scalar_prefetch=0,
            grid=grid,
            in_specs=[
                pl.BlockSpec((tm, tk), lambda i, k: (i, k)),        # A tile
                pl.BlockSpec((tk, fout_p), lambda i, k: (k, 0)),    # Z tile
                pl.BlockSpec((tm, fout_p), lambda i, k: (i, 0)),    # P (per-row)
                pl.BlockSpec((tm, 1), lambda i, k: (i, 0)),         # 1/deg
            ],
            out_specs=pl.BlockSpec((tm, fout_p), lambda i, k: (i, 0)),
            scratch_shapes=[pltpu.VMEM((tm, fout_p), jnp.float32)]),
        compiler_params=pltpu.CompilerParams(
            dimension_semantics=("parallel", "arbitrary"),
            vmem_limit_bytes=vmem_limit),
    )(adj8, z, p, dinv)


# --------------------------------------------------------------------------
# Glue (plain JAX): dense adjacency (8-bit edge counts) + f32 1/deg
# --------------------------------------------------------------------------
def build_adjacency(edge_index, num_nodes):
    """Counts[i, j] = #edges j -> i (PyG mean aggregation over incoming edges).

    Returns (int8 counts, f32 1/deg column). Counts are exact in int8/bf16 for
    edge multiplicities < 128 (same duplicate-edge semantics as scatter-mean).
    """
    src, dst = edge_index[0], edge_index[1]
    counts = jnp.zeros((num_nodes, num_nodes), jnp.float32).at[dst, src].add(1.0)
    deg = counts.sum(axis=1, keepdims=True)
    dinv = 1.0 / jnp.maximum(deg, 1.0)
    return counts.astype(jnp.int8), dinv


def init_classifier_params(key, feat_len, emb_len, hidden, out_channels, max_depth=2):
    """Deterministic synthetic parameters, same shapes as the PyTorch module."""
    dims = [(feat_len, emb_len, hidden)]
    for _ in range(max_depth - 2):
        dims.append((hidden, emb_len, hidden))
    dims.append((hidden, emb_len, out_channels))

    params = []
    for (fin, ein, fout) in dims:
        key, k1, k2, k3, k4, k5 = jax.random.split(key, 6)
        s_f = 1.0 / jnp.sqrt(float(fin))
        s_e = 1.0 / jnp.sqrt(float(ein))
        params.append(dict(
            wl_t=jax.random.uniform(k1, (fin, fout), jnp.float32, -s_f, s_f),
            bl=jax.random.uniform(k2, (1, fout), jnp.float32, -s_f, s_f),
            wr_t=jax.random.uniform(k3, (fin, fout), jnp.float32, -s_f, s_f),
            we_t=jax.random.uniform(k4, (ein, fout), jnp.float32, -s_e, s_e),
            be=jax.random.uniform(k5, (1, fout), jnp.float32, -s_e, s_e),
        ))
    return params


@functools.partial(jax.jit, static_argnames=("num_nodes",))
def classifier_forward(params, x_feat, x_emb, edge_index, num_nodes):
    # x_emb: (N, K, emb_len) -> mean over dim 1 (plain-JAX glue)
    x_emb = x_emb.mean(axis=1)
    adj8, dinv = build_adjacency(edge_index, num_nodes)

    # ---- tiling / padding (lane-dense, (8,128)-aligned) ----
    n = num_nodes
    n128 = _round_up(n, 128)
    if n128 <= 1024:
        # Small graphs: full reduction dim, but keep >=2 row tiles so both
        # v7x TensorCores get work on the "parallel" axis.
        tk = n128
        tm = max(n128 // 2, 64)
        n_pad = n128
    elif n128 <= 8192:
        tm, tk = 512, 1024
        n_pad = _round_up(n, 1024)
    else:
        tm, tk = 1024, 2048
        n_pad = _round_up(n, 2048)

    adj8_p = _pad2(adj8, n_pad, n_pad)                         # int8, N^2 stream
    dinv_p = _pad2(dinv, n_pad, 1)                             # f32 row scale
    x = _pad2(x_feat, n_pad, _round_up(x_feat.shape[1], 128)).astype(jnp.bfloat16)
    e = _pad2(x_emb, n_pad, _round_up(x_emb.shape[1], 128)).astype(jnp.bfloat16)

    n_layers = len(params)
    out_channels = params[-1]["wl_t"].shape[1]
    for i, p in enumerate(params):
        last = (i == n_layers - 1)
        fin_p, ein_p = x.shape[1], e.shape[1]
        fout_p = _round_up(p["wl_t"].shape[1], 128)
        wl = _pad2(p["wl_t"], fin_p, fout_p).astype(jnp.bfloat16)
        wr = _pad2(p["wr_t"], fin_p, fout_p).astype(jnp.bfloat16)
        we = _pad2(p["we_t"], ein_p, fout_p).astype(jnp.bfloat16)
        bl = _pad2(p["bl"], 1, fout_p)                          # biases stay f32
        be = _pad2(p["be"], 1, fout_p)

        proj = projection_pass(x, e, wl, wr, we, bl, be,
                               return_emb=not last, tp=tm)
        if last:
            z, p_row = proj
        else:
            z, p_row, e_next = proj

        x = aggregation_pass(adj8_p, z, p_row, dinv_p,
                             apply_relu=not last, tm=tm, tk=tk,
                             out_dtype=jnp.float32 if last else jnp.bfloat16)
        if not last:
            e = e_next

    return x[:num_nodes, :out_channels]


# --------------------------------------------------------------------------
# Pure-JAX reference (f32) for a correctness sanity check
# --------------------------------------------------------------------------
def reference_forward(params, x_feat, x_emb, edge_index, num_nodes):
    x_emb = x_emb.mean(axis=1)
    src, dst = edge_index[0], edge_index[1]
    a = jnp.zeros((num_nodes, num_nodes), jnp.float32).at[dst, src].add(1.0)
    deg = a.sum(axis=1, keepdims=True)
    adj = a / jnp.maximum(deg, 1.0)
    n_layers = len(params)
    for i, p in enumerate(params):
        aggr = adj @ x_feat
        h = aggr @ p["wl_t"] + p["bl"] + x_feat @ p["wr_t"]
        emb = x_emb @ p["we_t"] + p["be"]
        x_feat = h + emb
        x_emb = emb
        if i != n_layers - 1:
            x_feat = jnp.maximum(x_feat, 0.0)
    return x_feat


if __name__ == "__main__":
    # Small deterministic example shapes.
    N = 32                # nodes
    FEAT_LEN = 16         # in_channels[0]
    HIDDEN = 32
    EMB_LEN = HIDDEN      # in_channels[1]; must equal hidden (see note above)
    OUT_CHANNELS = 8
    K = 3                 # mend_emb middle dim (reduced by mean(dim=1))
    E = 64                # edges
    MAX_DEPTH = 2

    key = jax.random.PRNGKey(0)
    k_x, k_e, k_src, k_dst, k_params = jax.random.split(key, 5)

    x_feat = jax.random.normal(k_x, (N, FEAT_LEN), jnp.float32)
    x_emb = jax.random.normal(k_e, (N, K, EMB_LEN), jnp.float32)
    edge_index = jnp.stack([
        jax.random.randint(k_src, (E,), 0, N),
        jax.random.randint(k_dst, (E,), 0, N),
    ]).astype(jnp.int32)

    params = init_classifier_params(k_params, FEAT_LEN, EMB_LEN, HIDDEN,
                                    OUT_CHANNELS, MAX_DEPTH)

    out = classifier_forward(params, x_feat, x_emb, edge_index, N)
    out = jax.block_until_ready(out)
    assert out.shape == (N, OUT_CHANNELS), out.shape

    ref = reference_forward(params, x_feat, x_emb, edge_index, N)
    assert bool(jnp.allclose(out, ref, rtol=1e-1, atol=1e-1)), (
        float(jnp.max(jnp.abs(out - ref))))

    print("KERNEL_OK")
</pallas_src>

<mosaic_0001>
module attributes {stable_mosaic.version = 11 : i64} {
  func.func private @main(%arg0: i32) attributes {dimension_semantics = [#tpu.dimension_semantics<core_parallel>], iteration_bounds = array<i64: 2>, tpu.core_type = #tpu.core_type<sc_scalar_subcore>, window_params = []} {
    return
  }
}

module attributes {stable_mosaic.version = 11 : i64} {
  func.func private @main(%arg0: i32) attributes {dimension_semantics = [#tpu.dimension_semantics<core_parallel>], iteration_bounds = array<i64: 2>, tpu.core_type = #tpu.core_type<sc_scalar_subcore>, window_params = []} {
    return
  }
}

module attributes {stable_mosaic.version = 11 : i64} {
  func.func @_proj_kernel(%arg0: i32, %arg1: memref<64x128xbf16, #tpu.memory_space<vmem>>, %arg2: memref<64x128xbf16, #tpu.memory_space<vmem>>, %arg3: memref<128x128xbf16, #tpu.memory_space<vmem>>, %arg4: memref<128x128xbf16, #tpu.memory_space<vmem>>, %arg5: memref<128x128xbf16, #tpu.memory_space<vmem>>, %arg6: memref<1x128xf32, #tpu.memory_space<vmem>>, %arg7: memref<1x128xf32, #tpu.memory_space<vmem>>, %arg8: memref<64x128xbf16, #tpu.memory_space<vmem>>, %arg9: memref<64x128xf32, #tpu.memory_space<vmem>>, %arg10: memref<64x128xbf16, #tpu.memory_space<vmem>>) attributes {dimension_semantics = [#tpu.dimension_semantics<parallel>], iteration_bounds = array<i64: 2>, scalar_prefetch = 0 : i64, scratch_operands = 0 : i64, tpu.core_type = #tpu.core_type<tc>, window_params = [{transform_indices = @transform_0, window_bounds = array<i64: 64, 128>}, {transform_indices = @transform_1, window_bounds = array<i64: 64, 128>}, {pipeline_mode = #tpu.pipeline_mode<synchronous>, transform_indices = @transform_2, window_bounds = array<i64: 128, 128>}, {pipeline_mode = #tpu.pipeline_mode<synchronous>, transform_indices = @transform_3, window_bounds = array<i64: 128, 128>}, {pipeline_mode = #tpu.pipeline_mode<synchronous>, transform_indices = @transform_4, window_bounds = array<i64: 128, 128>}, {pipeline_mode = #tpu.pipeline_mode<synchronous>, transform_indices = @transform_5, window_bounds = array<i64: 1, 128>}, {pipeline_mode = #tpu.pipeline_mode<synchronous>, transform_indices = @transform_6, window_bounds = array<i64: 1, 128>}, {transform_indices = @transform_7, window_bounds = array<i64: 64, 128>}, {transform_indices = @transform_8, window_bounds = array<i64: 64, 128>}, {transform_indices = @transform_9, window_bounds = array<i64: 64, 128>}]} {
    %c0 = arith.constant 0 : index
    %c0_0 = arith.constant 0 : index
    %0 = vector.load %arg1[%c0, %c0_0] : memref<64x128xbf16, #tpu.memory_space<vmem>>, vector<64x128xbf16>
    %c0_1 = arith.constant 0 : index
    %c0_2 = arith.constant 0 : index
    %1 = vector.load %arg3[%c0_1, %c0_2] : memref<128x128xbf16, #tpu.memory_space<vmem>>, vector<128x128xbf16>
    %cst = arith.constant dense<0.000000e+00> : vector<64x128xf32>
    %2 = tpu.matmul %0, %1, %cst {dimension_numbers = #tpu.dot_dimension_numbers<[1], [0], [0], [1], [0, 0, 1, 1], [], []>} : vector<64x128xbf16>, vector<128x128xbf16>, vector<64x128xf32> -> vector<64x128xf32>
    %3 = arith.truncf %2 : vector<64x128xf32> to vector<64x128xbf16>
    %c0_3 = arith.constant 0 : index
    %c0_4 = arith.constant 0 : index
    %4 = vector.load %arg8[%c0_3, %c0_4] : memref<64x128xbf16, #tpu.memory_space<vmem>>, vector<64x128xbf16>
    tpu.vector_store %arg8[%c0_3, %c0_4], %3 {strides = array<i32>} : memref<64x128xbf16, #tpu.memory_space<vmem>>, vector<64x128xbf16>,
    %c0_5 = arith.constant 0 : index
    %c0_6 = arith.constant 0 : index
    %5 = vector.load %arg2[%c0_5, %c0_6] : memref<64x128xbf16, #tpu.memory_space<vmem>>, vector<64x128xbf16>
    %c0_7 = arith.constant 0 : index
    %c0_8 = arith.constant 0 : index
    %6 = vector.load %arg5[%c0_7, %c0_8] : memref<128x128xbf16, #tpu.memory_space<vmem>>, vector<128x128xbf16>
    %cst_9 = arith.constant dense<0.000000e+00> : vector<64x128xf32>
    %7 = tpu.matmul %5, %6, %cst_9 {dimension_numbers = #tpu.dot_dimension_numbers<[1], [0], [0], [1], [0, 0, 1, 1], [], []>} : vector<64x128xbf16>, vector<128x128xbf16>, vector<64x128xf32> -> vector<64x128xf32>
    %c0_10 = arith.constant 0 : index
    %c0_11 = arith.constant 0 : index
    %8 = vector.load %arg7[%c0_10, %c0_11] : memref<1x128xf32, #tpu.memory_space<vmem>>, vector<1x128xf32>
    %9 = vector.broadcast %8 : vector<1x128xf32> to vector<64x128xf32>
    %10 = arith.addf %7, %9 : vector<64x128xf32>
    %c0_12 = arith.constant 0 : index
    %c0_13 = arith.constant 0 : index
    %11 = vector.load %arg1[%c0_12, %c0_13] : memref<64x128xbf16, #tpu.memory_space<vmem>>, vector<64x128xbf16>
    %c0_14 = arith.constant 0 : index
    %c0_15 = arith.constant 0 : index
    %12 = vector.load %arg4[%c0_14, %c0_15] : memref<128x128xbf16, #tpu.memory_space<vmem>>, vector<128x128xbf16>
    %cst_16 = arith.constant dense<0.000000e+00> : vector<64x128xf32>
    %13 = tpu.matmul %11, %12, %cst_16 {dimension_numbers = #tpu.dot_dimension_numbers<[1], [0], [0], [1], [0, 0, 1, 1], [], []>} : vector<64x128xbf16>, vector<128x128xbf16>, vector<64x128xf32> -> vector<64x128xf32>
    %c0_17 = arith.constant 0 : index
    %c0_18 = arith.constant 0 : index
    %14 = vector.load %arg6[%c0_17, %c0_18] : memref<1x128xf32, #tpu.memory_space<vmem>>, vector<1x128xf32>
    %15 = vector.broadcast %14 : vector<1x128xf32> to vector<64x128xf32>
    %16 = arith.addf %13, %15 : vector<64x128xf32>
    %17 = arith.addf %16, %10 : vector<64x128xf32>
    %c0_19 = arith.constant 0 : index
    %c0_20 = arith.constant 0 : index
    %18 = vector.load %arg9[%c0_19, %c0_20] : memref<64x128xf32, #tpu.memory_space<vmem>>, vector<64x128xf32>
    tpu.vector_store %arg9[%c0_19, %c0_20], %17 {strides = array<i32>} : memref<64x128xf32, #tpu.memory_space<vmem>>, vector<64x128xf32>,
    %19 = arith.truncf %10 : vector<64x128xf32> to vector<64x128xbf16>
    %c0_21 = arith.constant 0 : index
    %c0_22 = arith.constant 0 : index
    %20 = vector.load %arg10[%c0_21, %c0_22] : memref<64x128xbf16, #tpu.memory_space<vmem>>, vector<64x128xbf16>
    tpu.vector_store %arg10[%c0_21, %c0_22], %19 {strides = array<i32>} : memref<64x128xbf16, #tpu.memory_space<vmem>>, vector<64x128xbf16>,
    return
  }
  func.func @transform_0(%arg0: i32) -> (i32, i32) {
    %c0_i32 = arith.constant 0 : i32
    %c0_i32_0 = arith.constant 0 : i32
    return %arg0, %c0_i32 : i32, i32
  }
  func.func @transform_1(%arg0: i32) -> (i32, i32) {
    %c0_i32 = arith.constant 0 : i32
    %c0_i32_0 = arith.constant 0 : i32
    return %arg0, %c0_i32 : i32, i32
  }
  func.func @transform_2(%arg0: i32) -> (i32, i32) {
    %c0_i32 = arith.constant 0 : i32
    %c0_i32_0 = arith.constant 0 : i32
    %c0_i32_1 = arith.constant 0 : i32
    return %c0_i32, %c0_i32_0 : i32, i32
  }
  func.func @transform_3(%arg0: i32) -> (i32, i32) {
    %c0_i32 = arith.constant 0 : i32
    %c0_i32_0 = arith.constant 0 : i32
    %c0_i32_1 = arith.constant 0 : i32
    return %c0_i32, %c0_i32_0 : i32, i32
  }
  func.func @transform_4(%arg0: i32) -> (i32, i32) {
    %c0_i32 = arith.constant 0 : i32
    %c0_i32_0 = arith.constant 0 : i32
    %c0_i32_1 = arith.constant 0 : i32
    return %c0_i32, %c0_i32_0 : i32, i32
  }
  func.func @transform_5(%arg0: i32) -> (i32, i32) {
    %c0_i32 = arith.constant 0 : i32
    %c0_i32_0 = arith.constant 0 : i32
    %c0_i32_1 = arith.constant 0 : i32
    return %c0_i32, %c0_i32_0 : i32, i32
  }
  func.func @transform_6(%arg0: i32) -> (i32, i32) {
    %c0_i32 = arith.constant 0 : i32
    %c0_i32_0 = arith.constant 0 : i32
    %c0_i32_1 = arith.constant 0 : i32
    return %c0_i32, %c0_i32_0 : i32, i32
  }
  func.func @transform_7(%arg0: i32) -> (i32, i32) {
    %c0_i32 = arith.constant 0 : i32
    %c0_i32_0 = arith.constant 0 : i32
    return %arg0, %c0_i32 : i32, i32
  }
  func.func @transform_8(%arg0: i32) -> (i32, i32) {
    %c0_i32 = arith.constant 0 : i32
    %c0_i32_0 = arith.constant 0 : i32
    return %arg0, %c0_i32 : i32, i32
  }
  func.func @transform_9(%arg0: i32) -> (i32, i32) {
    %c0_i32 = arith.constant 0 : i32
    %c0_i32_0 = arith.constant 0 : i32
    return %arg0, %c0_i32 : i32, i32
  }
}

module attributes {stable_mosaic.version = 11 : i64} {
  func.func @_aggr_kernel(%arg0: i32, %arg1: i32, %arg2: memref<64x128xi8, #tpu.memory_space<vmem>>, %arg3: memref<128x128xbf16, #tpu.memory_space<vmem>>, %arg4: memref<64x128xf32, #tpu.memory_space<vmem>>, %arg5: memref<64x1xf32, #tpu.memory_space<vmem>>, %arg6: memref<64x128xbf16, #tpu.memory_space<vmem>>, %arg7: memref<64x128xf32, #tpu.memory_space<vmem>>) attributes {dimension_semantics = [#tpu.dimension_semantics<parallel>, #tpu.dimension_semantics<arbitrary>], iteration_bounds = array<i64: 2, 1>, scalar_prefetch = 0 : i64, scratch_operands = 1 : i64, tpu.core_type = #tpu.core_type<tc>, window_params = [{transform_indices = @transform_0, window_bounds = array<i64: 64, 128>}, {transform_indices = @transform_1, window_bounds = array<i64: 128, 128>}, {transform_indices = @transform_2, window_bounds = array<i64: 64, 128>}, {transform_indices = @transform_3, window_bounds = array<i64: 64, 1>}, {transform_indices = @transform_4, window_bounds = array<i64: 64, 128>}]} {
    %c0_i32 = arith.constant 0 : i32
    %0 = arith.cmpi eq, %arg1, %c0_i32 : i32
    %1 = arith.extui %0 : i1 to i32
    %c0_i32_0 = arith.constant 0 : i32
    %2 = arith.cmpi ne, %1, %c0_i32_0 : i32
    scf.if %2 {
      %cst_10 = arith.constant 0.000000e+00 : f32
      %13 = vector.broadcast %cst_10 : f32 to vector<64x128xf32>
      %c0_11 = arith.constant 0 : index
      %c0_12 = arith.constant 0 : index
      %14 = vector.load %arg7[%c0_11, %c0_12] : memref<64x128xf32, #tpu.memory_space<vmem>>, vector<64x128xf32>
      tpu.vector_store %arg7[%c0_11, %c0_12], %13 {strides = array<i32>} : memref<64x128xf32, #tpu.memory_space<vmem>>, vector<64x128xf32>,
    } else {
    }
    %c0 = arith.constant 0 : index
    %c0_1 = arith.constant 0 : index
    %3 = vector.load %arg2[%c0, %c0_1] : memref<64x128xi8, #tpu.memory_space<vmem>>, vector<64x128xi8>
    %4 = arith.sitofp %3 : vector<64x128xi8> to vector<64x128xbf16>
    %c0_2 = arith.constant 0 : index
    %c0_3 = arith.constant 0 : index
    %5 = vector.load %arg7[%c0_2, %c0_3] : memref<64x128xf32, #tpu.memory_space<vmem>>, vector<64x128xf32>
    %c0_4 = arith.constant 0 : index
    %c0_5 = arith.constant 0 : index
    %6 = vector.load %arg3[%c0_4, %c0_5] : memref<128x128xbf16, #tpu.memory_space<vmem>>, vector<128x128xbf16>
    %cst = arith.constant dense<0.000000e+00> : vector<64x128xf32>
    %7 = tpu.matmul %4, %6, %cst {dimension_numbers = #tpu.dot_dimension_numbers<[1], [0], [0], [1], [0, 0, 1, 1], [], []>} : vector<64x128xbf16>, vector<128x128xbf16>, vector<64x128xf32> -> vector<64x128xf32>
    %8 = arith.addf %5, %7 : vector<64x128xf32>
    %c0_6 = arith.constant 0 : index
    %c0_7 = arith.constant 0 : index
    %9 = vector.load %arg7[%c0_6, %c0_7] : memref<64x128xf32, #tpu.memory_space<vmem>>, vector<64x128xf32>
    tpu.vector_store %arg7[%c0_6, %c0_7], %8 {strides = array<i32>} : memref<64x128xf32, #tpu.memory_space<vmem>>, vector<64x128xf32>,
    %c0_i32_8 = arith.constant 0 : i32
    %10 = arith.cmpi eq, %arg1, %c0_i32_8 : i32
    %11 = arith.extui %10 : i1 to i32
    %c0_i32_9 = arith.constant 0 : i32
    %12 = arith.cmpi ne, %11, %c0_i32_9 : i32
    scf.if %12 {
      %c0_10 = arith.constant 0 : index
      %c0_11 = arith.constant 0 : index
      %13 = vector.load %arg7[%c0_10, %c0_11] : memref<64x128xf32, #tpu.memory_space<vmem>>, vector<64x128xf32>
      %c0_12 = arith.constant 0 : index
      %c0_13 = arith.constant 0 : index
      %14 = vector.load %arg5[%c0_12, %c0_13] : memref<64x1xf32, #tpu.memory_space<vmem>>, vector<64x1xf32>
      %15 = vector.broadcast %14 : vector<64x1xf32> to vector<64x128xf32>
      %16 = arith.mulf %13, %15 : vector<64x128xf32>
      %c0_14 = arith.constant 0 : index
      %c0_15 = arith.constant 0 : index
      %17 = vector.load %arg4[%c0_14, %c0_15] : memref<64x128xf32, #tpu.memory_space<vmem>>, vector<64x128xf32>
      %18 = arith.addf %16, %17 : vector<64x128xf32>
      %cst_16 = arith.constant 0.000000e+00 : f32
      %19 = vector.broadcast %cst_16 : f32 to vector<64x128xf32>
      %20 = arith.maximumf %18, %19 : vector<64x128xf32>
      %21 = arith.truncf %20 : vector<64x128xf32> to vector<64x128xbf16>
      %c0_17 = arith.constant 0 : index
      %c0_18 = arith.constant 0 : index
      %22 = vector.load %arg6[%c0_17, %c0_18] : memref<64x128xbf16, #tpu.memory_space<vmem>>, vector<64x128xbf16>
      tpu.vector_store %arg6[%c0_17, %c0_18], %21 {strides = array<i32>} : memref<64x128xbf16, #tpu.memory_space<vmem>>, vector<64x128xbf16>,
    } else {
    }
    return
  }
  func.func @transform_0(%arg0: i32, %arg1: i32) -> (i32, i32) {
    %c0_i32 = arith.constant 0 : i32
    return %arg0, %arg1 : i32, i32
  }
  func.func @transform_1(%arg0: i32, %arg1: i32) -> (i32, i32) {
    %c0_i32 = arith.constant 0 : i32
    %c0_i32_0 = arith.constant 0 : i32
    return %arg1, %c0_i32 : i32, i32
  }
  func.func @transform_2(%arg0: i32, %arg1: i32) -> (i32, i32) {
    %c0_i32 = arith.constant 0 : i32
    %c0_i32_0 = arith.constant 0 : i32
    return %arg0, %c0_i32 : i32, i32
  }
  func.func @transform_3(%arg0: i32, %arg1: i32) -> (i32, i32) {
    %c0_i32 = arith.constant 0 : i32
    %c0_i32_0 = arith.constant 0 : i32
    return %arg0, %c0_i32 : i32, i32
  }
  func.func @transform_4(%arg0: i32, %arg1: i32) -> (i32, i32) {
    %c0_i32 = arith.constant 0 : i32
    %c0_i32_0 = arith.constant 0 : i32
    return %arg0, %c0_i32 : i32, i32
  }
}

module attributes {stable_mosaic.version = 11 : i64} {
  func.func @_proj_kernel(%arg0: i32, %arg1: memref<64x128xbf16, #tpu.memory_space<vmem>>, %arg2: memref<64x128xbf16, #tpu.memory_space<vmem>>, %arg3: memref<128x128xbf16, #tpu.memory_space<vmem>>, %arg4: memref<128x128xbf16, #tpu.memory_space<vmem>>, %arg5: memref<128x128xbf16, #tpu.memory_space<vmem>>, %arg6: memref<1x128xf32, #tpu.memory_space<vmem>>, %arg7: memref<1x128xf32, #tpu.memory_space<vmem>>, %arg8: memref<64x128xbf16, #tpu.memory_space<vmem>>, %arg9: memref<64x128xf32, #tpu.memory_space<vmem>>) attributes {dimension_semantics = [#tpu.dimension_semantics<parallel>], iteration_bounds = array<i64: 2>, scalar_prefetch = 0 : i64, scratch_operands = 0 : i64, tpu.core_type = #tpu.core_type<tc>, window_params = [{transform_indices = @transform_0, window_bounds = array<i64: 64, 128>}, {transform_indices = @transform_1, window_bounds = array<i64: 64, 128>}, {pipeline_mode = #tpu.pipeline_mode<synchronous>, transform_indices = @transform_2, window_bounds = array<i64: 128, 128>}, {pipeline_mode = #tpu.pipeline_mode<synchronous>, transform_indices = @transform_3, window_bounds = array<i64: 128, 128>}, {pipeline_mode = #tpu.pipeline_mode<synchronous>, transform_indices = @transform_4, window_bounds = array<i64: 128, 128>}, {pipeline_mode = #tpu.pipeline_mode<synchronous>, transform_indices = @transform_5, window_bounds = array<i64: 1, 128>}, {pipeline_mode = #tpu.pipeline_mode<synchronous>, transform_indices = @transform_6, window_bounds = array<i64: 1, 128>}, {transform_indices = @transform_7, window_bounds = array<i64: 64, 128>}, {transform_indices = @transform_8, window_bounds = array<i64: 64, 128>}]} {
    %c0 = arith.constant 0 : index
    %c0_0 = arith.constant 0 : index
    %0 = vector.load %arg1[%c0, %c0_0] : memref<64x128xbf16, #tpu.memory_space<vmem>>, vector<64x128xbf16>
    %c0_1 = arith.constant 0 : index
    %c0_2 = arith.constant 0 : index
    %1 = vector.load %arg3[%c0_1, %c0_2] : memref<128x128xbf16, #tpu.memory_space<vmem>>, vector<128x128xbf16>
    %cst = arith.constant dense<0.000000e+00> : vector<64x128xf32>
    %2 = tpu.matmul %0, %1, %cst {dimension_numbers = #tpu.dot_dimension_numbers<[1], [0], [0], [1], [0, 0, 1, 1], [], []>} : vector<64x128xbf16>, vector<128x128xbf16>, vector<64x128xf32> -> vector<64x128xf32>
    %3 = arith.truncf %2 : vector<64x128xf32> to vector<64x128xbf16>
    %c0_3 = arith.constant 0 : index
    %c0_4 = arith.constant 0 : index
    %4 = vector.load %arg8[%c0_3, %c0_4] : memref<64x128xbf16, #tpu.memory_space<vmem>>, vector<64x128xbf16>
    tpu.vector_store %arg8[%c0_3, %c0_4], %3 {strides = array<i32>} : memref<64x128xbf16, #tpu.memory_space<vmem>>, vector<64x128xbf16>,
    %c0_5 = arith.constant 0 : index
    %c0_6 = arith.constant 0 : index
    %5 = vector.load %arg2[%c0_5, %c0_6] : memref<64x128xbf16, #tpu.memory_space<vmem>>, vector<64x128xbf16>
    %c0_7 = arith.constant 0 : index
    %c0_8 = arith.constant 0 : index
    %6 = vector.load %arg5[%c0_7, %c0_8] : memref<128x128xbf16, #tpu.memory_space<vmem>>, vector<128x128xbf16>
    %cst_9 = arith.constant dense<0.000000e+00> : vector<64x128xf32>
    %7 = tpu.matmul %5, %6, %cst_9 {dimension_numbers = #tpu.dot_dimension_numbers<[1], [0], [0], [1], [0, 0, 1, 1], [], []>} : vector<64x128xbf16>, vector<128x128xbf16>, vector<64x128xf32> -> vector<64x128xf32>
    %c0_10 = arith.constant 0 : index
    %c0_11 = arith.constant 0 : index
    %8 = vector.load %arg7[%c0_10, %c0_11] : memref<1x128xf32, #tpu.memory_space<vmem>>, vector<1x128xf32>
    %9 = vector.broadcast %8 : vector<1x128xf32> to vector<64x128xf32>
    %10 = arith.addf %7, %9 : vector<64x128xf32>
    %c0_12 = arith.constant 0 : index
    %c0_13 = arith.constant 0 : index
    %11 = vector.load %arg1[%c0_12, %c0_13] : memref<64x128xbf16, #tpu.memory_space<vmem>>, vector<64x128xbf16>
    %c0_14 = arith.constant 0 : index
    %c0_15 = arith.constant 0 : index
    %12 = vector.load %arg4[%c0_14, %c0_15] : memref<128x128xbf16, #tpu.memory_space<vmem>>, vector<128x128xbf16>
    %cst_16 = arith.constant dense<0.000000e+00> : vector<64x128xf32>
    %13 = tpu.matmul %11, %12, %cst_16 {dimension_numbers = #tpu.dot_dimension_numbers<[1], [0], [0], [1], [0, 0, 1, 1], [], []>} : vector<64x128xbf16>, vector<128x128xbf16>, vector<64x128xf32> -> vector<64x128xf32>
    %c0_17 = arith.constant 0 : index
    %c0_18 = arith.constant 0 : index
    %14 = vector.load %arg6[%c0_17, %c0_18] : memref<1x128xf32, #tpu.memory_space<vmem>>, vector<1x128xf32>
    %15 = vector.broadcast %14 : vector<1x128xf32> to vector<64x128xf32>
    %16 = arith.addf %13, %15 : vector<64x128xf32>
    %17 = arith.addf %16, %10 : vector<64x128xf32>
    %c0_19 = arith.constant 0 : index
    %c0_20 = arith.constant 0 : index
    %18 = vector.load %arg9[%c0_19, %c0_20] : memref<64x128xf32, #tpu.memory_space<vmem>>, vector<64x128xf32>
    tpu.vector_store %arg9[%c0_19, %c0_20], %17 {strides = array<i32>} : memref<64x128xf32, #tpu.memory_space<vmem>>, vector<64x128xf32>,
    return
  }
  func.func @transform_0(%arg0: i32) -> (i32, i32) {
    %c0_i32 = arith.constant 0 : i32
    %c0_i32_0 = arith.constant 0 : i32
    return %arg0, %c0_i32 : i32, i32
  }
  func.func @transform_1(%arg0: i32) -> (i32, i32) {
    %c0_i32 = arith.constant 0 : i32
    %c0_i32_0 = arith.constant 0 : i32
    return %arg0, %c0_i32 : i32, i32
  }
  func.func @transform_2(%arg0: i32) -> (i32, i32) {
    %c0_i32 = arith.constant 0 : i32
    %c0_i32_0 = arith.constant 0 : i32
    %c0_i32_1 = arith.constant 0 : i32
    return %c0_i32, %c0_i32_0 : i32, i32
  }
  func.func @transform_3(%arg0: i32) -> (i32, i32) {
    %c0_i32 = arith.constant 0 : i32
    %c0_i32_0 = arith.constant 0 : i32
    %c0_i32_1 = arith.constant 0 : i32
    return %c0_i32, %c0_i32_0 : i32, i32
  }
  func.func @transform_4(%arg0: i32) -> (i32, i32) {
    %c0_i32 = arith.constant 0 : i32
    %c0_i32_0 = arith.constant 0 : i32
    %c0_i32_1 = arith.constant 0 : i32
    return %c0_i32, %c0_i32_0 : i32, i32
  }
  func.func @transform_5(%arg0: i32) -> (i32, i32) {
    %c0_i32 = arith.constant 0 : i32
    %c0_i32_0 = arith.constant 0 : i32
    %c0_i32_1 = arith.constant 0 : i32
    return %c0_i32, %c0_i32_0 : i32, i32
  }
  func.func @transform_6(%arg0: i32) -> (i32, i32) {
    %c0_i32 = arith.constant 0 : i32
    %c0_i32_0 = arith.constant 0 : i32
    %c0_i32_1 = arith.constant 0 : i32
    return %c0_i32, %c0_i32_0 : i32, i32
  }
  func.func @transform_7(%arg0: i32) -> (i32, i32) {
    %c0_i32 = arith.constant 0 : i32
    %c0_i32_0 = arith.constant 0 : i32
    return %arg0, %c0_i32 : i32, i32
  }
  func.func @transform_8(%arg0: i32) -> (i32, i32) {
    %c0_i32 = arith.constant 0 : i32
    %c0_i32_0 = arith.constant 0 : i32
    return %arg0, %c0_i32 : i32, i32
  }
}

module attributes {stable_mosaic.version = 11 : i64} {
  func.func @_aggr_kernel(%arg0: i32, %arg1: i32, %arg2: memref<64x128xi8, #tpu.memory_space<vmem>>, %arg3: memref<128x128xbf16, #tpu.memory_space<vmem>>, %arg4: memref<64x128xf32, #tpu.memory_space<vmem>>, %arg5: memref<64x1xf32, #tpu.memory_space<vmem>>, %arg6: memref<64x128xf32, #tpu.memory_space<vmem>>, %arg7: memref<64x128xf32, #tpu.memory_space<vmem>>) attributes {dimension_semantics = [#tpu.dimension_semantics<parallel>, #tpu.dimension_semantics<arbitrary>], iteration_bounds = array<i64: 2, 1>, scalar_prefetch = 0 : i64, scratch_operands = 1 : i64, tpu.core_type = #tpu.core_type<tc>, window_params = [{transform_indices = @transform_0, window_bounds = array<i64: 64, 128>}, {transform_indices = @transform_1, window_bounds = array<i64: 128, 128>}, {transform_indices = @transform_2, window_bounds = array<i64: 64, 128>}, {transform_indices = @transform_3, window_bounds = array<i64: 64, 1>}, {transform_indices = @transform_4, window_bounds = array<i64: 64, 128>}]} {
    %c0_i32 = arith.constant 0 : i32
    %0 = arith.cmpi eq, %arg1, %c0_i32 : i32
    %1 = arith.extui %0 : i1 to i32
    %c0_i32_0 = arith.constant 0 : i32
    %2 = arith.cmpi ne, %1, %c0_i32_0 : i32
    scf.if %2 {
      %cst_10 = arith.constant 0.000000e+00 : f32
      %13 = vector.broadcast %cst_10 : f32 to vector<64x128xf32>
      %c0_11 = arith.constant 0 : index
      %c0_12 = arith.constant 0 : index
      %14 = vector.load %arg7[%c0_11, %c0_12] : memref<64x128xf32, #tpu.memory_space<vmem>>, vector<64x128xf32>
      tpu.vector_store %arg7[%c0_11, %c0_12], %13 {strides = array<i32>} : memref<64x128xf32, #tpu.memory_space<vmem>>, vector<64x128xf32>,
    } else {
    }
    %c0 = arith.constant 0 : index
    %c0_1 = arith.constant 0 : index
    %3 = vector.load %arg2[%c0, %c0_1] : memref<64x128xi8, #tpu.memory_space<vmem>>, vector<64x128xi8>
    %4 = arith.sitofp %3 : vector<64x128xi8> to vector<64x128xbf16>
    %c0_2 = arith.constant 0 : index
    %c0_3 = arith.constant 0 : index
    %5 = vector.load %arg7[%c0_2, %c0_3] : memref<64x128xf32, #tpu.memory_space<vmem>>, vector<64x128xf32>
    %c0_4 = arith.constant 0 : index
    %c0_5 = arith.constant 0 : index
    %6 = vector.load %arg3[%c0_4, %c0_5] : memref<128x128xbf16, #tpu.memory_space<vmem>>, vector<128x128xbf16>
    %cst = arith.constant dense<0.000000e+00> : vector<64x128xf32>
    %7 = tpu.matmul %4, %6, %cst {dimension_numbers = #tpu.dot_dimension_numbers<[1], [0], [0], [1], [0, 0, 1, 1], [], []>} : vector<64x128xbf16>, vector<128x128xbf16>, vector<64x128xf32> -> vector<64x128xf32>
    %8 = arith.addf %5, %7 : vector<64x128xf32>
    %c0_6 = arith.constant 0 : index
    %c0_7 = arith.constant 0 : index
    %9 = vector.load %arg7[%c0_6, %c0_7] : memref<64x128xf32, #tpu.memory_space<vmem>>, vector<64x128xf32>
    tpu.vector_store %arg7[%c0_6, %c0_7], %8 {strides = array<i32>} : memref<64x128xf32, #tpu.memory_space<vmem>>, vector<64x128xf32>,
    %c0_i32_8 = arith.constant 0 : i32
    %10 = arith.cmpi eq, %arg1, %c0_i32_8 : i32
    %11 = arith.extui %10 : i1 to i32
    %c0_i32_9 = arith.constant 0 : i32
    %12 = arith.cmpi ne, %11, %c0_i32_9 : i32
    scf.if %12 {
      %c0_10 = arith.constant 0 : index
      %c0_11 = arith.constant 0 : index
      %13 = vector.load %arg7[%c0_10, %c0_11] : memref<64x128xf32, #tpu.memory_space<vmem>>, vector<64x128xf32>
      %c0_12 = arith.constant 0 : index
      %c0_13 = arith.constant 0 : index
      %14 = vector.load %arg5[%c0_12, %c0_13] : memref<64x1xf32, #tpu.memory_space<vmem>>, vector<64x1xf32>
      %15 = vector.broadcast %14 : vector<64x1xf32> to vector<64x128xf32>
      %16 = arith.mulf %13, %15 : vector<64x128xf32>
      %c0_14 = arith.constant 0 : index
      %c0_15 = arith.constant 0 : index
      %17 = vector.load %arg4[%c0_14, %c0_15] : memref<64x128xf32, #tpu.memory_space<vmem>>, vector<64x128xf32>
      %18 = arith.addf %16, %17 : vector<64x128xf32>
      %c0_16 = arith.constant 0 : index
      %c0_17 = arith.constant 0 : index
      %19 = vector.load %arg6[%c0_16, %c0_17] : memref<64x128xf32, #tpu.memory_space<vmem>>, vector<64x128xf32>
      tpu.vector_store %arg6[%c0_16, %c0_17], %18 {strides = array<i32>} : memref<64x128xf32, #tpu.memory_space<vmem>>, vector<64x128xf32>,
    } else {
    }
    return
  }
  func.func @transform_0(%arg0: i32, %arg1: i32) -> (i32, i32) {
    %c0_i32 = arith.constant 0 : i32
    return %arg0, %arg1 : i32, i32
  }
  func.func @transform_1(%arg0: i32, %arg1: i32) -> (i32, i32) {
    %c0_i32 = arith.constant 0 : i32
    %c0_i32_0 = arith.constant 0 : i32
    return %arg1, %c0_i32 : i32, i32
  }
  func.func @transform_2(%arg0: i32, %arg1: i32) -> (i32, i32) {
    %c0_i32 = arith.constant 0 : i32
    %c0_i32_0 = arith.constant 0 : i32
    return %arg0, %c0_i32 : i32, i32
  }
  func.func @transform_3(%arg0: i32, %arg1: i32) -> (i32, i32) {
    %c0_i32 = arith.constant 0 : i32
    %c0_i32_0 = arith.constant 0 : i32
    return %arg0, %c0_i32 : i32, i32
  }
  func.func @transform_4(%arg0: i32, %arg1: i32) -> (i32, i32) {
    %c0_i32 = arith.constant 0 : i32
    %c0_i32_0 = arith.constant 0 : i32
    return %arg0, %c0_i32 : i32, i32
  }
}

</mosaic_0001>

<llo_original>
// kernel: classifier_forward.4
$region0: #{classifier_forward.4}
  #allocation0 [shape = 'u32[]', space=smem, size = 0x4, offset = 0x4, fixed_abs, tag = 'smem constant byte address 0x4 - core index']
  #allocation1 [shape = 'u32[144,128]{1,0:T(1,128)}', space=vmem, size = 0x12000, scoped, tag = 'internal scratch']
  %s0 = inlined_call_operand.vmem [shape: bf16[128,128], index: 0, kind: input, shape index: {}]
  %s1 = inlined_call_operand.vmem [shape: bf16[128,128], index: 1, kind: input, shape index: {}]
  %s2 = inlined_call_operand.vmem [shape: bf16[128,128], index: 2, kind: input, shape index: {}]
  %s3 = inlined_call_operand.vmem [shape: bf16[128,128], index: 3, kind: input, shape index: {}]
  %s4 = inlined_call_operand.vmem [shape: bf16[128,128], index: 4, kind: input, shape index: {}]
  %s5 = inlined_call_operand.vmem [shape: f32[1,128], index: 5, kind: input, shape index: {}]
  %s6 = inlined_call_operand.vmem [shape: f32[1,128], index: 6, kind: input, shape index: {}]
  %s7 = inlined_call_operand.vmem [shape: bf16[128,128], index: 7, kind: output, shape index: {0}]
  %s8 = inlined_call_operand.vmem [shape: f32[128,128], index: 8, kind: output, shape index: {1}]
  %s9 = inlined_call_operand.vmem [shape: bf16[128,128], index: 9, kind: output, shape index: {2}]
  %10 = xla_tuple %s7, %s8, %s9
  %s11 = sld [smem:[#allocation0]]
  $region77: #{classifier_forward.4} parent=0
    _
  %s13 = ssub.s32 1, %s11
  %s14 = scalar_select 0, %s13, %s11
  loop: start=0, step=1, limit=4
  $region2: #{classifier_forward.4} parent=0 // loop_pre_header
    _
  $region3: #{classifier_forward.4} parent=0 // loop_header
    %s16 = sphi 0, %s20
    %p17 = scmp.ge.s32.totalorder %s16, 4
    %s26 = sphi 0, %s28
    %s29 = sphi 0, %s26
    %s30 = sphi 0, %s29
    %s46 = sphi 0, %s30
    %s52 = sphi 0, %s54
    %s55 = sphi 0, %s52
    %s56 = sphi 0, %s55
    %s72 = sphi 0, %s56
    %s76 = sphi 0, %s76
    %s78 = sphi 0, %s76
    %s79 = sphi 0, %s78
    %s93 = sphi 0, %s79
    %s97 = sphi 0, %s97
    %s99 = sphi 0, %s97
    %s100 = sphi 0, %s99
    %s114 = sphi 0, %s100
    %s118 = sphi 0, %s118
    %s120 = sphi 0, %s118
    %s121 = sphi 0, %s120
    %s135 = sphi 0, %s121
    %s139 = sphi 0, %s139
    %s141 = sphi 0, %s139
    %s142 = sphi 0, %s141
    %s156 = sphi 0, %s142
    %s160 = sphi 0, %s160
    %s162 = sphi 0, %s160
    %s163 = sphi 0, %s162
    %s177 = sphi 0, %s163
    %s183 = sphi 0, %s185
    %s186 = sphi 0, %s183
    %s187 = sphi 0, %s186
    %s203 = sphi 0, %s187
    %s209 = sphi 0, %s211
    %s212 = sphi 0, %s209
    %s213 = sphi 0, %s212
    %s229 = sphi 0, %s213
    %s235 = sphi 0, %s237
    %s238 = sphi 0, %s235
    %s239 = sphi 0, %s238
    %s255 = sphi 0, %s239
  $region4: #{classifier_forward.4} parent=0 // loop_header_branch
    %19 = sbr.rel (%p17) target = $region8
  $region5: #{classifier_forward.4} parent=0 // loop_body
    %s21 = ssub.s32 %s16, 1
    %s22 = ssub.s32 %s16, 2
    %s23 = sadd.s32 %s16, 1
    %s24 = ssub.s32 %s16, %s23
    %p25 = scmp.eq.s32.totalorder %s24, 0
    %s27 = sadd.s32 %s26, 1
    %s28 = scalar_select %p25, %s26, %s27
    %p31 = pneg %p25
    %p32 = scmp.eq.s32.totalorder %s16, 1
    %p33 = por %p31, %p32
    %p34 = scmp.ne.s32.totalorder %s26, %s29
    %p35 = scmp.eq.s32.totalorder %s16, 0
    %p36 = por %p34, %p35
    %p37 = scmp.ne.s32.totalorder %s26, %s29
    %p38 = scmp.eq.s32.totalorder %s21, 1
    %p39 = por %p37, %p38
    %p40 = scmp.ne.s32.totalorder %s29, %s30
    %p41 = scmp.eq.s32.totalorder %s21, 0
    %p42 = por %p40, %p41
    %p43 = scmp.ne.s32.totalorder %s29, %s30
    %p44 = scmp.eq.s32.totalorder %s22, 1
    %p45 = por %p43, %p44
    %p47 = scmp.ne.s32.totalorder %s30, %s46
    %p48 = scmp.eq.s32.totalorder %s22, 0
    %p49 = por %p47, %p48
    %s50 = ssub.s32 %s16, %s23
    %p51 = scmp.eq.s32.totalorder %s50, 0
    %s53 = sadd.s32 %s52, 1
    %s54 = scalar_select %p51, %s52, %s53
    %p57 = pneg %p51
    %p58 = scmp.eq.s32.totalorder %s16, 1
    %p59 = por %p57, %p58
    %p60 = scmp.ne.s32.totalorder %s52, %s55
    %p61 = scmp.eq.s32.totalorder %s16, 0
    %p62 = por %p60, %p61
    %p63 = scmp.ne.s32.totalorder %s52, %s55
    %p64 = scmp.eq.s32.totalorder %s21, 1
    %p65 = por %p63, %p64
    %p66 = scmp.ne.s32.totalorder %s55, %s56
    %p67 = scmp.eq.s32.totalorder %s21, 0
    %p68 = por %p66, %p67
    %p69 = scmp.ne.s32.totalorder %s55, %s56
    %p70 = scmp.eq.s32.totalorder %s22, 1
    %p71 = por %p69, %p70
    %p73 = scmp.ne.s32.totalorder %s56, %s72
    %p74 = scmp.eq.s32.totalorder %s22, 0
    %p75 = por %p73, %p74
    %s77 = sadd.s32 %s76, 1
    %p80 = scmp.eq.s32.totalorder %s16, 1
    %p81 = scmp.ne.s32.totalorder %s76, %s78
    %p82 = scmp.eq.s32.totalorder %s16, 0
    %p83 = por %p81, %p82
    %p84 = scmp.ne.s32.totalorder %s76, %s78
    %p85 = scmp.eq.s32.totalorder %s21, 1
    %p86 = por %p84, %p85
    %p87 = scmp.ne.s32.totalorder %s78, %s79
    %p88 = scmp.eq.s32.totalorder %s21, 0
    %p89 = por %p87, %p88
    %p90 = scmp.ne.s32.totalorder %s78, %s79
    %p91 = scmp.eq.s32.totalorder %s22, 1
    %p92 = por %p90, %p91
    %p94 = scmp.ne.s32.totalorder %s79, %s93
    %p95 = scmp.eq.s32.totalorder %s22, 0
    %p96 = por %p94, %p95
    %s98 = sadd.s32 %s97, 1
    %p101 = scmp.eq.s32.totalorder %s16, 1
    %p102 = scmp.ne.s32.totalorder %s97, %s99
    %p103 = scmp.eq.s32.totalorder %s16, 0
    %p104 = por %p102, %p103
    %p105 = scmp.ne.s32.totalorder %s97, %s99
    %p106 = scmp.eq.s32.totalorder %s21, 1
    %p107 = por %p105, %p106
    %p108 = scmp.ne.s32.totalorder %s99, %s100
    %p109 = scmp.eq.s32.totalorder %s21, 0
    %p110 = por %p108, %p109
    %p111 = scmp.ne.s32.totalorder %s99, %s100
    %p112 = scmp.eq.s32.totalorder %s22, 1
    %p113 = por %p111, %p112
    %p115 = scmp.ne.s32.totalorder %s100, %s114
    %p116 = scmp.eq.s32.totalorder %s22, 0
    %p117 = por %p115, %p116
    %s119 = sadd.s32 %s118, 1
    %p122 = scmp.eq.s32.totalorder %s16, 1
    %p123 = scmp.ne.s32.totalorder %s118, %s120
    %p124 = scmp.eq.s32.totalorder %s16, 0
    %p125 = por %p123, %p124
    %p126 = scmp.ne.s32.totalorder %s118, %s120
    %p127 = scmp.eq.s32.totalorder %s21, 1
    %p128 = por %p126, %p127
    %p129 = scmp.ne.s32.totalorder %s120, %s121
    %p130 = scmp.eq.s32.totalorder %s21, 0
    %p131 = por %p129, %p130
    %p132 = scmp.ne.s32.totalorder %s120, %s121
    %p133 = scmp.eq.s32.totalorder %s22, 1
    %p134 = por %p132, %p133
    %p136 = scmp.ne.s32.totalorder %s121, %s135
    %p137 = scmp.eq.s32.totalorder %s22, 0
    %p138 = por %p136, %p137
    %s140 = sadd.s32 %s139, 1
    %p143 = scmp.eq.s32.totalorder %s16, 1
    %p144 = scmp.ne.s32.totalorder %s139, %s141
    %p145 = scmp.eq.s32.totalorder %s16, 0
    %p146 = por %p144, %p145
    %p147 = scmp.ne.s32.totalorder %s139, %s141
    %p148 = scmp.eq.s32.totalorder %s21, 1
    %p149 = por %p147, %p148
    %p150 = scmp.ne.s32.totalorder %s141, %s142
    %p151 = scmp.eq.s32.totalorder %s21, 0
    %p152 = por %p150, %p151
    %p153 = scmp.ne.s32.totalorder %s141, %s142
    %p154 = scmp.eq.s32.totalorder %s22, 1
    %p155 = por %p153, %p154
    %p157 = scmp.ne.s32.totalorder %s142, %s156
    %p158 = scmp.eq.s32.totalorder %s22, 0
    %p159 = por %p157, %p158
    %s161 = sadd.s32 %s160, 1
    %p164 = scmp.eq.s32.totalorder %s16, 1
    %p165 = scmp.ne.s32.totalorder %s160, %s162
    %p166 = scmp.eq.s32.totalorder %s16, 0
    %p167 = por %p165, %p166
    %p168 = scmp.ne.s32.totalorder %s160, %s162
    %p169 = scmp.eq.s32.totalorder %s21, 1
    %p170 = por %p168, %p169
    %p171 = scmp.ne.s32.totalorder %s162, %s163
    %p172 = scmp.eq.s32.totalorder %s21, 0
    %p173 = por %p171, %p172
    %p174 = scmp.ne.s32.totalorder %s162, %s163
    %p175 = scmp.eq.s32.totalorder %s22, 1
    %p176 = por %p174, %p175
    %p178 = scmp.ne.s32.totalorder %s163, %s177
    %p179 = scmp.eq.s32.totalorder %s22, 0
    %p180 = por %p178, %p179
    %s181 = ssub.s32 %s16, %s23
    %p182 = scmp.eq.s32.totalorder %s181, 0
    %s184 = sadd.s32 %s183, 1
    %s185 = scalar_select %p182, %s183, %s184
    %p188 = pneg %p182
    %p189 = scmp.eq.s32.totalorder %s16, 1
    %p190 = por %p188, %p189
    %p191 = scmp.ne.s32.totalorder %s183, %s186
    %p192 = scmp.eq.s32.totalorder %s16, 0
    %p193 = por %p191, %p192
    %p194 = scmp.ne.s32.totalorder %s183, %s186
    %p195 = scmp.eq.s32.totalorder %s21, 1
    %p196 = por %p194, %p195
    %p197 = scmp.ne.s32.totalorder %s186, %s187
    %p198 = scmp.eq.s32.totalorder %s21, 0
    %p199 = por %p197, %p198
    %p200 = scmp.ne.s32.totalorder %s186, %s187
    %p201 = scmp.eq.s32.totalorder %s22, 1
    %p202 = por %p200, %p201
    %p204 = scmp.ne.s32.totalorder %s187, %s203
    %p205 = scmp.eq.s32.totalorder %s22, 0
    %p206 = por %p204, %p205
    %s207 = ssub.s32 %s16, %s23
    %p208 = scmp.eq.s32.totalorder %s207, 0
    %s210 = sadd.s32 %s209, 1
    %s211 = scalar_select %p208, %s209, %s210
    %p214 = pneg %p208
    %p215 = scmp.eq.s32.totalorder %s16, 1
    %p216 = por %p214, %p215
    %p217 = scmp.ne.s32.totalorder %s209, %s212
    %p218 = scmp.eq.s32.totalorder %s16, 0
    %p219 = por %p217, %p218
    %p220 = scmp.ne.s32.totalorder %s209, %s212
    %p221 = scmp.eq.s32.totalorder %s21, 1
    %p222 = por %p220, %p221
    %p223 = scmp.ne.s32.totalorder %s212, %s213
    %p224 = scmp.eq.s32.totalorder %s21, 0
    %p225 = por %p223, %p224
    %p226 = scmp.ne.s32.totalorder %s212, %s213
    %p227 = scmp.eq.s32.totalorder %s22, 1
    %p228 = por %p226, %p227
    %p230 = scmp.ne.s32.totalorder %s213, %s229
    %p231 = scmp.eq.s32.totalorder %s22, 0
    %p232 = por %p230, %p231
    %s233 = ssub.s32 %s16, %s23
    %p234 = scmp.eq.s32.totalorder %s233, 0
    %s236 = sadd.s32 %s235, 1
    %s237 = scalar_select %p234, %s235, %s236
    %p240 = pneg %p234
    %p241 = scmp.eq.s32.totalorder %s16, 1
    %p242 = por %p240, %p241
    %p243 = scmp.ne.s32.totalorder %s235, %s238
    %p244 = scmp.eq.s32.totalorder %s16, 0
    %p245 = por %p243, %p244
    %p246 = scmp.ne.s32.totalorder %s235, %s238
    %p247 = scmp.eq.s32.totalorder %s21, 1
    %p248 = por %p246, %p247
    %p249 = scmp.ne.s32.totalorder %s238, %s239
    %p250 = scmp.eq.s32.totalorder %s21, 0
    %p251 = por %p249, %p250
    %p252 = scmp.ne.s32.totalorder %s238, %s239
    %p253 = scmp.eq.s32.totalorder %s22, 1
    %p254 = por %p252, %p253
    %p256 = scmp.ne.s32.totalorder %s239, %s255
    %p257 = scmp.eq.s32.totalorder %s22, 0
    %p258 = por %p256, %p257
    %p259 = scmp.le.s32.totalorder 1, %s16
    %p260 = scmp.lt.s32.totalorder %s16, 3
    %p261 = pnand %p259, %p260
    %p262 = pneg %p261
    // Predicated region
    $region9: #{classifier_forward.4} parent=5 // pred_check
      _
    $region10: #{classifier_forward.4} parent=5 // pred_check_branch
      %264 = sbr.rel (%p261) target = $region12
    $region11: #{classifier_forward.4} parent=5 // pred_region
      %s265 = ssub.s32 %s16, 1
      // Predicated region
      $region13: #{classifier_forward.4} parent=11 // pred_check
        %p266 = pneg %p89
      $region14: #{classifier_forward.4} parent=11 // pred_check_branch
        %268 = sbr.rel (%p266) target = $region16
      $region15: #{classifier_forward.4} parent=11 // pred_region
        _
      $region16: #{classifier_forward.4} parent=11 // pred_fallthru
        _
      // Predicated region
      $region17: #{classifier_forward.4} parent=11 // pred_check
        %p269 = pneg %p110
      $region18: #{classifier_forward.4} parent=11 // pred_check_branch
        %271 = sbr.rel (%p269) target = $region20
      $region19: #{classifier_forward.4} parent=11 // pred_region
        _
      $region20: #{classifier_forward.4} parent=11 // pred_fallthru
        _
      // Predicated region
      $region21: #{classifier_forward.4} parent=11 // pred_check
        %p272 = pneg %p131
      $region22: #{classifier_forward.4} parent=11 // pred_check_branch
        %274 = sbr.rel (%p272) target = $region24
      $region23: #{classifier_forward.4} parent=11 // pred_region
        _
      $region24: #{classifier_forward.4} parent=11 // pred_fallthru
        _
      // Predicated region
      $region25: #{classifier_forward.4} parent=11 // pred_check
        %p275 = pneg %p152
      $region26: #{classifier_forward.4} parent=11 // pred_check_branch
        %277 = sbr.rel (%p275) target = $region28
      $region27: #{classifier_forward.4} parent=11 // pred_region
        _
      $region28: #{classifier_forward.4} parent=11 // pred_fallthru
        _
      // Predicated region
      $region29: #{classifier_forward.4} parent=11 // pred_check
        %p278 = pneg %p173
      $region30: #{classifier_forward.4} parent=11 // pred_check_branch
        %280 = sbr.rel (%p278) target = $region32
      $region31: #{classifier_forward.4} parent=11 // pred_region
        _
      $region32: #{classifier_forward.4} parent=11 // pred_fallthru
        _
    $region12: #{classifier_forward.4} parent=5 // pred_fallthru
      _
    %p281 = scmp.lt.s32.totalorder %s16, 2
    // Predicated region
    $region33: #{classifier_forward.4} parent=5 // pred_check
      %p282 = pneg %p281
    $region34: #{classifier_forward.4} parent=5 // pred_check_branch
      %284 = sbr.rel (%p282) target = $region36
    $region35: #{classifier_forward.4} parent=5 // pred_region
      // Predicated region
      $region37: #{classifier_forward.4} parent=35 // pred_check
        %p285 = pneg %p36
      $region38: #{classifier_forward.4} parent=35 // pred_check_branch
        %287 = sbr.rel (%p285) target = $region40
      $region39: #{classifier_forward.4} parent=35 // pred_region
        %s288 = smul.u32 8, %s16
        %p289 = scmp.lt.s32.totalorder %s288, 15
        %s290 = scalar_select %p289, %s288, 15
        %s291 = smul.addr %s290, 4
        %s292 = scalar_lea.vmem %s0, %s291
        %s293 = smul.u32 8, %s16
      $region40: #{classifier_forward.4} parent=35 // pred_fallthru
        _
      // Predicated region
      $region41: #{classifier_forward.4} parent=35 // pred_check
        %p294 = pneg %p62
      $region42: #{classifier_forward.4} parent=35 // pred_check_branch
        %296 = sbr.rel (%p294) target = $region44
      $region43: #{classifier_forward.4} parent=35 // pred_region
        %s297 = smul.u32 8, %s16
        %p298 = scmp.lt.s32.totalorder %s297, 15
        %s299 = scalar_select %p298, %s297, 15
        %s300 = smul.addr %s299, 4
        %s301 = scalar_lea.vmem %s1, %s300
        %s302 = smul.u32 8, %s16
      $region44: #{classifier_forward.4} parent=35 // pred_fallthru
        _
    $region36: #{classifier_forward.4} parent=5 // pred_fallthru
      _
    %p303 = scmp.le.s32.totalorder 1, %s16
    %p304 = scmp.lt.s32.totalorder %s16, 3
    %p305 = pnand %p303, %p304
    %p306 = pneg %p305
    // Predicated region
    $region45: #{classifier_forward.4} parent=5 // pred_check
      _
    $region46: #{classifier_forward.4} parent=5 // pred_check_branch
      %308 = sbr.rel (%p305) target = $region48
    $region47: #{classifier_forward.4} parent=5 // pred_region
      %s309 = ssub.s32 %s16, 1
      %s310 = smul.u32 8, %s21
      %p311 = scmp.lt.s32.totalorder %s310, 15
      %s312 = scalar_select %p311, %s310, 15
      %s313 = smul.addr %s312, 4
      %s314 = scalar_lea.vmem %s0, %s313
      %p315 = pneg %p42
      %p316 = pneg %p39
      %s317 = smul.u32 8, %s21
      %p318 = scmp.lt.s32.totalorder %s317, 15
      %s319 = scalar_select %p318, %s317, 15
      %s320 = smul.addr %s319, 4
      %s321 = scalar_lea.vmem %s1, %s320
      %p322 = pneg %p68
      %p323 = pneg %p65
      %p324 = pneg %p89
      %p325 = pneg %p86
      %p326 = pneg %p110
      %p327 = pneg %p107
      %p328 = pneg %p131
      %p329 = pneg %p128
      %p330 = pneg %p152
      %p331 = pneg %p149
      %p332 = pneg %p173
      %p333 = pneg %p170
      %p334 = pneg %p199
      %p335 = pneg %p196
      %s336 = smul.u32 8, %s21
      %p337 = scmp.lt.s32.totalorder %s336, 15
      %s338 = scalar_select %p337, %s336, 15
      %s339 = smul.addr %s338, 4
      %s340 = scalar_lea.vmem %s7, %s339
      %p341 = pneg %p225
      %p342 = pneg %p222
      %s343 = smul.u32 8, %s21
      %p344 = scmp.lt.s32.totalorder %s343, 15
      %s345 = scalar_select %p344, %s343, 15
      %s346 = smul.addr %s345, 8
      %s347 = scalar_lea.vmem %s8, %s346
      %p348 = pneg %p251
      %p349 = pneg %p248
      %s350 = smul.u32 8, %s21
      %p351 = scmp.lt.s32.totalorder %s350, 15
      %s352 = scalar_select %p351, %s350, 15
      %s353 = smul.addr %s352, 4
      %s354 = scalar_lea.vmem %s9, %s353
      %s355 = smul.u32 8, %s21
      %p356 = scmp.lt.s32.totalorder %s355, 15
      %s357 = scalar_select %p356, %s355, 15
      %s358 = smul.addr %s357, 4
      %s359 = scalar_lea.vmem %s0, %s358
      %s360 = smul.u32 8, %s21
      %s361 = smul.u32 8, %s21
      %p362 = scmp.lt.s32.totalorder %s361, 15
      %s363 = scalar_select %p362, %s361, 15
      %s364 = smul.addr %s363, 4
      %s365 = scalar_lea.vmem %s1, %s364
      %s366 = smul.u32 8, %s21
      %s367 = smul.u32 8, %s21
      %p368 = scmp.lt.s32.totalorder %s367, 15
      %s369 = scalar_select %p368, %s367, 15
      %s370 = smul.addr %s369, 4
      %s371 = scalar_lea.vmem %s7, %s370
      %s372 = smul.u32 8, %s21
      %s373 = smul.u32 8, %s21
      %p374 = scmp.lt.s32.totalorder %s373, 15
      %s375 = scalar_select %p374, %s373, 15
      %s376 = smul.addr %s375, 8
      %s377 = scalar_lea.vmem %s8, %s376
      %s378 = smul.u32 8, %s21
      %s379 = smul.u32 8, %s21
      %p380 = scmp.lt.s32.totalorder %s379, 15
      %s381 = scalar_select %p380, %s379, 15
      %s382 = smul.addr %s381, 4
      %s383 = scalar_lea.vmem %s9, %s382
      %s384 = smul.u32 8, %s21
      %v386 = vld [vmem:[%s359] sm:$0xf]
      %v387 = vld [vmem:[%s359 + $0x4] sm:$0xf]
      %v388 = vld [vmem:[%s359 + $0x8] sm:$0xf]
      %v389 = vld [vmem:[%s359 + $0xc] sm:$0xf]
      %v390 = vld [vmem:[%s359 + $0x10] sm:$0xf]
      %v391 = vld [vmem:[%s359 + $0x14] sm:$0xf]
      %v392 = vld [vmem:[%s359 + $0x18] sm:$0xf]
      %v393 = vld [vmem:[%s359 + $0x1c] sm:$0xf]
      %v394 = vld [vmem:[%s2] sm:$0xf]
      %v395 = vld [vmem:[%s2 + $0x4] sm:$0xf]
      %v396 = vld [vmem:[%s2 + $0x8] sm:$0xf]
      %v397 = vld [vmem:[%s2 + $0xc] sm:$0xf]
      %v398 = vld [vmem:[%s2 + $0x10] sm:$0xf]
      %v399 = vld [vmem:[%s2 + $0x14] sm:$0xf]
      %v400 = vld [vmem:[%s2 + $0x18] sm:$0xf]
      %v401 = vld [vmem:[%s2 + $0x1c] sm:$0xf]
      %v402 = vld [vmem:[%s2 + $0x20] sm:$0xf]
      %v403 = vld [vmem:[%s2 + $0x24] sm:$0xf]
      %v404 = vld [vmem:[%s2 + $0x28] sm:$0xf]
      %v405 = vld [vmem:[%s2 + $0x2c] sm:$0xf]
      %v406 = vld [vmem:[%s2 + $0x30] sm:$0xf]
      %v407 = vld [vmem:[%s2 + $0x34] sm:$0xf]
      %v408 = vld [vmem:[%s2 + $0x38] sm:$0xf]
      %v409 = vld [vmem:[%s2 + $0x3c] sm:$0xf]
      %v418 = vunpack.c.l.b16 %v386
      %v419 = vunpack.c.l.b16 %v387
      %v420 = vunpack.c.l.b16 %v388
      %v421 = vunpack.c.l.b16 %v389
      %v422 = vunpack.c.l.b16 %v390
      %v423 = vunpack.c.l.b16 %v391
      %v424 = vunpack.c.l.b16 %v392
      %v425 = vunpack.c.l.b16 %v393
      %v426 = vpack.c.b16 %v419, %v418
      %v427 = vpack.c.b16 %v421, %v420
      %v428 = vpack.c.b16 %v423, %v422
      %v429 = vpack.c.b16 %v425, %v424
      %v450 = vunpack.c.l.b16 %v394
      %v451 = vunpack.c.l.b16 %v395
      %v452 = vunpack.c.l.b16 %v396
      %v453 = vunpack.c.l.b16 %v397
      %v454 = vunpack.c.l.b16 %v398
      %v455 = vunpack.c.l.b16 %v399
      %v456 = vunpack.c.l.b16 %v400
      %v457 = vunpack.c.l.b16 %v401
      %v458 = vunpack.c.l.b16 %v402
      %v459 = vunpack.c.l.b16 %v403
      %v460 = vunpack.c.l.b16 %v404
      %v461 = vunpack.c.l.b16 %v405
      %v462 = vunpack.c.l.b16 %v406
      %v463 = vunpack.c.l.b16 %v407
      %v464 = vunpack.c.l.b16 %v408
      %v465 = vunpack.c.l.b16 %v409
      %v466 = vpack.c.b16 %v451, %v450
      %v467 = vpack.c.b16 %v453, %v452
      %v468 = vpack.c.b16 %v455, %v454
      %v469 = vpack.c.b16 %v457, %v456
      %v470 = vpack.c.b16 %v459, %v458
      %v471 = vpack.c.b16 %v461, %v460
      %v472 = vpack.c.b16 %v463, %v462
      %v473 = vpack.c.b16 %v465, %v464
      %482 = vmatprep.subr.bf16.mxu0 0
      %483 = vmatpush1.bf16.msra.mxu0 %v466
      %484 = vmatprep.subr.bf16.mxu0 0
      %485 = vmatpush1.bf16.msra.mxu0 %v467
      %486 = vmatprep.subr.bf16.mxu0 0
      %487 = vmatpush1.bf16.msra.mxu0 %v468
      %488 = vmatprep.subr.bf16.mxu0 0
      %489 = vmatpush1.bf16.msra.mxu0 %v469
      %490 = vmatprep.subr.bf16.mxu0 0
      %491 = vmatpush1.bf16.msra.mxu0 %v470
      %492 = vmatprep.subr.bf16.mxu0 0
      %493 = vmatpush1.bf16.msra.mxu0 %v471
      %494 = vmatprep.subr.bf16.mxu0 0
      %495 = vmatpush1.bf16.msra.mxu0 %v472
      %496 = vmatprep.subr.bf16.mxu0 0
      %497 = vmatpush1.bf16.msra.mxu0 %v473
      %498 = vmatprep.subr.bf16.mxu0 0
      %499 = vmatpush1.bf16.msra.mxu0 0
      %500 = vmatprep.subr.bf16.mxu0 0
      %501 = vmatpush1.bf16.msra.mxu0 0
      %502 = vmatprep.subr.bf16.mxu0 0
      %503 = vmatpush1.bf16.msra.mxu0 0
      %504 = vmatprep.subr.bf16.mxu0 0
      %505 = vmatpush1.bf16.msra.mxu0 0
      %506 = vmatprep.subr.bf16.mxu0 0
      %507 = vmatpush1.bf16.msra.mxu0 0
      %508 = vmatprep.subr.bf16.mxu0 0
      %509 = vmatpush1.bf16.msra.mxu0 0
      %510 = vmatprep.subr.bf16.mxu0 0
      %511 = vmatpush1.bf16.msra.mxu0 0
      %512 = vmatprep.subr.bf16.mxu0 0
      %513 = vmatpush1.bf16.msra.mxu0 0
      %514 = vmatprep.mubr.bf16.mxu0 0
      %515 = vmatmul.mubr.bf16.gmra.mrb[0].mxu0 %v426
      %v516 = vpop.f32.mrb[0].mxu0
      %v517 = vadd.f32 0.0, %v516
      %v518 = vpop.f32.mrb[0].mxu0
      %v519 = vpop.f32.mrb[0].mxu0
      %v520 = vadd.f32 0.0, %v519
      %v521 = vpop.f32.mrb[0].mxu0
      %522 = vmatprep.mubr.bf16.mxu0 0
      %523 = vmatmul.mubr.bf16.gmra.mrb[0].mxu0 %v427
      %v524 = vpop.f32.mrb[0].mxu0
      %v525 = vadd.f32 0.0, %v524
      %v526 = vpop.f32.mrb[0].mxu0
      %v527 = vpop.f32.mrb[0].mxu0
      %v528 = vadd.f32 0.0, %v527
      %v529 = vpop.f32.mrb[0].mxu0
      %530 = vmatprep.mubr.bf16.mxu0 0
      %531 = vmatmul.mubr.bf16.gmra.mrb[0].mxu0 %v428
      %v532 = vpop.f32.mrb[0].mxu0
      %v533 = vadd.f32 0.0, %v532
      %v534 = vpop.f32.mrb[0].mxu0
      %v535 = vpop.f32.mrb[0].mxu0
      %v536 = vadd.f32 0.0, %v535
      %v537 = vpop.f32.mrb[0].mxu0
      %538 = vmatprep.mubr.bf16.mxu0 0
      %539 = vmatmul.mubr.bf16.gmra.mrb[0].mxu0 %v429
      %v540 = vpop.f32.mrb[0].mxu0
      %v541 = vadd.f32 0.0, %v540
      %v542 = vpop.f32.mrb[0].mxu0
      %v543 = vpop.f32.mrb[0].mxu0
      %v544 = vadd.f32 0.0, %v543
      %v545 = vpop.f32.mrb[0].mxu0
      %546 = vdwg.mxu0
      %v547 = vpack.c.bf16 %v520, %v517
      %v548 = vpack.c.bf16 %v528, %v525
      %v549 = vpack.c.bf16 %v536, %v533
      %v550 = vpack.c.bf16 %v544, %v541
      %v555 = vunpack.c.l.b16 %v547
      %v556 = vunpack.c.h.b16 %v547
      %v557 = vunpack.c.l.b16 %v548
      %v558 = vunpack.c.h.b16 %v548
      %v559 = vunpack.c.l.b16 %v549
      %v560 = vunpack.c.h.b16 %v549
      %v561 = vunpack.c.l.b16 %v550
      %v562 = vunpack.c.h.b16 %v550
      %v563 = vpack.c.b16 %v555, %v555
      %v564 = vpack.c.b16 %v556, %v556
      %v565 = vpack.c.b16 %v557, %v557
      %v566 = vpack.c.b16 %v558, %v558
      %v567 = vpack.c.b16 %v559, %v559
      %v568 = vpack.c.b16 %v560, %v560
      %v569 = vpack.c.b16 %v561, %v561
      %v570 = vpack.c.b16 %v562, %v562
      %579 = vst [vmem:[%s371] sm:$0xf] %v563
      %580 = vst [vmem:[%s371 + $0x4] sm:$0xf] %v564
      %581 = vst [vmem:[%s371 + $0x8] sm:$0xf] %v565
      %582 = vst [vmem:[%s371 + $0xc] sm:$0xf] %v566
      %583 = vst [vmem:[%s371 + $0x10] sm:$0xf] %v567
      %584 = vst [vmem:[%s371 + $0x14] sm:$0xf] %v568
      %585 = vst [vmem:[%s371 + $0x18] sm:$0xf] %v569
      %586 = vst [vmem:[%s371 + $0x1c] sm:$0xf] %v570
      %v587 = vld [vmem:[%s365] sm:$0xf]
      %v588 = vld [vmem:[%s365 + $0x4] sm:$0xf]
      %v589 = vld [vmem:[%s365 + $0x8] sm:$0xf]
      %v590 = vld [vmem:[%s365 + $0xc] sm:$0xf]
      %v591 = vld [vmem:[%s365 + $0x10] sm:$0xf]
      %v592 = vld [vmem:[%s365 + $0x14] sm:$0xf]
      %v593 = vld [vmem:[%s365 + $0x18] sm:$0xf]
      %v594 = vld [vmem:[%s365 + $0x1c] sm:$0xf]
      %v595 = vld [vmem:[%s4] sm:$0xf]
      %v596 = vld [vmem:[%s4 + $0x4] sm:$0xf]
      %v597 = vld [vmem:[%s4 + $0x8] sm:$0xf]
      %v598 = vld [vmem:[%s4 + $0xc] sm:$0xf]
      %v599 = vld [vmem:[%s4 + $0x10] sm:$0xf]
      %v600 = vld [vmem:[%s4 + $0x14] sm:$0xf]
      %v601 = vld [vmem:[%s4 + $0x18] sm:$0xf]
      %v602 = vld [vmem:[%s4 + $0x1c] sm:$0xf]
      %v603 = vld [vmem:[%s4 + $0x20] sm:$0xf]
      %v604 = vld [vmem:[%s4 + $0x24] sm:$0xf]
      %v605 = vld [vmem:[%s4 + $0x28] sm:$0xf]
      %v606 = vld [vmem:[%s4 + $0x2c] sm:$0xf]
      %v607 = vld [vmem:[%s4 + $0x30] sm:$0xf]
      %v608 = vld [vmem:[%s4 + $0x34] sm:$0xf]
      %v609 = vld [vmem:[%s4 + $0x38] sm:$0xf]
      %v610 = vld [vmem:[%s4 + $0x3c] sm:$0xf]
      %v611 = vld [vmem:[%s6] sm:$0x1]
      %v613 = vlaneseq
      %v614 = vshrl.u32 %v613, 7
      %v615 = vsub.s32 0, %v614
      %v616 = vrot.slane %v611, %v615
      %v626 = vunpack.c.l.b16 %v587
      %v627 = vunpack.c.l.b16 %v588
      %v628 = vunpack.c.l.b16 %v589
      %v629 = vunpack.c.l.b16 %v590
      %v630 = vunpack.c.l.b16 %v591
      %v631 = vunpack.c.l.b16 %v592
      %v632 = vunpack.c.l.b16 %v593
      %v633 = vunpack.c.l.b16 %v594
      %v634 = vpack.c.b16 %v627, %v626
      %v635 = vpack.c.b16 %v629, %v628
      %v636 = vpack.c.b16 %v631, %v630
      %v637 = vpack.c.b16 %v633, %v632
      %v658 = vunpack.c.l.b16 %v595
      %v659 = vunpack.c.l.b16 %v596
      %v660 = vunpack.c.l.b16 %v597
      %v661 = vunpack.c.l.b16 %v598
      %v662 = vunpack.c.l.b16 %v599
      %v663 = vunpack.c.l.b16 %v600
      %v664 = vunpack.c.l.b16 %v601
      %v665 = vunpack.c.l.b16 %v602
      %v666 = vunpack.c.l.b16 %v603
      %v667 = vunpack.c.l.b16 %v604
      %v668 = vunpack.c.l.b16 %v605
      %v669 = vunpack.c.l.b16 %v606
      %v670 = vunpack.c.l.b16 %v607
      %v671 = vunpack.c.l.b16 %v608
      %v672 = vunpack.c.l.b16 %v609
      %v673 = vunpack.c.l.b16 %v610
      %v674 = vpack.c.b16 %v659, %v658
      %v675 = vpack.c.b16 %v661, %v660
      %v676 = vpack.c.b16 %v663, %v662
      %v677 = vpack.c.b16 %v665, %v664
      %v678 = vpack.c.b16 %v667, %v666
      %v679 = vpack.c.b16 %v669, %v668
      %v680 = vpack.c.b16 %v671, %v670
      %v681 = vpack.c.b16 %v673, %v672
      %690 = vmatprep.subr.bf16.mxu0 0
      %691 = vmatpush1.bf16.msra.mxu0 %v674
      %692 = vmatprep.subr.bf16.mxu0 0
      %693 = vmatpush1.bf16.msra.mxu0 %v675
      %694 = vmatprep.subr.bf16.mxu0 0
      %695 = vmatpush1.bf16.msra.mxu0 %v676
      %696 = vmatprep.subr.bf16.mxu0 0
      %697 = vmatpush1.bf16.msra.mxu0 %v677
      %698 = vmatprep.subr.bf16.mxu0 0
      %699 = vmatpush1.bf16.msra.mxu0 %v678
      %700 = vmatprep.subr.bf16.mxu0 0
      %701 = vmatpush1.bf16.msra.mxu0 %v679
      %702 = vmatprep.subr.bf16.mxu0 0
      %703 = vmatpush1.bf16.msra.mxu0 %v680
      %704 = vmatprep.subr.bf16.mxu0 0
      %705 = vmatpush1.bf16.msra.mxu0 %v681
      %706 = vmatprep.subr.bf16.mxu0 0
      %707 = vmatpush1.bf16.msra.mxu0 0
      %708 = vmatprep.subr.bf16.mxu0 0
      %709 = vmatpush1.bf16.msra.mxu0 0
      %710 = vmatprep.subr.bf16.mxu0 0
      %711 = vmatpush1.bf16.msra.mxu0 0
      %712 = vmatprep.subr.bf16.mxu0 0
      %713 = vmatpush1.bf16.msra.mxu0 0
      %714 = vmatprep.subr.bf16.mxu0 0
      %715 = vmatpush1.bf16.msra.mxu0 0
      %716 = vmatprep.subr.bf16.mxu0 0
      %717 = vmatpush1.bf16.msra.mxu0 0
      %718 = vmatprep.subr.bf16.mxu0 0
      %719 = vmatpush1.bf16.msra.mxu0 0
      %720 = vmatprep.subr.bf16.mxu0 0
      %721 = vmatpush1.bf16.msra.mxu0 0
      %722 = vmatprep.mubr.bf16.mxu0 0
      %723 = vmatmul.mubr.bf16.gmra.mrb[0].mxu0 %v634
      %v724 = vpop.f32.mrb[0].mxu0
      %v725 = vadd.f32 %v616, %v724
      %v726 = vpop.f32.mrb[0].mxu0
      %v727 = vpop.f32.mrb[0].mxu0
      %v728 = vadd.f32 %v616, %v727
      %v729 = vpop.f32.mrb[0].mxu0
      %730 = vmatprep.mubr.bf16.mxu0 0
      %731 = vmatmul.mubr.bf16.gmra.mrb[0].mxu0 %v635
      %v732 = vpop.f32.mrb[0].mxu0
      %v733 = vadd.f32 %v616, %v732
      %v734 = vpop.f32.mrb[0].mxu0
      %v735 = vpop.f32.mrb[0].mxu0
      %v736 = vadd.f32 %v616, %v735
      %v737 = vpop.f32.mrb[0].mxu0
      %738 = vmatprep.mubr.bf16.mxu0 0
      %739 = vmatmul.mubr.bf16.gmra.mrb[0].mxu0 %v636
      %v740 = vpop.f32.mrb[0].mxu0
      %v741 = vadd.f32 %v616, %v740
      %v742 = vpop.f32.mrb[0].mxu0
      %v743 = vpop.f32.mrb[0].mxu0
      %v744 = vadd.f32 %v616, %v743
      %v745 = vpop.f32.mrb[0].mxu0
      %746 = vmatprep.mubr.bf16.mxu0 0
      %747 = vmatmul.mubr.bf16.gmra.mrb[0].mxu0 %v637
      %v748 = vpop.f32.mrb[0].mxu0
      %v749 = vadd.f32 %v616, %v748
      %v750 = vpop.f32.mrb[0].mxu0
      %v751 = vpop.f32.mrb[0].mxu0
      %v752 = vadd.f32 %v616, %v751
      %v753 = vpop.f32.mrb[0].mxu0
      %754 = vdwg.mxu0
      %v755 = vld [vmem:[%s359] sm:$0xf]
      %v756 = vld [vmem:[%s359 + $0x4] sm:$0xf]
      %v757 = vld [vmem:[%s359 + $0x8] sm:$0xf]
      %v758 = vld [vmem:[%s359 + $0xc] sm:$0xf]
      %v759 = vld [vmem:[%s359 + $0x10] sm:$0xf]
      %v760 = vld [vmem:[%s359 + $0x14] sm:$0xf]
      %v761 = vld [vmem:[%s359 + $0x18] sm:$0xf]
      %v762 = vld [vmem:[%s359 + $0x1c] sm:$0xf]
      %v763 = vld [vmem:[%s3] sm:$0xf]
      %v764 = vld [vmem:[%s3 + $0x4] sm:$0xf]
      %v765 = vld [vmem:[%s3 + $0x8] sm:$0xf]
      %v766 = vld [vmem:[%s3 + $0xc] sm:$0xf]
      %v767 = vld [vmem:[%s3 + $0x10] sm:$0xf]
      %v768 = vld [vmem:[%s3 + $0x14] sm:$0xf]
      %v769 = vld [vmem:[%s3 + $0x18] sm:$0xf]
      %v770 = vld [vmem:[%s3 + $0x1c] sm:$0xf]
      %v771 = vld [vmem:[%s3 + $0x20] sm:$0xf]
      %v772 = vld [vmem:[%s3 + $0x24] sm:$0xf]
      %v773 = vld [vmem:[%s3 + $0x28] sm:$0xf]
      %v774 = vld [vmem:[%s3 + $0x2c] sm:$0xf]
      %v775 = vld [vmem:[%s3 + $0x30] sm:$0xf]
      %v776 = vld [vmem:[%s3 + $0x34] sm:$0xf]
      %v777 = vld [vmem:[%s3 + $0x38] sm:$0xf]
      %v778 = vld [vmem:[%s3 + $0x3c] sm:$0xf]
      %v779 = vld [vmem:[%s5] sm:$0x1]
      %v781 = vlaneseq
      %v782 = vshrl.u32 %v781, 7
      %v783 = vsub.s32 0, %v782
      %v784 = vrot.slane %v779, %v783
      %v794 = vunpack.c.l.b16 %v755
      %v795 = vunpack.c.l.b16 %v756
      %v796 = vunpack.c.l.b16 %v757
      %v797 = vunpack.c.l.b16 %v758
      %v798 = vunpack.c.l.b16 %v759
      %v799 = vunpack.c.l.b16 %v760
      %v800 = vunpack.c.l.b16 %v761
      %v801 = vunpack.c.l.b16 %v762
      %v802 = vpack.c.b16 %v795, %v794
      %v803 = vpack.c.b16 %v797, %v796
      %v804 = vpack.c.b16 %v799, %v798
      %v805 = vpack.c.b16 %v801, %v800
      %v826 = vunpack.c.l.b16 %v763
      %v827 = vunpack.c.l.b16 %v764
      %v828 = vunpack.c.l.b16 %v765
      %v829 = vunpack.c.l.b16 %v766
      %v830 = vunpack.c.l.b16 %v767
      %v831 = vunpack.c.l.b16 %v768
      %v832 = vunpack.c.l.b16 %v769
      %v833 = vunpack.c.l.b16 %v770
      %v834 = vunpack.c.l.b16 %v771
      %v835 = vunpack.c.l.b16 %v772
      %v836 = vunpack.c.l.b16 %v773
      %v837 = vunpack.c.l.b16 %v774
      %v838 = vunpack.c.l.b16 %v775
      %v839 = vunpack.c.l.b16 %v776
      %v840 = vunpack.c.l.b16 %v777
      %v841 = vunpack.c.l.b16 %v778
      %v842 = vpack.c.b16 %v827, %v826
      %v843 = vpack.c.b16 %v829, %v828
      %v844 = vpack.c.b16 %v831, %v830
      %v845 = vpack.c.b16 %v833, %v832
      %v846 = vpack.c.b16 %v835, %v834
      %v847 = vpack.c.b16 %v837, %v836
      %v848 = vpack.c.b16 %v839, %v838
      %v849 = vpack.c.b16 %v841, %v840
      %858 = vmatprep.subr.bf16.mxu0 0
      %859 = vmatpush1.bf16.msra.mxu0 %v842
      %860 = vmatprep.subr.bf16.mxu0 0
      %861 = vmatpush1.bf16.msra.mxu0 %v843
      %862 = vmatprep.subr.bf16.mxu0 0
      %863 = vmatpush1.bf16.msra.mxu0 %v844
      %864 = vmatprep.subr.bf16.mxu0 0
      %865 = vmatpush1.bf16.msra.mxu0 %v845
      %866 = vmatprep.subr.bf16.mxu0 0
      %867 = vmatpush1.bf16.msra.mxu0 %v846
      %868 = vmatprep.subr.bf16.mxu0 0
      %869 = vmatpush1.bf16.msra.mxu0 %v847
      %870 = vmatprep.subr.bf16.mxu0 0
      %871 = vmatpush1.bf16.msra.mxu0 %v848
      %872 = vmatprep.subr.bf16.mxu0 0
      %873 = vmatpush1.bf16.msra.mxu0 %v849
      %874 = vmatprep.subr.bf16.mxu0 0
      %875 = vmatpush1.bf16.msra.mxu0 0
      %876 = vmatprep.subr.bf16.mxu0 0
      %877 = vmatpush1.bf16.msra.mxu0 0
      %878 = vmatprep.subr.bf16.mxu0 0
      %879 = vmatpush1.bf16.msra.mxu0 0
      %880 = vmatprep.subr.bf16.mxu0 0
      %881 = vmatpush1.bf16.msra.mxu0 0
      %882 = vmatprep.subr.bf16.mxu0 0
      %883 = vmatpush1.bf16.msra.mxu0 0
      %884 = vmatprep.subr.bf16.mxu0 0
      %885 = vmatpush1.bf16.msra.mxu0 0
      %886 = vmatprep.subr.bf16.mxu0 0
      %887 = vmatpush1.bf16.msra.mxu0 0
      %888 = vmatprep.subr.bf16.mxu0 0
      %889 = vmatpush1.bf16.msra.mxu0 0
      %890 = vmatprep.mubr.bf16.mxu0 0
      %891 = vmatmul.mubr.bf16.gmra.mrb[0].mxu0 %v802
      %v892 = vpop.f32.mrb[0].mxu0
      %v893 = vadd.f32 %v784, %v892
      %v894 = vpop.f32.mrb[0].mxu0
      %v895 = vpop.f32.mrb[0].mxu0
      %v896 = vadd.f32 %v784, %v895
      %v897 = vpop.f32.mrb[0].mxu0
      %898 = vmatprep.mubr.bf16.mxu0 0
      %899 = vmatmul.mubr.bf16.gmra.mrb[0].mxu0 %v803
      %v900 = vpop.f32.mrb[0].mxu0
      %v901 = vadd.f32 %v784, %v900
      %v902 = vpop.f32.mrb[0].mxu0
      %v903 = vpop.f32.mrb[0].mxu0
      %v904 = vadd.f32 %v784, %v903
      %v905 = vpop.f32.mrb[0].mxu0
      %906 = vmatprep.mubr.bf16.mxu0 0
      %907 = vmatmul.mubr.bf16.gmra.mrb[0].mxu0 %v804
      %v908 = vpop.f32.mrb[0].mxu0
      %v909 = vadd.f32 %v784, %v908
      %v910 = vpop.f32.mrb[0].mxu0
      %v911 = vpop.f32.mrb[0].mxu0
      %v912 = vadd.f32 %v784, %v911
      %v913 = vpop.f32.mrb[0].mxu0
      %914 = vmatprep.mubr.bf16.mxu0 0
      %915 = vmatmul.mubr.bf16.gmra.mrb[0].mxu0 %v805
      %v916 = vpop.f32.mrb[0].mxu0
      %v917 = vadd.f32 %v784, %v916
      %v918 = vpop.f32.mrb[0].mxu0
      %v919 = vpop.f32.mrb[0].mxu0
      %v920 = vadd.f32 %v784, %v919
      %v921 = vpop.f32.mrb[0].mxu0
      %922 = vdwg.mxu0
      %v923 = vadd.f32 %v893, %v725
      %v924 = vadd.f32 %v896, %v728
      %v925 = vadd.f32 %v901, %v733
      %v926 = vadd.f32 %v904, %v736
      %v927 = vadd.f32 %v909, %v741
      %v928 = vadd.f32 %v912, %v744
      %v929 = vadd.f32 %v917, %v749
      %v930 = vadd.f32 %v920, %v752
      %931 = vst [vmem:[%s377] sm:$0xff] %v923
      %932 = vst [vmem:[%s377 + $0x8] sm:$0xff] %v924
      %933 = vst [vmem:[%s377 + $0x10] sm:$0xff] %v925
      %934 = vst [vmem:[%s377 + $0x18] sm:$0xff] %v926
      %935 = vst [vmem:[%s377 + $0x20] sm:$0xff] %v927
      %936 = vst [vmem:[%s377 + $0x28] sm:$0xff] %v928
      %937 = vst [vmem:[%s377 + $0x30] sm:$0xff] %v929
      %938 = vst [vmem:[%s377 + $0x38] sm:$0xff] %v930
      %v939 = vpack.c.bf16 %v728, %v725
      %v940 = vpack.c.bf16 %v736, %v733
      %v941 = vpack.c.bf16 %v744, %v741
      %v942 = vpack.c.bf16 %v752, %v749
      %v947 = vunpack.c.l.b16 %v939
      %v948 = vunpack.c.h.b16 %v939
      %v949 = vunpack.c.l.b16 %v940
      %v950 = vunpack.c.h.b16 %v940
      %v951 = vunpack.c.l.b16 %v941
      %v952 = vunpack.c.h.b16 %v941
      %v953 = vunpack.c.l.b16 %v942
      %v954 = vunpack.c.h.b16 %v942
      %v955 = vpack.c.b16 %v947, %v947
      %v956 = vpack.c.b16 %v948, %v948
      %v957 = vpack.c.b16 %v949, %v949
      %v958 = vpack.c.b16 %v950, %v950
      %v959 = vpack.c.b16 %v951, %v951
      %v960 = vpack.c.b16 %v952, %v952
      %v961 = vpack.c.b16 %v953, %v953
      %v962 = vpack.c.b16 %v954, %v954
      %971 = vst [vmem:[%s383] sm:$0xf] %v955
      %972 = vst [vmem:[%s383 + $0x4] sm:$0xf] %v956
      %973 = vst [vmem:[%s383 + $0x8] sm:$0xf] %v957
      %974 = vst [vmem:[%s383 + $0xc] sm:$0xf] %v958
      %975 = vst [vmem:[%s383 + $0x10] sm:$0xf] %v959
      %976 = vst [vmem:[%s383 + $0x14] sm:$0xf] %v960
      %977 = vst [vmem:[%s383 + $0x18] sm:$0xf] %v961
      %978 = vst [vmem:[%s383 + $0x1c] sm:$0xf] %v962
      %s979 = smul.u32 8, %s21
      %p980 = scmp.lt.s32.totalorder %s979, 15
      %s981 = scalar_select %p980, %s979, 15
      %s982 = smul.addr %s981, 4
      %s983 = scalar_lea.vmem %s7, %s982
      %s984 = smul.u32 8, %s21
      %p985 = scmp.lt.s32.totalorder %s984, 15
      %s986 = scalar_select %p985, %s984, 15
      %s987 = smul.addr %s986, 8
      %s988 = scalar_lea.vmem %s8, %s987
      %s989 = smul.u32 8, %s21
      %p990 = scmp.lt.s32.totalorder %s989, 15
      %s991 = scalar_select %p990, %s989, 15
      %s992 = smul.addr %s991, 4
      %s993 = scalar_lea.vmem %s9, %s992
      // Predicated region
      $region49: #{classifier_forward.4} parent=47 // pred_check
        %p994 = pneg %p196
      $region50: #{classifier_forward.4} parent=47 // pred_check_branch
        %996 = sbr.rel (%p994) target = $region52
      $region51: #{classifier_forward.4} parent=47 // pred_region
        %s997 = smul.u32 8, %s21
      $region52: #{classifier_forward.4} parent=47 // pred_fallthru
        _
      // Predicated region
      $region53: #{classifier_forward.4} parent=47 // pred_check
        %p998 = pneg %p222
      $region54: #{classifier_forward.4} parent=47 // pred_check_branch
        %1000 = sbr.rel (%p998) target = $region56
      $region55: #{classifier_forward.4} parent=47 // pred_region
        %s1001 = smul.u32 8, %s21
      $region56: #{classifier_forward.4} parent=47 // pred_fallthru
        _
      // Predicated region
      $region57: #{classifier_forward.4} parent=47 // pred_check
        %p1002 = pneg %p248
      $region58: #{classifier_forward.4} parent=47 // pred_check_branch
        %1004 = sbr.rel (%p1002) target = $region60
      $region59: #{classifier_forward.4} parent=47 // pred_region
        %s1005 = smul.u32 8, %s21
      $region60: #{classifier_forward.4} parent=47 // pred_fallthru
        _
    $region48: #{classifier_forward.4} parent=5 // pred_fallthru
      _
    %p1006 = scmp.le.s32.totalorder 2, %s16
    // Predicated region
    $region61: #{classifier_forward.4} parent=5 // pred_check
      %p1007 = pneg %p1006
    $region62: #{classifier_forward.4} parent=5 // pred_check_branch
      %1009 = sbr.rel (%p1007) target = $region64
    $region63: #{classifier_forward.4} parent=5 // pred_region
      %s1010 = ssub.s32 %s16, 2
      // Predicated region
      $region65: #{classifier_forward.4} parent=63 // pred_check
        %p1011 = pneg %p202
      $region66: #{classifier_forward.4} parent=63 // pred_check_branch
        %1013 = sbr.rel (%p1011) target = $region68
      $region67: #{classifier_forward.4} parent=63 // pred_region
        %s1014 = smul.u32 8, %s22
        %p1015 = scmp.lt.s32.totalorder %s1014, 15
        %s1016 = scalar_select %p1015, %s1014, 15
        %s1017 = smul.addr %s1016, 4
        %s1018 = scalar_lea.vmem %s7, %s1017
      $region68: #{classifier_forward.4} parent=63 // pred_fallthru
        _
      // Predicated region
      $region69: #{classifier_forward.4} parent=63 // pred_check
        %p1019 = pneg %p228
      $region70: #{classifier_forward.4} parent=63 // pred_check_branch
        %1021 = sbr.rel (%p1019) target = $region72
      $region71: #{classifier_forward.4} parent=63 // pred_region
        %s1022 = smul.u32 8, %s22
        %p1023 = scmp.lt.s32.totalorder %s1022, 15
        %s1024 = scalar_select %p1023, %s1022, 15
        %s1025 = smul.addr %s1024, 8
        %s1026 = scalar_lea.vmem %s8, %s1025
      $region72: #{classifier_forward.4} parent=63 // pred_fallthru
        _
      // Predicated region
      $region73: #{classifier_forward.4} parent=63 // pred_check
        %p1027 = pneg %p254
      $region74: #{classifier_forward.4} parent=63 // pred_check_branch
        %1029 = sbr.rel (%p1027) target = $region76
      $region75: #{classifier_forward.4} parent=63 // pred_region
        %s1030 = smul.u32 8, %s22
        %p1031 = scmp.lt.s32.totalorder %s1030, 15
        %s1032 = scalar_select %p1031, %s1030, 15
        %s1033 = smul.addr %s1032, 4
        %s1034 = scalar_lea.vmem %s9, %s1033
      $region76: #{classifier_forward.4} parent=63 // pred_fallthru
        _
    $region64: #{classifier_forward.4} parent=5 // pred_fallthru
      _
  $region6: #{classifier_forward.4} parent=0 // loop_footer
    %s20 = sadd.s32 1, %s16
  $region7: #{classifier_forward.4} parent=0 // loop_footer_branch
    %15 = sbr.rel target = $region3
  $region8: #{classifier_forward.4} parent=0 // loop_exit
    _

// kernel: classifier_forward.5
$region0: #{classifier_forward.5}
  #allocation0 [shape = 'u32[]', space=smem, size = 0x4, offset = 0x4, fixed_abs, tag = 'smem constant byte address 0x4 - core index']
  #allocation1 [shape = 'u32[144,128]{1,0:T(1,128)}', space=vmem, size = 0x12000, scoped, tag = 'internal scratch']
  #allocation2 [shape = 'f32[64,128]{1,0:T(8,128)}', space=vmem, size = 0x8000, scoped, tag = 'scratch operand']
  %s0 = inlined_call_operand.vmem [shape: s8[128,128], index: 0, kind: input, shape index: {}]
  %s1 = inlined_call_operand.vmem [shape: bf16[128,128], index: 1, kind: input, shape index: {}]
  %s2 = inlined_call_operand.vmem [shape: f32[128,128], index: 2, kind: input, shape index: {}]
  %s3 = inlined_call_operand.vmem [shape: f32[128,1], index: 3, kind: input, shape index: {}]
  %s4 = inlined_call_operand.vmem [shape: bf16[128,128], index: 4, kind: output, shape index: {}]
  %s5 = sld [smem:[#allocation0]]
  $region57: #{classifier_forward.5} parent=0
    _
  %s7 = ssub.s32 1, %s5
  %s8 = scalar_select 0, %s7, %s5
  loop: start=0, step=1, limit=4
  $region2: #{classifier_forward.5} parent=0 // loop_pre_header
    _
  $region3: #{classifier_forward.5} parent=0 // loop_header
    %s10 = sphi 0, %s14
    %p11 = scmp.ge.s32.totalorder %s10, 4
    %s17 = sphi 0, %s29
    %s18 = sphi 0, %s25
    %s19 = sphi 0, %s17
    %s20 = sphi 0, %s18
    %s21 = sphi 0, %s19
    %s22 = sphi 0, %s20
    %s34 = sphi 0, %s36
    %s37 = sphi 0, %s34
    %s38 = sphi 0, %s37
    %s54 = sphi 0, %s38
    %s60 = sphi 0, %s62
    %s63 = sphi 0, %s60
    %s64 = sphi 0, %s63
    %s80 = sphi 0, %s64
    %s86 = sphi 0, %s88
    %s89 = sphi 0, %s86
    %s90 = sphi 0, %s89
    %s106 = sphi 0, %s90
    %s112 = sphi 0, %s114
    %s115 = sphi 0, %s112
    %s116 = sphi 0, %s115
    %s132 = sphi 0, %s116
    %s138 = sphi 0, %s140
    %s141 = sphi 0, %s138
    %s142 = sphi 0, %s141
    %s158 = sphi 0, %s142
  $region4: #{classifier_forward.5} parent=0 // loop_header_branch
    %13 = sbr.rel (%p11) target = $region8
  $region5: #{classifier_forward.5} parent=0 // loop_body
    %s15 = ssub.s32 %s10, 1
    %s16 = ssub.s32 %s10, 2
    %s23 = sadd.s32 1, %s18
    %p24 = scmp.ge.s32.totalorder %s23, 1
    %s25 = scalar_select %p24, 0, %s23
    %s26 = sadd.s32 1, %s17
    %s27 = scalar_select %p24, %s26, %s17
    %p28 = scmp.ge.s32.totalorder %s27, 2
    %s29 = scalar_select %p28, 0, %s27
    %s30 = ssub.s32 %s17, %s29
    %s31 = ssub.s32 %s18, %s25
    %s32 = sor.u32 %s30, %s31
    %p33 = scmp.eq.s32.totalorder %s32, 0
    %s35 = sadd.s32 %s34, 1
    %s36 = scalar_select %p33, %s34, %s35
    %p39 = pneg %p33
    %p40 = scmp.eq.s32.totalorder %s10, 1
    %p41 = por %p39, %p40
    %p42 = scmp.ne.s32.totalorder %s34, %s37
    %p43 = scmp.eq.s32.totalorder %s10, 0
    %p44 = por %p42, %p43
    %p45 = scmp.ne.s32.totalorder %s34, %s37
    %p46 = scmp.eq.s32.totalorder %s15, 1
    %p47 = por %p45, %p46
    %p48 = scmp.ne.s32.totalorder %s37, %s38
    %p49 = scmp.eq.s32.totalorder %s15, 0
    %p50 = por %p48, %p49
    %p51 = scmp.ne.s32.totalorder %s37, %s38
    %p52 = scmp.eq.s32.totalorder %s16, 1
    %p53 = por %p51, %p52
    %p55 = scmp.ne.s32.totalorder %s38, %s54
    %p56 = scmp.eq.s32.totalorder %s16, 0
    %p57 = por %p55, %p56
    %s58 = ssub.s32 %s18, %s25
    %p59 = scmp.eq.s32.totalorder %s58, 0
    %s61 = sadd.s32 %s60, 1
    %s62 = scalar_select %p59, %s60, %s61
    %p65 = pneg %p59
    %p66 = scmp.eq.s32.totalorder %s10, 1
    %p67 = por %p65, %p66
    %p68 = scmp.ne.s32.totalorder %s60, %s63
    %p69 = scmp.eq.s32.totalorder %s10, 0
    %p70 = por %p68, %p69
    %p71 = scmp.ne.s32.totalorder %s60, %s63
    %p72 = scmp.eq.s32.totalorder %s15, 1
    %p73 = por %p71, %p72
    %p74 = scmp.ne.s32.totalorder %s63, %s64
    %p75 = scmp.eq.s32.totalorder %s15, 0
    %p76 = por %p74, %p75
    %p77 = scmp.ne.s32.totalorder %s63, %s64
    %p78 = scmp.eq.s32.totalorder %s16, 1
    %p79 = por %p77, %p78
    %p81 = scmp.ne.s32.totalorder %s64, %s80
    %p82 = scmp.eq.s32.totalorder %s16, 0
    %p83 = por %p81, %p82
    %s84 = ssub.s32 %s17, %s29
    %p85 = scmp.eq.s32.totalorder %s84, 0
    %s87 = sadd.s32 %s86, 1
    %s88 = scalar_select %p85, %s86, %s87
    %p91 = pneg %p85
    %p92 = scmp.eq.s32.totalorder %s10, 1
    %p93 = por %p91, %p92
    %p94 = scmp.ne.s32.totalorder %s86, %s89
    %p95 = scmp.eq.s32.totalorder %s10, 0
    %p96 = por %p94, %p95
    %p97 = scmp.ne.s32.totalorder %s86, %s89
    %p98 = scmp.eq.s32.totalorder %s15, 1
    %p99 = por %p97, %p98
    %p100 = scmp.ne.s32.totalorder %s89, %s90
    %p101 = scmp.eq.s32.totalorder %s15, 0
    %p102 = por %p100, %p101
    %p103 = scmp.ne.s32.totalorder %s89, %s90
    %p104 = scmp.eq.s32.totalorder %s16, 1
    %p105 = por %p103, %p104
    %p107 = scmp.ne.s32.totalorder %s90, %s106
    %p108 = scmp.eq.s32.totalorder %s16, 0
    %p109 = por %p107, %p108
    %s110 = ssub.s32 %s17, %s29
    %p111 = scmp.eq.s32.totalorder %s110, 0
    %s113 = sadd.s32 %s112, 1
    %s114 = scalar_select %p111, %s112, %s113
    %p117 = pneg %p111
    %p118 = scmp.eq.s32.totalorder %s10, 1
    %p119 = por %p117, %p118
    %p120 = scmp.ne.s32.totalorder %s112, %s115
    %p121 = scmp.eq.s32.totalorder %s10, 0
    %p122 = por %p120, %p121
    %p123 = scmp.ne.s32.totalorder %s112, %s115
    %p124 = scmp.eq.s32.totalorder %s15, 1
    %p125 = por %p123, %p124
    %p126 = scmp.ne.s32.totalorder %s115, %s116
    %p127 = scmp.eq.s32.totalorder %s15, 0
    %p128 = por %p126, %p127
    %p129 = scmp.ne.s32.totalorder %s115, %s116
    %p130 = scmp.eq.s32.totalorder %s16, 1
    %p131 = por %p129, %p130
    %p133 = scmp.ne.s32.totalorder %s116, %s132
    %p134 = scmp.eq.s32.totalorder %s16, 0
    %p135 = por %p133, %p134
    %s136 = ssub.s32 %s17, %s29
    %p137 = scmp.eq.s32.totalorder %s136, 0
    %s139 = sadd.s32 %s138, 1
    %s140 = scalar_select %p137, %s138, %s139
    %p143 = pneg %p137
    %p144 = scmp.eq.s32.totalorder %s10, 1
    %p145 = por %p143, %p144
    %p146 = scmp.ne.s32.totalorder %s138, %s141
    %p147 = scmp.eq.s32.totalorder %s10, 0
    %p148 = por %p146, %p147
    %p149 = scmp.ne.s32.totalorder %s138, %s141
    %p150 = scmp.eq.s32.totalorder %s15, 1
    %p151 = por %p149, %p150
    %p152 = scmp.ne.s32.totalorder %s141, %s142
    %p153 = scmp.eq.s32.totalorder %s15, 0
    %p154 = por %p152, %p153
    %p155 = scmp.ne.s32.totalorder %s141, %s142
    %p156 = scmp.eq.s32.totalorder %s16, 1
    %p157 = por %p155, %p156
    %p159 = scmp.ne.s32.totalorder %s142, %s158
    %p160 = scmp.eq.s32.totalorder %s16, 0
    %p161 = por %p159, %p160
    %p162 = scmp.le.s32.totalorder 1, %s10
    %p163 = scmp.lt.s32.totalorder %s10, 3
    %p164 = pnand %p162, %p163
    %p165 = pneg %p164
    // Predicated region
    $region9: #{classifier_forward.5} parent=5 // pred_check
      _
    $region10: #{classifier_forward.5} parent=5 // pred_check_branch
      %167 = sbr.rel (%p164) target = $region12
    $region11: #{classifier_forward.5} parent=5 // pred_region
      %s168 = ssub.s32 %s10, 1
      // Predicated region
      $region13: #{classifier_forward.5} parent=11 // pred_check
        %p169 = pneg %p76
      $region14: #{classifier_forward.5} parent=11 // pred_check_branch
        %171 = sbr.rel (%p169) target = $region16
      $region15: #{classifier_forward.5} parent=11 // pred_region
        %s172 = smul.u32 16, %s20
        %p173 = scmp.lt.s32.totalorder %s172, 15
        %s174 = scalar_select %p173, %s172, 15
        %s175 = smul.addr %s174, 4
        %s176 = scalar_lea.vmem %s1, %s175
        %s177 = smul.u32 16, %s20
      $region16: #{classifier_forward.5} parent=11 // pred_fallthru
        _
    $region12: #{classifier_forward.5} parent=5 // pred_fallthru
      _
    %p178 = scmp.lt.s32.totalorder %s10, 2
    // Predicated region
    $region17: #{classifier_forward.5} parent=5 // pred_check
      %p179 = pneg %p178
    $region18: #{classifier_forward.5} parent=5 // pred_check_branch
      %181 = sbr.rel (%p179) target = $region20
    $region19: #{classifier_forward.5} parent=5 // pred_region
      // Predicated region
      $region21: #{classifier_forward.5} parent=19 // pred_check
        %p182 = pneg %p44
      $region22: #{classifier_forward.5} parent=19 // pred_check_branch
        %184 = sbr.rel (%p182) target = $region24
      $region23: #{classifier_forward.5} parent=19 // pred_region
        %s185 = smul.u32 2, %s17
        %p186 = scmp.lt.s32.totalorder %s185, 3
        %s187 = scalar_select %p186, %s185, 3
        %p188 = scmp.lt.s32.totalorder %s18, 0
        %s189 = scalar_select %p188, %s18, 0
        %s190 = sadd.s32 %s189, %s187
        %s191 = smul.addr %s190, 8
        %s192 = scalar_lea.vmem %s0, %s191
        %s193 = smul.u32 2, %s17
      $region24: #{classifier_forward.5} parent=19 // pred_fallthru
        _
      // Predicated region
      $region25: #{classifier_forward.5} parent=19 // pred_check
        %p194 = pneg %p96
      $region26: #{classifier_forward.5} parent=19 // pred_check_branch
        %196 = sbr.rel (%p194) target = $region28
      $region27: #{classifier_forward.5} parent=19 // pred_region
        %s197 = smul.u32 8, %s17
        %p198 = scmp.lt.s32.totalorder %s197, 15
        %s199 = scalar_select %p198, %s197, 15
        %s200 = smul.addr %s199, 8
        %s201 = scalar_lea.vmem %s2, %s200
        %s202 = smul.u32 8, %s17
      $region28: #{classifier_forward.5} parent=19 // pred_fallthru
        _
      // Predicated region
      $region29: #{classifier_forward.5} parent=19 // pred_check
        %p203 = pneg %p122
      $region30: #{classifier_forward.5} parent=19 // pred_check_branch
        %205 = sbr.rel (%p203) target = $region32
      $region31: #{classifier_forward.5} parent=19 // pred_region
        %s206 = smul.u32 8, %s17
        %p207 = scmp.lt.s32.totalorder %s206, 15
        %s208 = scalar_select %p207, %s206, 15
        %s209 = smul.addr %s208, 8
        %s210 = scalar_lea.vmem %s3, %s209
        %s211 = smul.u32 8, %s17
      $region32: #{classifier_forward.5} parent=19 // pred_fallthru
        _
    $region20: #{classifier_forward.5} parent=5 // pred_fallthru
      _
    %p212 = scmp.le.s32.totalorder 1, %s10
    %p213 = scmp.lt.s32.totalorder %s10, 3
    %p214 = pnand %p212, %p213
    %p215 = pneg %p214
    // Predicated region
    $region33: #{classifier_forward.5} parent=5 // pred_check
      _
    $region34: #{classifier_forward.5} parent=5 // pred_check_branch
      %217 = sbr.rel (%p214) target = $region36
    $region35: #{classifier_forward.5} parent=5 // pred_region
      %s218 = ssub.s32 %s10, 1
      %s219 = smul.u32 2, %s19
      %p220 = scmp.lt.s32.totalorder %s219, 3
      %s221 = scalar_select %p220, %s219, 3
      %p222 = scmp.lt.s32.totalorder %s20, 0
      %s223 = scalar_select %p222, %s20, 0
      %s224 = sadd.s32 %s223, %s221
      %s225 = smul.addr %s224, 8
      %s226 = scalar_lea.vmem %s0, %s225
      %p227 = pneg %p50
      %p228 = pneg %p47
      %s229 = smul.u32 16, %s20
      %p230 = scmp.lt.s32.totalorder %s229, 15
      %s231 = scalar_select %p230, %s229, 15
      %s232 = smul.addr %s231, 4
      %s233 = scalar_lea.vmem %s1, %s232
      %p234 = pneg %p76
      %p235 = pneg %p73
      %s236 = smul.u32 8, %s19
      %p237 = scmp.lt.s32.totalorder %s236, 15
      %s238 = scalar_select %p237, %s236, 15
      %s239 = smul.addr %s238, 8
      %s240 = scalar_lea.vmem %s2, %s239
      %p241 = pneg %p102
      %p242 = pneg %p99
      %s243 = smul.u32 8, %s19
      %p244 = scmp.lt.s32.totalorder %s243, 15
      %s245 = scalar_select %p244, %s243, 15
      %s246 = smul.addr %s245, 8
      %s247 = scalar_lea.vmem %s3, %s246
      %p248 = pneg %p128
      %p249 = pneg %p125
      %p250 = pneg %p154
      %p251 = pneg %p151
      %s252 = smul.u32 8, %s19
      %p253 = scmp.lt.s32.totalorder %s252, 15
      %s254 = scalar_select %p253, %s252, 15
      %s255 = smul.addr %s254, 4
      %s256 = scalar_lea.vmem %s4, %s255
      %s257 = smul.u32 2, %s19
      %p258 = scmp.lt.s32.totalorder %s257, 3
      %s259 = scalar_select %p258, %s257, 3
      %p260 = scmp.lt.s32.totalorder %s20, 0
      %s261 = scalar_select %p260, %s20, 0
      %s262 = sadd.s32 %s261, %s259
      %s263 = smul.addr %s262, 8
      %s264 = scalar_lea.vmem %s0, %s263
      %s265 = smul.u32 2, %s19
      %s266 = smul.u32 16, %s20
      %p267 = scmp.lt.s32.totalorder %s266, 15
      %s268 = scalar_select %p267, %s266, 15
      %s269 = smul.addr %s268, 4
      %s270 = scalar_lea.vmem %s1, %s269
      %s271 = smul.u32 16, %s20
      %s272 = smul.u32 8, %s19
      %p273 = scmp.lt.s32.totalorder %s272, 15
      %s274 = scalar_select %p273, %s272, 15
      %s275 = smul.addr %s274, 8
      %s276 = scalar_lea.vmem %s2, %s275
      %s277 = smul.u32 8, %s19
      %s278 = smul.u32 8, %s19
      %p279 = scmp.lt.s32.totalorder %s278, 15
      %s280 = scalar_select %p279, %s278, 15
      %s281 = smul.addr %s280, 8
      %s282 = scalar_lea.vmem %s3, %s281
      %s283 = smul.u32 8, %s19
      %s284 = smul.u32 8, %s19
      %p285 = scmp.lt.s32.totalorder %s284, 15
      %s286 = scalar_select %p285, %s284, 15
      %s287 = smul.addr %s286, 4
      %s288 = scalar_lea.vmem %s4, %s287
      %s289 = smul.u32 8, %s19
      %p291 = scmp.eq.s32.totalorder %s20, 0
      // Predicated region
      $region37: #{classifier_forward.5} parent=35 // pred_check
        %p292 = pneg %p291
      $region38: #{classifier_forward.5} parent=35 // pred_check_branch
        %294 = sbr.rel (%p292) target = $region40
      $region39: #{classifier_forward.5} parent=35 // pred_region
        %295 = vst [vmem:[#allocation2] sm:$0xff] 0.0
        %296 = vst [vmem:[#allocation2 + $0x8] sm:$0xff] 0.0
        %297 = vst [vmem:[#allocation2 + $0x10] sm:$0xff] 0.0
        %298 = vst [vmem:[#allocation2 + $0x18] sm:$0xff] 0.0
        %299 = vst [vmem:[#allocation2 + $0x20] sm:$0xff] 0.0
        %300 = vst [vmem:[#allocation2 + $0x28] sm:$0xff] 0.0
        %301 = vst [vmem:[#allocation2 + $0x30] sm:$0xff] 0.0
        %302 = vst [vmem:[#allocation2 + $0x38] sm:$0xff] 0.0
      $region40: #{classifier_forward.5} parent=35 // pred_fallthru
        _
      %v303 = vld [vmem:[%s264] sm:$0xff]
      %v304 = vld [vmem:[%s264 + $0x8] sm:$0xff]
      %v305 = vunpack.c.l.s8.bf16 %v303
      %v306 = vunpack.c.h.s8.bf16 %v303
      %v307 = vunpack.c.l.s8.bf16 %v304
      %v308 = vunpack.c.h.s8.bf16 %v304
      %v309 = vld [vmem:[#allocation2] sm:$0xff]
      %v310 = vld [vmem:[#allocation2 + $0x8] sm:$0xff]
      %v311 = vld [vmem:[#allocation2 + $0x10] sm:$0xff]
      %v312 = vld [vmem:[#allocation2 + $0x18] sm:$0xff]
      %v313 = vld [vmem:[#allocation2 + $0x20] sm:$0xff]
      %v314 = vld [vmem:[#allocation2 + $0x28] sm:$0xff]
      %v315 = vld [vmem:[#allocation2 + $0x30] sm:$0xff]
      %v316 = vld [vmem:[#allocation2 + $0x38] sm:$0xff]
      %v317 = vld [vmem:[%s270] sm:$0xf]
      %v318 = vld [vmem:[%s270 + $0x4] sm:$0xf]
      %v319 = vld [vmem:[%s270 + $0x8] sm:$0xf]
      %v320 = vld [vmem:[%s270 + $0xc] sm:$0xf]
      %v321 = vld [vmem:[%s270 + $0x10] sm:$0xf]
      %v322 = vld [vmem:[%s270 + $0x14] sm:$0xf]
      %v323 = vld [vmem:[%s270 + $0x18] sm:$0xf]
      %v324 = vld [vmem:[%s270 + $0x1c] sm:$0xf]
      %v325 = vld [vmem:[%s270 + $0x20] sm:$0xf]
      %v326 = vld [vmem:[%s270 + $0x24] sm:$0xf]
      %v327 = vld [vmem:[%s270 + $0x28] sm:$0xf]
      %v328 = vld [vmem:[%s270 + $0x2c] sm:$0xf]
      %v329 = vld [vmem:[%s270 + $0x30] sm:$0xf]
      %v330 = vld [vmem:[%s270 + $0x34] sm:$0xf]
      %v331 = vld [vmem:[%s270 + $0x38] sm:$0xf]
      %v332 = vld [vmem:[%s270 + $0x3c] sm:$0xf]
      %v349 = vunpack.c.l.b16 %v317
      %v350 = vunpack.c.l.b16 %v318
      %v351 = vunpack.c.l.b16 %v319
      %v352 = vunpack.c.l.b16 %v320
      %v353 = vunpack.c.l.b16 %v321
      %v354 = vunpack.c.l.b16 %v322
      %v355 = vunpack.c.l.b16 %v323
      %v356 = vunpack.c.l.b16 %v324
      %v357 = vunpack.c.l.b16 %v325
      %v358 = vunpack.c.l.b16 %v326
      %v359 = vunpack.c.l.b16 %v327
      %v360 = vunpack.c.l.b16 %v328
      %v361 = vunpack.c.l.b16 %v329
      %v362 = vunpack.c.l.b16 %v330
      %v363 = vunpack.c.l.b16 %v331
      %v364 = vunpack.c.l.b16 %v332
      %v365 = vpack.c.b16 %v350, %v349
      %v366 = vpack.c.b16 %v352, %v351
      %v367 = vpack.c.b16 %v354, %v353
      %v368 = vpack.c.b16 %v356, %v355
      %v369 = vpack.c.b16 %v358, %v357
      %v370 = vpack.c.b16 %v360, %v359
      %v371 = vpack.c.b16 %v362, %v361
      %v372 = vpack.c.b16 %v364, %v363
      %381 = vmatprep.subr.bf16.mxu0 0
      %382 = vmatpush1.bf16.msra.mxu0 %v365
      %383 = vmatprep.subr.bf16.mxu0 0
      %384 = vmatpush1.bf16.msra.mxu0 %v366
      %385 = vmatprep.subr.bf16.mxu0 0
      %386 = vmatpush1.bf16.msra.mxu0 %v367
      %387 = vmatprep.subr.bf16.mxu0 0
      %388 = vmatpush1.bf16.msra.mxu0 %v368
      %389 = vmatprep.subr.bf16.mxu0 0
      %390 = vmatpush1.bf16.msra.mxu0 %v369
      %391 = vmatprep.subr.bf16.mxu0 0
      %392 = vmatpush1.bf16.msra.mxu0 %v370
      %393 = vmatprep.subr.bf16.mxu0 0
      %394 = vmatpush1.bf16.msra.mxu0 %v371
      %395 = vmatprep.subr.bf16.mxu0 0
      %396 = vmatpush1.bf16.msra.mxu0 %v372
      %397 = vmatprep.subr.bf16.mxu0 0
      %398 = vmatpush1.bf16.msra.mxu0 0
      %399 = vmatprep.subr.bf16.mxu0 0
      %400 = vmatpush1.bf16.msra.mxu0 0
      %401 = vmatprep.subr.bf16.mxu0 0
      %402 = vmatpush1.bf16.msra.mxu0 0
      %403 = vmatprep.subr.bf16.mxu0 0
      %404 = vmatpush1.bf16.msra.mxu0 0
      %405 = vmatprep.subr.bf16.mxu0 0
      %406 = vmatpush1.bf16.msra.mxu0 0
      %407 = vmatprep.subr.bf16.mxu0 0
      %408 = vmatpush1.bf16.msra.mxu0 0
      %409 = vmatprep.subr.bf16.mxu0 0
      %410 = vmatpush1.bf16.msra.mxu0 0
      %411 = vmatprep.subr.bf16.mxu0 0
      %412 = vmatpush1.bf16.msra.mxu0 0
      %413 = vmatprep.mubr.bf16.mxu0 0
      %414 = vmatmul.mubr.bf16.gmra.mrb[0].mxu0 %v305
      %v415 = vpop.f32.mrb[0].mxu0
      %v416 = vadd.f32 0.0, %v415
      %v417 = vpop.f32.mrb[0].mxu0
      %v418 = vpop.f32.mrb[0].mxu0
      %v419 = vadd.f32 0.0, %v418
      %v420 = vpop.f32.mrb[0].mxu0
      %421 = vmatprep.mubr.bf16.mxu0 0
      %422 = vmatmul.mubr.bf16.gmra.mrb[0].mxu0 %v306
      %v423 = vpop.f32.mrb[0].mxu0
      %v424 = vadd.f32 0.0, %v423
      %v425 = vpop.f32.mrb[0].mxu0
      %v426 = vpop.f32.mrb[0].mxu0
      %v427 = vadd.f32 0.0, %v426
      %v428 = vpop.f32.mrb[0].mxu0
      %429 = vmatprep.mubr.bf16.mxu0 0
      %430 = vmatmul.mubr.bf16.gmra.mrb[0].mxu0 %v307
      %v431 = vpop.f32.mrb[0].mxu0
      %v432 = vadd.f32 0.0, %v431
      %v433 = vpop.f32.mrb[0].mxu0
      %v434 = vpop.f32.mrb[0].mxu0
      %v435 = vadd.f32 0.0, %v434
      %v436 = vpop.f32.mrb[0].mxu0
      %437 = vmatprep.mubr.bf16.mxu0 0
      %438 = vmatmul.mubr.bf16.gmra.mrb[0].mxu0 %v308
      %v439 = vpop.f32.mrb[0].mxu0
      %v440 = vadd.f32 0.0, %v439
      %v441 = vpop.f32.mrb[0].mxu0
      %v442 = vpop.f32.mrb[0].mxu0
      %v443 = vadd.f32 0.0, %v442
      %v444 = vpop.f32.mrb[0].mxu0
      %445 = vdwg.mxu0
      %v446 = vadd.f32 %v309, %v416
      %v447 = vadd.f32 %v310, %v419
      %v448 = vadd.f32 %v311, %v424
      %v449 = vadd.f32 %v312, %v427
      %v450 = vadd.f32 %v313, %v432
      %v451 = vadd.f32 %v314, %v435
      %v452 = vadd.f32 %v315, %v440
      %v453 = vadd.f32 %v316, %v443
      %454 = vst [vmem:[#allocation2] sm:$0xff] %v446
      %455 = vst [vmem:[#allocation2 + $0x8] sm:$0xff] %v447
      %456 = vst [vmem:[#allocation2 + $0x10] sm:$0xff] %v448
      %457 = vst [vmem:[#allocation2 + $0x18] sm:$0xff] %v449
      %458 = vst [vmem:[#allocation2 + $0x20] sm:$0xff] %v450
      %459 = vst [vmem:[#allocation2 + $0x28] sm:$0xff] %v451
      %460 = vst [vmem:[#allocation2 + $0x30] sm:$0xff] %v452
      %461 = vst [vmem:[#allocation2 + $0x38] sm:$0xff] %v453
      // Predicated region
      $region41: #{classifier_forward.5} parent=35 // pred_check
        %p462 = pneg %p291
      $region42: #{classifier_forward.5} parent=35 // pred_check_branch
        %464 = sbr.rel (%p462) target = $region44
      $region43: #{classifier_forward.5} parent=35 // pred_region
        %v465 = vld [vmem:[#allocation2] sm:$0xff]
        %v466 = vld [vmem:[#allocation2 + $0x8] sm:$0xff]
        %v467 = vld [vmem:[#allocation2 + $0x10] sm:$0xff]
        %v468 = vld [vmem:[#allocation2 + $0x18] sm:$0xff]
        %v469 = vld [vmem:[#allocation2 + $0x20] sm:$0xff]
        %v470 = vld [vmem:[#allocation2 + $0x28] sm:$0xff]
        %v471 = vld [vmem:[#allocation2 + $0x30] sm:$0xff]
        %v472 = vld [vmem:[#allocation2 + $0x38] sm:$0xff]
        %v473 = vld [vmem:[%s282] sm:$0xff]
        %v474 = vld [vmem:[%s282 + $0x8] sm:$0xff]
        %v475 = vld [vmem:[%s282 + $0x10] sm:$0xff]
        %v476 = vld [vmem:[%s282 + $0x18] sm:$0xff]
        %v477 = vld [vmem:[%s282 + $0x20] sm:$0xff]
        %v478 = vld [vmem:[%s282 + $0x28] sm:$0xff]
        %v479 = vld [vmem:[%s282 + $0x30] sm:$0xff]
        %v480 = vld [vmem:[%s282 + $0x38] sm:$0xff]
        %482 = vset.pattern.permute.xlu0 0
        %483 = vperm.xlu0 %482, %v473
        %v484 = vpop.permute.xlu0 %483
        %487 = vset.pattern.permute.xlu0 0
        %488 = vperm.xlu0 %487, %v474
        %v489 = vpop.permute.xlu0 %488
        %492 = vset.pattern.permute.xlu0 0
        %493 = vperm.xlu0 %492, %v475
        %v494 = vpop.permute.xlu0 %493
        %497 = vset.pattern.permute.xlu0 0
        %498 = vperm.xlu0 %497, %v476
        %v499 = vpop.permute.xlu0 %498
        %502 = vset.pattern.permute.xlu0 0
        %503 = vperm.xlu0 %502, %v477
        %v504 = vpop.permute.xlu0 %503
        %507 = vset.pattern.permute.xlu0 0
        %508 = vperm.xlu0 %507, %v478
        %v509 = vpop.permute.xlu0 %508
        %512 = vset.pattern.permute.xlu0 0
        %513 = vperm.xlu0 %512, %v479
        %v514 = vpop.permute.xlu0 %513
        %517 = vset.pattern.permute.xlu0 0
        %518 = vperm.xlu0 %517, %v480
        %v519 = vpop.permute.xlu0 %518
        %v521 = vmul.f32 %v465, %v484
        %v522 = vmul.f32 %v466, %v489
        %v523 = vmul.f32 %v467, %v494
        %v524 = vmul.f32 %v468, %v499
        %v525 = vmul.f32 %v469, %v504
        %v526 = vmul.f32 %v470, %v509
        %v527 = vmul.f32 %v471, %v514
        %v528 = vmul.f32 %v472, %v519
        %v529 = vld [vmem:[%s276] sm:$0xff]
        %v530 = vld [vmem:[%s276 + $0x8] sm:$0xff]
        %v531 = vld [vmem:[%s276 + $0x10] sm:$0xff]
        %v532 = vld [vmem:[%s276 + $0x18] sm:$0xff]
        %v533 = vld [vmem:[%s276 + $0x20] sm:$0xff]
        %v534 = vld [vmem:[%s276 + $0x28] sm:$0xff]
        %v535 = vld [vmem:[%s276 + $0x30] sm:$0xff]
        %v536 = vld [vmem:[%s276 + $0x38] sm:$0xff]
        %v537 = vadd.f32 %v521, %v529
        %v538 = vadd.f32 %v522, %v530
        %v539 = vadd.f32 %v523, %v531
        %v540 = vadd.f32 %v524, %v532
        %v541 = vadd.f32 %v525, %v533
        %v542 = vadd.f32 %v526, %v534
        %v543 = vadd.f32 %v527, %v535
        %v544 = vadd.f32 %v528, %v536
        %v545 = vmax.f32 %v537, 0.0
        %v546 = vmax.f32 %v538, 0.0
        %v547 = vmax.f32 %v539, 0.0
        %v548 = vmax.f32 %v540, 0.0
        %v549 = vmax.f32 %v541, 0.0
        %v550 = vmax.f32 %v542, 0.0
        %v551 = vmax.f32 %v543, 0.0
        %v552 = vmax.f32 %v544, 0.0
        %v553 = vpack.c.bf16 %v546, %v545
        %v554 = vpack.c.bf16 %v548, %v547
        %v555 = vpack.c.bf16 %v550, %v549
        %v556 = vpack.c.bf16 %v552, %v551
        %v561 = vunpack.c.l.b16 %v553
        %v562 = vunpack.c.h.b16 %v553
        %v563 = vunpack.c.l.b16 %v554
        %v564 = vunpack.c.h.b16 %v554
        %v565 = vunpack.c.l.b16 %v555
        %v566 = vunpack.c.h.b16 %v555
        %v567 = vunpack.c.l.b16 %v556
        %v568 = vunpack.c.h.b16 %v556
        %v569 = vpack.c.b16 %v561, %v561
        %v570 = vpack.c.b16 %v562, %v562
        %v571 = vpack.c.b16 %v563, %v563
        %v572 = vpack.c.b16 %v564, %v564
        %v573 = vpack.c.b16 %v565, %v565
        %v574 = vpack.c.b16 %v566, %v566
        %v575 = vpack.c.b16 %v567, %v567
        %v576 = vpack.c.b16 %v568, %v568
        %585 = vst [vmem:[%s288] sm:$0xf] %v569
        %586 = vst [vmem:[%s288 + $0x4] sm:$0xf] %v570
        %587 = vst [vmem:[%s288 + $0x8] sm:$0xf] %v571
        %588 = vst [vmem:[%s288 + $0xc] sm:$0xf] %v572
        %589 = vst [vmem:[%s288 + $0x10] sm:$0xf] %v573
        %590 = vst [vmem:[%s288 + $0x14] sm:$0xf] %v574
        %591 = vst [vmem:[%s288 + $0x18] sm:$0xf] %v575
        %592 = vst [vmem:[%s288 + $0x1c] sm:$0xf] %v576
      $region44: #{classifier_forward.5} parent=35 // pred_fallthru
        _
      %s593 = smul.u32 8, %s19
      %p594 = scmp.lt.s32.totalorder %s593, 15
      %s595 = scalar_select %p594, %s593, 15
      %s596 = smul.addr %s595, 4
      %s597 = scalar_lea.vmem %s4, %s596
      // Predicated region
      $region45: #{classifier_forward.5} parent=35 // pred_check
        %p598 = pneg %p151
      $region46: #{classifier_forward.5} parent=35 // pred_check_branch
        %600 = sbr.rel (%p598) target = $region48
      $region47: #{classifier_forward.5} parent=35 // pred_region
        %s601 = smul.u32 8, %s19
      $region48: #{classifier_forward.5} parent=35 // pred_fallthru
        _
    $region36: #{classifier_forward.5} parent=5 // pred_fallthru
      _
    %p602 = scmp.le.s32.totalorder 2, %s10
    // Predicated region
    $region49: #{classifier_forward.5} parent=5 // pred_check
      %p603 = pneg %p602
    $region50: #{classifier_forward.5} parent=5 // pred_check_branch
      %605 = sbr.rel (%p603) target = $region52
    $region51: #{classifier_forward.5} parent=5 // pred_region
      %s606 = ssub.s32 %s10, 2
      // Predicated region
      $region53: #{classifier_forward.5} parent=51 // pred_check
        %p607 = pneg %p157
      $region54: #{classifier_forward.5} parent=51 // pred_check_branch
        %609 = sbr.rel (%p607) target = $region56
      $region55: #{classifier_forward.5} parent=51 // pred_region
        %s610 = smul.u32 8, %s21
        %p611 = scmp.lt.s32.totalorder %s610, 15
        %s612 = scalar_select %p611, %s610, 15
        %s613 = smul.addr %s612, 4
        %s614 = scalar_lea.vmem %s4, %s613
      $region56: #{classifier_forward.5} parent=51 // pred_fallthru
        _
    $region52: #{classifier_forward.5} parent=5 // pred_fallthru
      _
  $region6: #{classifier_forward.5} parent=0 // loop_footer
    %s14 = sadd.s32 1, %s10
  $region7: #{classifier_forward.5} parent=0 // loop_footer_branch
    %9 = sbr.rel target = $region3
  $region8: #{classifier_forward.5} parent=0 // loop_exit
    _

// kernel: classifier_forward.7
$region0: #{classifier_forward.7}
  #allocation0 [shape = 'u32[]', space=smem, size = 0x4, offset = 0x4, fixed_abs, tag = 'smem constant byte address 0x4 - core index']
  #allocation1 [shape = 'u32[144,128]{1,0:T(1,128)}', space=vmem, size = 0x12000, scoped, tag = 'internal scratch']
  #allocation2 [shape = 'f32[64,128]{1,0:T(8,128)}', space=vmem, size = 0x8000, scoped, tag = 'scratch operand']
  %s0 = inlined_call_operand.vmem [shape: s8[128,128], index: 0, kind: input, shape index: {}]
  %s1 = inlined_call_operand.vmem [shape: bf16[128,128], index: 1, kind: input, shape index: {}]
  %s2 = inlined_call_operand.vmem [shape: f32[128,128], index: 2, kind: input, shape index: {}]
  %s3 = inlined_call_operand.vmem [shape: f32[128,1], index: 3, kind: input, shape index: {}]
  %s4 = inlined_call_operand.vmem [shape: f32[128,128], index: 4, kind: output, shape index: {}]
  %s5 = sld [smem:[#allocation0]]
  $region57: #{classifier_forward.7} parent=0
    _
  %s7 = ssub.s32 1, %s5
  %s8 = scalar_select 0, %s7, %s5
  loop: start=0, step=1, limit=4
  $region2: #{classifier_forward.7} parent=0 // loop_pre_header
    _
  $region3: #{classifier_forward.7} parent=0 // loop_header
    %s10 = sphi 0, %s14
    %p11 = scmp.ge.s32.totalorder %s10, 4
    %s17 = sphi 0, %s29
    %s18 = sphi 0, %s25
    %s19 = sphi 0, %s17
    %s20 = sphi 0, %s18
    %s21 = sphi 0, %s19
    %s22 = sphi 0, %s20
    %s34 = sphi 0, %s36
    %s37 = sphi 0, %s34
    %s38 = sphi 0, %s37
    %s54 = sphi 0, %s38
    %s60 = sphi 0, %s62
    %s63 = sphi 0, %s60
    %s64 = sphi 0, %s63
    %s80 = sphi 0, %s64
    %s86 = sphi 0, %s88
    %s89 = sphi 0, %s86
    %s90 = sphi 0, %s89
    %s106 = sphi 0, %s90
    %s112 = sphi 0, %s114
    %s115 = sphi 0, %s112
    %s116 = sphi 0, %s115
    %s132 = sphi 0, %s116
    %s138 = sphi 0, %s140
    %s141 = sphi 0, %s138
    %s142 = sphi 0, %s141
    %s158 = sphi 0, %s142
  $region4: #{classifier_forward.7} parent=0 // loop_header_branch
    %13 = sbr.rel (%p11) target = $region8
  $region5: #{classifier_forward.7} parent=0 // loop_body
    %s15 = ssub.s32 %s10, 1
    %s16 = ssub.s32 %s10, 2
    %s23 = sadd.s32 1, %s18
    %p24 = scmp.ge.s32.totalorder %s23, 1
    %s25 = scalar_select %p24, 0, %s23
    %s26 = sadd.s32 1, %s17
    %s27 = scalar_select %p24, %s26, %s17
    %p28 = scmp.ge.s32.totalorder %s27, 2
    %s29 = scalar_select %p28, 0, %s27
    %s30 = ssub.s32 %s17, %s29
    %s31 = ssub.s32 %s18, %s25
    %s32 = sor.u32 %s30, %s31
    %p33 = scmp.eq.s32.totalorder %s32, 0
    %s35 = sadd.s32 %s34, 1
    %s36 = scalar_select %p33, %s34, %s35
    %p39 = pneg %p33
    %p40 = scmp.eq.s32.totalorder %s10, 1
    %p41 = por %p39, %p40
    %p42 = scmp.ne.s32.totalorder %s34, %s37
    %p43 = scmp.eq.s32.totalorder %s10, 0
    %p44 = por %p42, %p43
    %p45 = scmp.ne.s32.totalorder %s34, %s37
    %p46 = scmp.eq.s32.totalorder %s15, 1
    %p47 = por %p45, %p46
    %p48 = scmp.ne.s32.totalorder %s37, %s38
    %p49 = scmp.eq.s32.totalorder %s15, 0
    %p50 = por %p48, %p49
    %p51 = scmp.ne.s32.totalorder %s37, %s38
    %p52 = scmp.eq.s32.totalorder %s16, 1
    %p53 = por %p51, %p52
    %p55 = scmp.ne.s32.totalorder %s38, %s54
    %p56 = scmp.eq.s32.totalorder %s16, 0
    %p57 = por %p55, %p56
    %s58 = ssub.s32 %s18, %s25
    %p59 = scmp.eq.s32.totalorder %s58, 0
    %s61 = sadd.s32 %s60, 1
    %s62 = scalar_select %p59, %s60, %s61
    %p65 = pneg %p59
    %p66 = scmp.eq.s32.totalorder %s10, 1
    %p67 = por %p65, %p66
    %p68 = scmp.ne.s32.totalorder %s60, %s63
    %p69 = scmp.eq.s32.totalorder %s10, 0
    %p70 = por %p68, %p69
    %p71 = scmp.ne.s32.totalorder %s60, %s63
    %p72 = scmp.eq.s32.totalorder %s15, 1
    %p73 = por %p71, %p72
    %p74 = scmp.ne.s32.totalorder %s63, %s64
    %p75 = scmp.eq.s32.totalorder %s15, 0
    %p76 = por %p74, %p75
    %p77 = scmp.ne.s32.totalorder %s63, %s64
    %p78 = scmp.eq.s32.totalorder %s16, 1
    %p79 = por %p77, %p78
    %p81 = scmp.ne.s32.totalorder %s64, %s80
    %p82 = scmp.eq.s32.totalorder %s16, 0
    %p83 = por %p81, %p82
    %s84 = ssub.s32 %s17, %s29
    %p85 = scmp.eq.s32.totalorder %s84, 0
    %s87 = sadd.s32 %s86, 1
    %s88 = scalar_select %p85, %s86, %s87
    %p91 = pneg %p85
    %p92 = scmp.eq.s32.totalorder %s10, 1
    %p93 = por %p91, %p92
    %p94 = scmp.ne.s32.totalorder %s86, %s89
    %p95 = scmp.eq.s32.totalorder %s10, 0
    %p96 = por %p94, %p95
    %p97 = scmp.ne.s32.totalorder %s86, %s89
    %p98 = scmp.eq.s32.totalorder %s15, 1
    %p99 = por %p97, %p98
    %p100 = scmp.ne.s32.totalorder %s89, %s90
    %p101 = scmp.eq.s32.totalorder %s15, 0
    %p102 = por %p100, %p101
    %p103 = scmp.ne.s32.totalorder %s89, %s90
    %p104 = scmp.eq.s32.totalorder %s16, 1
    %p105 = por %p103, %p104
    %p107 = scmp.ne.s32.totalorder %s90, %s106
    %p108 = scmp.eq.s32.totalorder %s16, 0
    %p109 = por %p107, %p108
    %s110 = ssub.s32 %s17, %s29
    %p111 = scmp.eq.s32.totalorder %s110, 0
    %s113 = sadd.s32 %s112, 1
    %s114 = scalar_select %p111, %s112, %s113
    %p117 = pneg %p111
    %p118 = scmp.eq.s32.totalorder %s10, 1
    %p119 = por %p117, %p118
    %p120 = scmp.ne.s32.totalorder %s112, %s115
    %p121 = scmp.eq.s32.totalorder %s10, 0
    %p122 = por %p120, %p121
    %p123 = scmp.ne.s32.totalorder %s112, %s115
    %p124 = scmp.eq.s32.totalorder %s15, 1
    %p125 = por %p123, %p124
    %p126 = scmp.ne.s32.totalorder %s115, %s116
    %p127 = scmp.eq.s32.totalorder %s15, 0
    %p128 = por %p126, %p127
    %p129 = scmp.ne.s32.totalorder %s115, %s116
    %p130 = scmp.eq.s32.totalorder %s16, 1
    %p131 = por %p129, %p130
    %p133 = scmp.ne.s32.totalorder %s116, %s132
    %p134 = scmp.eq.s32.totalorder %s16, 0
    %p135 = por %p133, %p134
    %s136 = ssub.s32 %s17, %s29
    %p137 = scmp.eq.s32.totalorder %s136, 0
    %s139 = sadd.s32 %s138, 1
    %s140 = scalar_select %p137, %s138, %s139
    %p143 = pneg %p137
    %p144 = scmp.eq.s32.totalorder %s10, 1
    %p145 = por %p143, %p144
    %p146 = scmp.ne.s32.totalorder %s138, %s141
    %p147 = scmp.eq.s32.totalorder %s10, 0
    %p148 = por %p146, %p147
    %p149 = scmp.ne.s32.totalorder %s138, %s141
    %p150 = scmp.eq.s32.totalorder %s15, 1
    %p151 = por %p149, %p150
    %p152 = scmp.ne.s32.totalorder %s141, %s142
    %p153 = scmp.eq.s32.totalorder %s15, 0
    %p154 = por %p152, %p153
    %p155 = scmp.ne.s32.totalorder %s141, %s142
    %p156 = scmp.eq.s32.totalorder %s16, 1
    %p157 = por %p155, %p156
    %p159 = scmp.ne.s32.totalorder %s142, %s158
    %p160 = scmp.eq.s32.totalorder %s16, 0
    %p161 = por %p159, %p160
    %p162 = scmp.le.s32.totalorder 1, %s10
    %p163 = scmp.lt.s32.totalorder %s10, 3
    %p164 = pnand %p162, %p163
    %p165 = pneg %p164
    // Predicated region
    $region9: #{classifier_forward.7} parent=5 // pred_check
      _
    $region10: #{classifier_forward.7} parent=5 // pred_check_branch
      %167 = sbr.rel (%p164) target = $region12
    $region11: #{classifier_forward.7} parent=5 // pred_region
      %s168 = ssub.s32 %s10, 1
      // Predicated region
      $region13: #{classifier_forward.7} parent=11 // pred_check
        %p169 = pneg %p76
      $region14: #{classifier_forward.7} parent=11 // pred_check_branch
        %171 = sbr.rel (%p169) target = $region16
      $region15: #{classifier_forward.7} parent=11 // pred_region
        %s172 = smul.u32 16, %s20
        %p173 = scmp.lt.s32.totalorder %s172, 15
        %s174 = scalar_select %p173, %s172, 15
        %s175 = smul.addr %s174, 4
        %s176 = scalar_lea.vmem %s1, %s175
        %s177 = smul.u32 16, %s20
      $region16: #{classifier_forward.7} parent=11 // pred_fallthru
        _
    $region12: #{classifier_forward.7} parent=5 // pred_fallthru
      _
    %p178 = scmp.lt.s32.totalorder %s10, 2
    // Predicated region
    $region17: #{classifier_forward.7} parent=5 // pred_check
      %p179 = pneg %p178
    $region18: #{classifier_forward.7} parent=5 // pred_check_branch
      %181 = sbr.rel (%p179) target = $region20
    $region19: #{classifier_forward.7} parent=5 // pred_region
      // Predicated region
      $region21: #{classifier_forward.7} parent=19 // pred_check
        %p182 = pneg %p44
      $region22: #{classifier_forward.7} parent=19 // pred_check_branch
        %184 = sbr.rel (%p182) target = $region24
      $region23: #{classifier_forward.7} parent=19 // pred_region
        %s185 = smul.u32 2, %s17
        %p186 = scmp.lt.s32.totalorder %s185, 3
        %s187 = scalar_select %p186, %s185, 3
        %p188 = scmp.lt.s32.totalorder %s18, 0
        %s189 = scalar_select %p188, %s18, 0
        %s190 = sadd.s32 %s189, %s187
        %s191 = smul.addr %s190, 8
        %s192 = scalar_lea.vmem %s0, %s191
        %s193 = smul.u32 2, %s17
      $region24: #{classifier_forward.7} parent=19 // pred_fallthru
        _
      // Predicated region
      $region25: #{classifier_forward.7} parent=19 // pred_check
        %p194 = pneg %p96
      $region26: #{classifier_forward.7} parent=19 // pred_check_branch
        %196 = sbr.rel (%p194) target = $region28
      $region27: #{classifier_forward.7} parent=19 // pred_region
        %s197 = smul.u32 8, %s17
        %p198 = scmp.lt.s32.totalorder %s197, 15
        %s199 = scalar_select %p198, %s197, 15
        %s200 = smul.addr %s199, 8
        %s201 = scalar_lea.vmem %s2, %s200
        %s202 = smul.u32 8, %s17
      $region28: #{classifier_forward.7} parent=19 // pred_fallthru
        _
      // Predicated region
      $region29: #{classifier_forward.7} parent=19 // pred_check
        %p203 = pneg %p122
      $region30: #{classifier_forward.7} parent=19 // pred_check_branch
        %205 = sbr.rel (%p203) target = $region32
      $region31: #{classifier_forward.7} parent=19 // pred_region
        %s206 = smul.u32 8, %s17
        %p207 = scmp.lt.s32.totalorder %s206, 15
        %s208 = scalar_select %p207, %s206, 15
        %s209 = smul.addr %s208, 8
        %s210 = scalar_lea.vmem %s3, %s209
        %s211 = smul.u32 8, %s17
      $region32: #{classifier_forward.7} parent=19 // pred_fallthru
        _
    $region20: #{classifier_forward.7} parent=5 // pred_fallthru
      _
    %p212 = scmp.le.s32.totalorder 1, %s10
    %p213 = scmp.lt.s32.totalorder %s10, 3
    %p214 = pnand %p212, %p213
    %p215 = pneg %p214
    // Predicated region
    $region33: #{classifier_forward.7} parent=5 // pred_check
      _
    $region34: #{classifier_forward.7} parent=5 // pred_check_branch
      %217 = sbr.rel (%p214) target = $region36
    $region35: #{classifier_forward.7} parent=5 // pred_region
      %s218 = ssub.s32 %s10, 1
      %s219 = smul.u32 2, %s19
      %p220 = scmp.lt.s32.totalorder %s219, 3
      %s221 = scalar_select %p220, %s219, 3
      %p222 = scmp.lt.s32.totalorder %s20, 0
      %s223 = scalar_select %p222, %s20, 0
      %s224 = sadd.s32 %s223, %s221
      %s225 = smul.addr %s224, 8
      %s226 = scalar_lea.vmem %s0, %s225
      %p227 = pneg %p50
      %p228 = pneg %p47
      %s229 = smul.u32 16, %s20
      %p230 = scmp.lt.s32.totalorder %s229, 15
      %s231 = scalar_select %p230, %s229, 15
      %s232 = smul.addr %s231, 4
      %s233 = scalar_lea.vmem %s1, %s232
      %p234 = pneg %p76
      %p235 = pneg %p73
      %s236 = smul.u32 8, %s19
      %p237 = scmp.lt.s32.totalorder %s236, 15
      %s238 = scalar_select %p237, %s236, 15
      %s239 = smul.addr %s238, 8
      %s240 = scalar_lea.vmem %s2, %s239
      %p241 = pneg %p102
      %p242 = pneg %p99
      %s243 = smul.u32 8, %s19
      %p244 = scmp.lt.s32.totalorder %s243, 15
      %s245 = scalar_select %p244, %s243, 15
      %s246 = smul.addr %s245, 8
      %s247 = scalar_lea.vmem %s3, %s246
      %p248 = pneg %p128
      %p249 = pneg %p125
      %p250 = pneg %p154
      %p251 = pneg %p151
      %s252 = smul.u32 8, %s19
      %p253 = scmp.lt.s32.totalorder %s252, 15
      %s254 = scalar_select %p253, %s252, 15
      %s255 = smul.addr %s254, 8
      %s256 = scalar_lea.vmem %s4, %s255
      %s257 = smul.u32 2, %s19
      %p258 = scmp.lt.s32.totalorder %s257, 3
      %s259 = scalar_select %p258, %s257, 3
      %p260 = scmp.lt.s32.totalorder %s20, 0
      %s261 = scalar_select %p260, %s20, 0
      %s262 = sadd.s32 %s261, %s259
      %s263 = smul.addr %s262, 8
      %s264 = scalar_lea.vmem %s0, %s263
      %s265 = smul.u32 2, %s19
      %s266 = smul.u32 16, %s20
      %p267 = scmp.lt.s32.totalorder %s266, 15
      %s268 = scalar_select %p267, %s266, 15
      %s269 = smul.addr %s268, 4
      %s270 = scalar_lea.vmem %s1, %s269
      %s271 = smul.u32 16, %s20
      %s272 = smul.u32 8, %s19
      %p273 = scmp.lt.s32.totalorder %s272, 15
      %s274 = scalar_select %p273, %s272, 15
      %s275 = smul.addr %s274, 8
      %s276 = scalar_lea.vmem %s2, %s275
      %s277 = smul.u32 8, %s19
      %s278 = smul.u32 8, %s19
      %p279 = scmp.lt.s32.totalorder %s278, 15
      %s280 = scalar_select %p279, %s278, 15
      %s281 = smul.addr %s280, 8
      %s282 = scalar_lea.vmem %s3, %s281
      %s283 = smul.u32 8, %s19
      %s284 = smul.u32 8, %s19
      %p285 = scmp.lt.s32.totalorder %s284, 15
      %s286 = scalar_select %p285, %s284, 15
      %s287 = smul.addr %s286, 8
      %s288 = scalar_lea.vmem %s4, %s287
      %s289 = smul.u32 8, %s19
      %p291 = scmp.eq.s32.totalorder %s20, 0
      // Predicated region
      $region37: #{classifier_forward.7} parent=35 // pred_check
        %p292 = pneg %p291
      $region38: #{classifier_forward.7} parent=35 // pred_check_branch
        %294 = sbr.rel (%p292) target = $region40
      $region39: #{classifier_forward.7} parent=35 // pred_region
        %295 = vst [vmem:[#allocation2] sm:$0xff] 0.0
        %296 = vst [vmem:[#allocation2 + $0x8] sm:$0xff] 0.0
        %297 = vst [vmem:[#allocation2 + $0x10] sm:$0xff] 0.0
        %298 = vst [vmem:[#allocation2 + $0x18] sm:$0xff] 0.0
        %299 = vst [vmem:[#allocation2 + $0x20] sm:$0xff] 0.0
        %300 = vst [vmem:[#allocation2 + $0x28] sm:$0xff] 0.0
        %301 = vst [vmem:[#allocation2 + $0x30] sm:$0xff] 0.0
        %302 = vst [vmem:[#allocation2 + $0x38] sm:$0xff] 0.0
      $region40: #{classifier_forward.7} parent=35 // pred_fallthru
        _
      %v303 = vld [vmem:[%s264] sm:$0xff]
      %v304 = vld [vmem:[%s264 + $0x8] sm:$0xff]
      %v305 = vunpack.c.l.s8.bf16 %v303
      %v306 = vunpack.c.h.s8.bf16 %v303
      %v307 = vunpack.c.l.s8.bf16 %v304
      %v308 = vunpack.c.h.s8.bf16 %v304
      %v309 = vld [vmem:[#allocation2] sm:$0xff]
      %v310 = vld [vmem:[#allocation2 + $0x8] sm:$0xff]
      %v311 = vld [vmem:[#allocation2 + $0x10] sm:$0xff]
      %v312 = vld [vmem:[#allocation2 + $0x18] sm:$0xff]
      %v313 = vld [vmem:[#allocation2 + $0x20] sm:$0xff]
      %v314 = vld [vmem:[#allocation2 + $0x28] sm:$0xff]
      %v315 = vld [vmem:[#allocation2 + $0x30] sm:$0xff]
      %v316 = vld [vmem:[#allocation2 + $0x38] sm:$0xff]
      %v317 = vld [vmem:[%s270] sm:$0xf]
      %v318 = vld [vmem:[%s270 + $0x4] sm:$0xf]
      %v319 = vld [vmem:[%s270 + $0x8] sm:$0xf]
      %v320 = vld [vmem:[%s270 + $0xc] sm:$0xf]
      %v321 = vld [vmem:[%s270 + $0x10] sm:$0xf]
      %v322 = vld [vmem:[%s270 + $0x14] sm:$0xf]
      %v323 = vld [vmem:[%s270 + $0x18] sm:$0xf]
      %v324 = vld [vmem:[%s270 + $0x1c] sm:$0xf]
      %v325 = vld [vmem:[%s270 + $0x20] sm:$0xf]
      %v326 = vld [vmem:[%s270 + $0x24] sm:$0xf]
      %v327 = vld [vmem:[%s270 + $0x28] sm:$0xf]
      %v328 = vld [vmem:[%s270 + $0x2c] sm:$0xf]
      %v329 = vld [vmem:[%s270 + $0x30] sm:$0xf]
      %v330 = vld [vmem:[%s270 + $0x34] sm:$0xf]
      %v331 = vld [vmem:[%s270 + $0x38] sm:$0xf]
      %v332 = vld [vmem:[%s270 + $0x3c] sm:$0xf]
      %v349 = vunpack.c.l.b16 %v317
      %v350 = vunpack.c.l.b16 %v318
      %v351 = vunpack.c.l.b16 %v319
      %v352 = vunpack.c.l.b16 %v320
      %v353 = vunpack.c.l.b16 %v321
      %v354 = vunpack.c.l.b16 %v322
      %v355 = vunpack.c.l.b16 %v323
      %v356 = vunpack.c.l.b16 %v324
      %v357 = vunpack.c.l.b16 %v325
      %v358 = vunpack.c.l.b16 %v326
      %v359 = vunpack.c.l.b16 %v327
      %v360 = vunpack.c.l.b16 %v328
      %v361 = vunpack.c.l.b16 %v329
      %v362 = vunpack.c.l.b16 %v330
      %v363 = vunpack.c.l.b16 %v331
      %v364 = vunpack.c.l.b16 %v332
      %v365 = vpack.c.b16 %v350, %v349
      %v366 = vpack.c.b16 %v352, %v351
      %v367 = vpack.c.b16 %v354, %v353
      %v368 = vpack.c.b16 %v356, %v355
      %v369 = vpack.c.b16 %v358, %v357
      %v370 = vpack.c.b16 %v360, %v359
      %v371 = vpack.c.b16 %v362, %v361
      %v372 = vpack.c.b16 %v364, %v363
      %381 = vmatprep.subr.bf16.mxu0 0
      %382 = vmatpush1.bf16.msra.mxu0 %v365
      %383 = vmatprep.subr.bf16.mxu0 0
      %384 = vmatpush1.bf16.msra.mxu0 %v366
      %385 = vmatprep.subr.bf16.mxu0 0
      %386 = vmatpush1.bf16.msra.mxu0 %v367
      %387 = vmatprep.subr.bf16.mxu0 0
      %388 = vmatpush1.bf16.msra.mxu0 %v368
      %389 = vmatprep.subr.bf16.mxu0 0
      %390 = vmatpush1.bf16.msra.mxu0 %v369
      %391 = vmatprep.subr.bf16.mxu0 0
      %392 = vmatpush1.bf16.msra.mxu0 %v370
      %393 = vmatprep.subr.bf16.mxu0 0
      %394 = vmatpush1.bf16.msra.mxu0 %v371
      %395 = vmatprep.subr.bf16.mxu0 0
      %396 = vmatpush1.bf16.msra.mxu0 %v372
      %397 = vmatprep.subr.bf16.mxu0 0
      %398 = vmatpush1.bf16.msra.mxu0 0
      %399 = vmatprep.subr.bf16.mxu0 0
      %400 = vmatpush1.bf16.msra.mxu0 0
      %401 = vmatprep.subr.bf16.mxu0 0
      %402 = vmatpush1.bf16.msra.mxu0 0
      %403 = vmatprep.subr.bf16.mxu0 0
      %404 = vmatpush1.bf16.msra.mxu0 0
      %405 = vmatprep.subr.bf16.mxu0 0
      %406 = vmatpush1.bf16.msra.mxu0 0
      %407 = vmatprep.subr.bf16.mxu0 0
      %408 = vmatpush1.bf16.msra.mxu0 0
      %409 = vmatprep.subr.bf16.mxu0 0
      %410 = vmatpush1.bf16.msra.mxu0 0
      %411 = vmatprep.subr.bf16.mxu0 0
      %412 = vmatpush1.bf16.msra.mxu0 0
      %413 = vmatprep.mubr.bf16.mxu0 0
      %414 = vmatmul.mubr.bf16.gmra.mrb[0].mxu0 %v305
      %v415 = vpop.f32.mrb[0].mxu0
      %v416 = vadd.f32 0.0, %v415
      %v417 = vpop.f32.mrb[0].mxu0
      %v418 = vpop.f32.mrb[0].mxu0
      %v419 = vadd.f32 0.0, %v418
      %v420 = vpop.f32.mrb[0].mxu0
      %421 = vmatprep.mubr.bf16.mxu0 0
      %422 = vmatmul.mubr.bf16.gmra.mrb[0].mxu0 %v306
      %v423 = vpop.f32.mrb[0].mxu0
      %v424 = vadd.f32 0.0, %v423
      %v425 = vpop.f32.mrb[0].mxu0
      %v426 = vpop.f32.mrb[0].mxu0
      %v427 = vadd.f32 0.0, %v426
      %v428 = vpop.f32.mrb[0].mxu0
      %429 = vmatprep.mubr.bf16.mxu0 0
      %430 = vmatmul.mubr.bf16.gmra.mrb[0].mxu0 %v307
      %v431 = vpop.f32.mrb[0].mxu0
      %v432 = vadd.f32 0.0, %v431
      %v433 = vpop.f32.mrb[0].mxu0
      %v434 = vpop.f32.mrb[0].mxu0
      %v435 = vadd.f32 0.0, %v434
      %v436 = vpop.f32.mrb[0].mxu0
      %437 = vmatprep.mubr.bf16.mxu0 0
      %438 = vmatmul.mubr.bf16.gmra.mrb[0].mxu0 %v308
      %v439 = vpop.f32.mrb[0].mxu0
      %v440 = vadd.f32 0.0, %v439
      %v441 = vpop.f32.mrb[0].mxu0
      %v442 = vpop.f32.mrb[0].mxu0
      %v443 = vadd.f32 0.0, %v442
      %v444 = vpop.f32.mrb[0].mxu0
      %445 = vdwg.mxu0
      %v446 = vadd.f32 %v309, %v416
      %v447 = vadd.f32 %v310, %v419
      %v448 = vadd.f32 %v311, %v424
      %v449 = vadd.f32 %v312, %v427
      %v450 = vadd.f32 %v313, %v432
      %v451 = vadd.f32 %v314, %v435
      %v452 = vadd.f32 %v315, %v440
      %v453 = vadd.f32 %v316, %v443
      %454 = vst [vmem:[#allocation2] sm:$0xff] %v446
      %455 = vst [vmem:[#allocation2 + $0x8] sm:$0xff] %v447
      %456 = vst [vmem:[#allocation2 + $0x10] sm:$0xff] %v448
      %457 = vst [vmem:[#allocation2 + $0x18] sm:$0xff] %v449
      %458 = vst [vmem:[#allocation2 + $0x20] sm:$0xff] %v450
      %459 = vst [vmem:[#allocation2 + $0x28] sm:$0xff] %v451
      %460 = vst [vmem:[#allocation2 + $0x30] sm:$0xff] %v452
      %461 = vst [vmem:[#allocation2 + $0x38] sm:$0xff] %v453
      // Predicated region
      $region41: #{classifier_forward.7} parent=35 // pred_check
        %p462 = pneg %p291
      $region42: #{classifier_forward.7} parent=35 // pred_check_branch
        %464 = sbr.rel (%p462) target = $region44
      $region43: #{classifier_forward.7} parent=35 // pred_region
        %v465 = vld [vmem:[#allocation2] sm:$0xff]
        %v466 = vld [vmem:[#allocation2 + $0x8] sm:$0xff]
        %v467 = vld [vmem:[#allocation2 + $0x10] sm:$0xff]
        %v468 = vld [vmem:[#allocation2 + $0x18] sm:$0xff]
        %v469 = vld [vmem:[#allocation2 + $0x20] sm:$0xff]
        %v470 = vld [vmem:[#allocation2 + $0x28] sm:$0xff]
        %v471 = vld [vmem:[#allocation2 + $0x30] sm:$0xff]
        %v472 = vld [vmem:[#allocation2 + $0x38] sm:$0xff]
        %v473 = vld [vmem:[%s282] sm:$0xff]
        %v474 = vld [vmem:[%s282 + $0x8] sm:$0xff]
        %v475 = vld [vmem:[%s282 + $0x10] sm:$0xff]
        %v476 = vld [vmem:[%s282 + $0x18] sm:$0xff]
        %v477 = vld [vmem:[%s282 + $0x20] sm:$0xff]
        %v478 = vld [vmem:[%s282 + $0x28] sm:$0xff]
        %v479 = vld [vmem:[%s282 + $0x30] sm:$0xff]
        %v480 = vld [vmem:[%s282 + $0x38] sm:$0xff]
        %482 = vset.pattern.permute.xlu0 0
        %483 = vperm.xlu0 %482, %v473
        %v484 = vpop.permute.xlu0 %483
        %487 = vset.pattern.permute.xlu0 0
        %488 = vperm.xlu0 %487, %v474
        %v489 = vpop.permute.xlu0 %488
        %492 = vset.pattern.permute.xlu0 0
        %493 = vperm.xlu0 %492, %v475
        %v494 = vpop.permute.xlu0 %493
        %497 = vset.pattern.permute.xlu0 0
        %498 = vperm.xlu0 %497, %v476
        %v499 = vpop.permute.xlu0 %498
        %502 = vset.pattern.permute.xlu0 0
        %503 = vperm.xlu0 %502, %v477
        %v504 = vpop.permute.xlu0 %503
        %507 = vset.pattern.permute.xlu0 0
        %508 = vperm.xlu0 %507, %v478
        %v509 = vpop.permute.xlu0 %508
        %512 = vset.pattern.permute.xlu0 0
        %513 = vperm.xlu0 %512, %v479
        %v514 = vpop.permute.xlu0 %513
        %517 = vset.pattern.permute.xlu0 0
        %518 = vperm.xlu0 %517, %v480
        %v519 = vpop.permute.xlu0 %518
        %v521 = vmul.f32 %v465, %v484
        %v522 = vmul.f32 %v466, %v489
        %v523 = vmul.f32 %v467, %v494
        %v524 = vmul.f32 %v468, %v499
        %v525 = vmul.f32 %v469, %v504
        %v526 = vmul.f32 %v470, %v509
        %v527 = vmul.f32 %v471, %v514
        %v528 = vmul.f32 %v472, %v519
        %v529 = vld [vmem:[%s276] sm:$0xff]
        %v530 = vld [vmem:[%s276 + $0x8] sm:$0xff]
        %v531 = vld [vmem:[%s276 + $0x10] sm:$0xff]
        %v532 = vld [vmem:[%s276 + $0x18] sm:$0xff]
        %v533 = vld [vmem:[%s276 + $0x20] sm:$0xff]
        %v534 = vld [vmem:[%s276 + $0x28] sm:$0xff]
        %v535 = vld [vmem:[%s276 + $0x30] sm:$0xff]
        %v536 = vld [vmem:[%s276 + $0x38] sm:$0xff]
        %v537 = vadd.f32 %v521, %v529
        %v538 = vadd.f32 %v522, %v530
        %v539 = vadd.f32 %v523, %v531
        %v540 = vadd.f32 %v524, %v532
        %v541 = vadd.f32 %v525, %v533
        %v542 = vadd.f32 %v526, %v534
        %v543 = vadd.f32 %v527, %v535
        %v544 = vadd.f32 %v528, %v536
        %545 = vst [vmem:[%s288] sm:$0xff] %v537
        %546 = vst [vmem:[%s288 + $0x8] sm:$0xff] %v538
        %547 = vst [vmem:[%s288 + $0x10] sm:$0xff] %v539
        %548 = vst [vmem:[%s288 + $0x18] sm:$0xff] %v540
        %549 = vst [vmem:[%s288 + $0x20] sm:$0xff] %v541
        %550 = vst [vmem:[%s288 + $0x28] sm:$0xff] %v542
        %551 = vst [vmem:[%s288 + $0x30] sm:$0xff] %v543
        %552 = vst [vmem:[%s288 + $0x38] sm:$0xff] %v544
      $region44: #{classifier_forward.7} parent=35 // pred_fallthru
        _
      %s553 = smul.u32 8, %s19
      %p554 = scmp.lt.s32.totalorder %s553, 15
      %s555 = scalar_select %p554, %s553, 15
      %s556 = smul.addr %s555, 8
      %s557 = scalar_lea.vmem %s4, %s556
      // Predicated region
      $region45: #{classifier_forward.7} parent=35 // pred_check
        %p558 = pneg %p151
      $region46: #{classifier_forward.7} parent=35 // pred_check_branch
        %560 = sbr.rel (%p558) target = $region48
      $region47: #{classifier_forward.7} parent=35 // pred_region
        %s561 = smul.u32 8, %s19
      $region48: #{classifier_forward.7} parent=35 // pred_fallthru
        _
    $region36: #{classifier_forward.7} parent=5 // pred_fallthru
      _
    %p562 = scmp.le.s32.totalorder 2, %s10
    // Predicated region
    $region49: #{classifier_forward.7} parent=5 // pred_check
      %p563 = pneg %p562
    $region50: #{classifier_forward.7} parent=5 // pred_check_branch
      %565 = sbr.rel (%p563) target = $region52
    $region51: #{classifier_forward.7} parent=5 // pred_region
      %s566 = ssub.s32 %s10, 2
      // Predicated region
      $region53: #{classifier_forward.7} parent=51 // pred_check
        %p567 = pneg %p157
      $region54: #{classifier_forward.7} parent=51 // pred_check_branch
        %569 = sbr.rel (%p567) target = $region56
      $region55: #{classifier_forward.7} parent=51 // pred_region
        %s570 = smul.u32 8, %s21
        %p571 = scmp.lt.s32.totalorder %s570, 15
        %s572 = scalar_select %p571, %s570, 15
        %s573 = smul.addr %s572, 8
        %s574 = scalar_lea.vmem %s4, %s573
      $region56: #{classifier_forward.7} parent=51 // pred_fallthru
        _
    $region52: #{classifier_forward.7} parent=5 // pred_fallthru
      _
  $region6: #{classifier_forward.7} parent=0 // loop_footer
    %s14 = sadd.s32 1, %s10
  $region7: #{classifier_forward.7} parent=0 // loop_footer_branch
    %9 = sbr.rel target = $region3
  $region8: #{classifier_forward.7} parent=0 // loop_exit
    _

// kernel: classifier_forward.6
$region0: #{classifier_forward.6}
  #allocation0 [shape = 'u32[]', space=smem, size = 0x4, offset = 0x4, fixed_abs, tag = 'smem constant byte address 0x4 - core index']
  #allocation1 [shape = 'u32[144,128]{1,0:T(1,128)}', space=vmem, size = 0x12000, scoped, tag = 'internal scratch']
  %s0 = inlined_call_operand.vmem [shape: bf16[128,128], index: 0, kind: input, shape index: {}]
  %s1 = inlined_call_operand.vmem [shape: bf16[128,128], index: 1, kind: input, shape index: {}]
  %s2 = inlined_call_operand.vmem [shape: bf16[128,128], index: 2, kind: input, shape index: {}]
  %s3 = inlined_call_operand.vmem [shape: bf16[128,128], index: 3, kind: input, shape index: {}]
  %s4 = inlined_call_operand.vmem [shape: bf16[128,128], index: 4, kind: input, shape index: {}]
  %s5 = inlined_call_operand.vmem [shape: f32[1,128], index: 5, kind: input, shape index: {}]
  %s6 = inlined_call_operand.vmem [shape: f32[1,128], index: 6, kind: input, shape index: {}]
  %s7 = inlined_call_operand.vmem [shape: bf16[128,128], index: 7, kind: output, shape index: {0}]
  %s8 = inlined_call_operand.vmem [shape: f32[128,128], index: 8, kind: output, shape index: {1}]
  %9 = xla_tuple %s7, %s8
  %s10 = sld [smem:[#allocation0]]
  $region69: #{classifier_forward.6} parent=0
    _
  %s12 = ssub.s32 1, %s10
  %s13 = scalar_select 0, %s12, %s10
  loop: start=0, step=1, limit=4
  $region2: #{classifier_forward.6} parent=0 // loop_pre_header
    _
  $region3: #{classifier_forward.6} parent=0 // loop_header
    %s15 = sphi 0, %s19
    %p16 = scmp.ge.s32.totalorder %s15, 4
    %s25 = sphi 0, %s27
    %s28 = sphi 0, %s25
    %s29 = sphi 0, %s28
    %s45 = sphi 0, %s29
    %s51 = sphi 0, %s53
    %s54 = sphi 0, %s51
    %s55 = sphi 0, %s54
    %s71 = sphi 0, %s55
    %s75 = sphi 0, %s75
    %s77 = sphi 0, %s75
    %s78 = sphi 0, %s77
    %s92 = sphi 0, %s78
    %s96 = sphi 0, %s96
    %s98 = sphi 0, %s96
    %s99 = sphi 0, %s98
    %s113 = sphi 0, %s99
    %s117 = sphi 0, %s117
    %s119 = sphi 0, %s117
    %s120 = sphi 0, %s119
    %s134 = sphi 0, %s120
    %s138 = sphi 0, %s138
    %s140 = sphi 0, %s138
    %s141 = sphi 0, %s140
    %s155 = sphi 0, %s141
    %s159 = sphi 0, %s159
    %s161 = sphi 0, %s159
    %s162 = sphi 0, %s161
    %s176 = sphi 0, %s162
    %s182 = sphi 0, %s184
    %s185 = sphi 0, %s182
    %s186 = sphi 0, %s185
    %s202 = sphi 0, %s186
    %s208 = sphi 0, %s210
    %s211 = sphi 0, %s208
    %s212 = sphi 0, %s211
    %s228 = sphi 0, %s212
  $region4: #{classifier_forward.6} parent=0 // loop_header_branch
    %18 = sbr.rel (%p16) target = $region8
  $region5: #{classifier_forward.6} parent=0 // loop_body
    %s20 = ssub.s32 %s15, 1
    %s21 = ssub.s32 %s15, 2
    %s22 = sadd.s32 %s15, 1
    %s23 = ssub.s32 %s15, %s22
    %p24 = scmp.eq.s32.totalorder %s23, 0
    %s26 = sadd.s32 %s25, 1
    %s27 = scalar_select %p24, %s25, %s26
    %p30 = pneg %p24
    %p31 = scmp.eq.s32.totalorder %s15, 1
    %p32 = por %p30, %p31
    %p33 = scmp.ne.s32.totalorder %s25, %s28
    %p34 = scmp.eq.s32.totalorder %s15, 0
    %p35 = por %p33, %p34
    %p36 = scmp.ne.s32.totalorder %s25, %s28
    %p37 = scmp.eq.s32.totalorder %s20, 1
    %p38 = por %p36, %p37
    %p39 = scmp.ne.s32.totalorder %s28, %s29
    %p40 = scmp.eq.s32.totalorder %s20, 0
    %p41 = por %p39, %p40
    %p42 = scmp.ne.s32.totalorder %s28, %s29
    %p43 = scmp.eq.s32.totalorder %s21, 1
    %p44 = por %p42, %p43
    %p46 = scmp.ne.s32.totalorder %s29, %s45
    %p47 = scmp.eq.s32.totalorder %s21, 0
    %p48 = por %p46, %p47
    %s49 = ssub.s32 %s15, %s22
    %p50 = scmp.eq.s32.totalorder %s49, 0
    %s52 = sadd.s32 %s51, 1
    %s53 = scalar_select %p50, %s51, %s52
    %p56 = pneg %p50
    %p57 = scmp.eq.s32.totalorder %s15, 1
    %p58 = por %p56, %p57
    %p59 = scmp.ne.s32.totalorder %s51, %s54
    %p60 = scmp.eq.s32.totalorder %s15, 0
    %p61 = por %p59, %p60
    %p62 = scmp.ne.s32.totalorder %s51, %s54
    %p63 = scmp.eq.s32.totalorder %s20, 1
    %p64 = por %p62, %p63
    %p65 = scmp.ne.s32.totalorder %s54, %s55
    %p66 = scmp.eq.s32.totalorder %s20, 0
    %p67 = por %p65, %p66
    %p68 = scmp.ne.s32.totalorder %s54, %s55
    %p69 = scmp.eq.s32.totalorder %s21, 1
    %p70 = por %p68, %p69
    %p72 = scmp.ne.s32.totalorder %s55, %s71
    %p73 = scmp.eq.s32.totalorder %s21, 0
    %p74 = por %p72, %p73
    %s76 = sadd.s32 %s75, 1
    %p79 = scmp.eq.s32.totalorder %s15, 1
    %p80 = scmp.ne.s32.totalorder %s75, %s77
    %p81 = scmp.eq.s32.totalorder %s15, 0
    %p82 = por %p80, %p81
    %p83 = scmp.ne.s32.totalorder %s75, %s77
    %p84 = scmp.eq.s32.totalorder %s20, 1
    %p85 = por %p83, %p84
    %p86 = scmp.ne.s32.totalorder %s77, %s78
    %p87 = scmp.eq.s32.totalorder %s20, 0
    %p88 = por %p86, %p87
    %p89 = scmp.ne.s32.totalorder %s77, %s78
    %p90 = scmp.eq.s32.totalorder %s21, 1
    %p91 = por %p89, %p90
    %p93 = scmp.ne.s32.totalorder %s78, %s92
    %p94 = scmp.eq.s32.totalorder %s21, 0
    %p95 = por %p93, %p94
    %s97 = sadd.s32 %s96, 1
    %p100 = scmp.eq.s32.totalorder %s15, 1
    %p101 = scmp.ne.s32.totalorder %s96, %s98
    %p102 = scmp.eq.s32.totalorder %s15, 0
    %p103 = por %p101, %p102
    %p104 = scmp.ne.s32.totalorder %s96, %s98
    %p105 = scmp.eq.s32.totalorder %s20, 1
    %p106 = por %p104, %p105
    %p107 = scmp.ne.s32.totalorder %s98, %s99
    %p108 = scmp.eq.s32.totalorder %s20, 0
    %p109 = por %p107, %p108
    %p110 = scmp.ne.s32.totalorder %s98, %s99
    %p111 = scmp.eq.s32.totalorder %s21, 1
    %p112 = por %p110, %p111
    %p114 = scmp.ne.s32.totalorder %s99, %s113
    %p115 = scmp.eq.s32.totalorder %s21, 0
    %p116 = por %p114, %p115
    %s118 = sadd.s32 %s117, 1
    %p121 = scmp.eq.s32.totalorder %s15, 1
    %p122 = scmp.ne.s32.totalorder %s117, %s119
    %p123 = scmp.eq.s32.totalorder %s15, 0
    %p124 = por %p122, %p123
    %p125 = scmp.ne.s32.totalorder %s117, %s119
    %p126 = scmp.eq.s32.totalorder %s20, 1
    %p127 = por %p125, %p126
    %p128 = scmp.ne.s32.totalorder %s119, %s120
    %p129 = scmp.eq.s32.totalorder %s20, 0
    %p130 = por %p128, %p129
    %p131 = scmp.ne.s32.totalorder %s119, %s120
    %p132 = scmp.eq.s32.totalorder %s21, 1
    %p133 = por %p131, %p132
    %p135 = scmp.ne.s32.totalorder %s120, %s134
    %p136 = scmp.eq.s32.totalorder %s21, 0
    %p137 = por %p135, %p136
    %s139 = sadd.s32 %s138, 1
    %p142 = scmp.eq.s32.totalorder %s15, 1
    %p143 = scmp.ne.s32.totalorder %s138, %s140
    %p144 = scmp.eq.s32.totalorder %s15, 0
    %p145 = por %p143, %p144
    %p146 = scmp.ne.s32.totalorder %s138, %s140
    %p147 = scmp.eq.s32.totalorder %s20, 1
    %p148 = por %p146, %p147
    %p149 = scmp.ne.s32.totalorder %s140, %s141
    %p150 = scmp.eq.s32.totalorder %s20, 0
    %p151 = por %p149, %p150
    %p152 = scmp.ne.s32.totalorder %s140, %s141
    %p153 = scmp.eq.s32.totalorder %s21, 1
    %p154 = por %p152, %p153
    %p156 = scmp.ne.s32.totalorder %s141, %s155
    %p157 = scmp.eq.s32.totalorder %s21, 0
    %p158 = por %p156, %p157
    %s160 = sadd.s32 %s159, 1
    %p163 = scmp.eq.s32.totalorder %s15, 1
    %p164 = scmp.ne.s32.totalorder %s159, %s161
    %p165 = scmp.eq.s32.totalorder %s15, 0
    %p166 = por %p164, %p165
    %p167 = scmp.ne.s32.totalorder %s159, %s161
    %p168 = scmp.eq.s32.totalorder %s20, 1
    %p169 = por %p167, %p168
    %p170 = scmp.ne.s32.totalorder %s161, %s162
    %p171 = scmp.eq.s32.totalorder %s20, 0
    %p172 = por %p170, %p171
    %p173 = scmp.ne.s32.totalorder %s161, %s162
    %p174 = scmp.eq.s32.totalorder %s21, 1
    %p175 = por %p173, %p174
    %p177 = scmp.ne.s32.totalorder %s162, %s176
    %p178 = scmp.eq.s32.totalorder %s21, 0
    %p179 = por %p177, %p178
    %s180 = ssub.s32 %s15, %s22
    %p181 = scmp.eq.s32.totalorder %s180, 0
    %s183 = sadd.s32 %s182, 1
    %s184 = scalar_select %p181, %s182, %s183
    %p187 = pneg %p181
    %p188 = scmp.eq.s32.totalorder %s15, 1
    %p189 = por %p187, %p188
    %p190 = scmp.ne.s32.totalorder %s182, %s185
    %p191 = scmp.eq.s32.totalorder %s15, 0
    %p192 = por %p190, %p191
    %p193 = scmp.ne.s32.totalorder %s182, %s185
    %p194 = scmp.eq.s32.totalorder %s20, 1
    %p195 = por %p193, %p194
    %p196 = scmp.ne.s32.totalorder %s185, %s186
    %p197 = scmp.eq.s32.totalorder %s20, 0
    %p198 = por %p196, %p197
    %p199 = scmp.ne.s32.totalorder %s185, %s186
    %p200 = scmp.eq.s32.totalorder %s21, 1
    %p201 = por %p199, %p200
    %p203 = scmp.ne.s32.totalorder %s186, %s202
    %p204 = scmp.eq.s32.totalorder %s21, 0
    %p205 = por %p203, %p204
    %s206 = ssub.s32 %s15, %s22
    %p207 = scmp.eq.s32.totalorder %s206, 0
    %s209 = sadd.s32 %s208, 1
    %s210 = scalar_select %p207, %s208, %s209
    %p213 = pneg %p207
    %p214 = scmp.eq.s32.totalorder %s15, 1
    %p215 = por %p213, %p214
    %p216 = scmp.ne.s32.totalorder %s208, %s211
    %p217 = scmp.eq.s32.totalorder %s15, 0
    %p218 = por %p216, %p217
    %p219 = scmp.ne.s32.totalorder %s208, %s211
    %p220 = scmp.eq.s32.totalorder %s20, 1
    %p221 = por %p219, %p220
    %p222 = scmp.ne.s32.totalorder %s211, %s212
    %p223 = scmp.eq.s32.totalorder %s20, 0
    %p224 = por %p222, %p223
    %p225 = scmp.ne.s32.totalorder %s211, %s212
    %p226 = scmp.eq.s32.totalorder %s21, 1
    %p227 = por %p225, %p226
    %p229 = scmp.ne.s32.totalorder %s212, %s228
    %p230 = scmp.eq.s32.totalorder %s21, 0
    %p231 = por %p229, %p230
    %p232 = scmp.le.s32.totalorder 1, %s15
    %p233 = scmp.lt.s32.totalorder %s15, 3
    %p234 = pnand %p232, %p233
    %p235 = pneg %p234
    // Predicated region
    $region9: #{classifier_forward.6} parent=5 // pred_check
      _
    $region10: #{classifier_forward.6} parent=5 // pred_check_branch
      %237 = sbr.rel (%p234) target = $region12
    $region11: #{classifier_forward.6} parent=5 // pred_region
      %s238 = ssub.s32 %s15, 1
      // Predicated region
      $region13: #{classifier_forward.6} parent=11 // pred_check
        %p239 = pneg %p88
      $region14: #{classifier_forward.6} parent=11 // pred_check_branch
        %241 = sbr.rel (%p239) target = $region16
      $region15: #{classifier_forward.6} parent=11 // pred_region
        _
      $region16: #{classifier_forward.6} parent=11 // pred_fallthru
        _
      // Predicated region
      $region17: #{classifier_forward.6} parent=11 // pred_check
        %p242 = pneg %p109
      $region18: #{classifier_forward.6} parent=11 // pred_check_branch
        %244 = sbr.rel (%p242) target = $region20
      $region19: #{classifier_forward.6} parent=11 // pred_region
        _
      $region20: #{classifier_forward.6} parent=11 // pred_fallthru
        _
      // Predicated region
      $region21: #{classifier_forward.6} parent=11 // pred_check
        %p245 = pneg %p130
      $region22: #{classifier_forward.6} parent=11 // pred_check_branch
        %247 = sbr.rel (%p245) target = $region24
      $region23: #{classifier_forward.6} parent=11 // pred_region
        _
      $region24: #{classifier_forward.6} parent=11 // pred_fallthru
        _
      // Predicated region
      $region25: #{classifier_forward.6} parent=11 // pred_check
        %p248 = pneg %p151
      $region26: #{classifier_forward.6} parent=11 // pred_check_branch
        %250 = sbr.rel (%p248) target = $region28
      $region27: #{classifier_forward.6} parent=11 // pred_region
        _
      $region28: #{classifier_forward.6} parent=11 // pred_fallthru
        _
      // Predicated region
      $region29: #{classifier_forward.6} parent=11 // pred_check
        %p251 = pneg %p172
      $region30: #{classifier_forward.6} parent=11 // pred_check_branch
        %253 = sbr.rel (%p251) target = $region32
      $region31: #{classifier_forward.6} parent=11 // pred_region
        _
      $region32: #{classifier_forward.6} parent=11 // pred_fallthru
        _
    $region12: #{classifier_forward.6} parent=5 // pred_fallthru
      _
    %p254 = scmp.lt.s32.totalorder %s15, 2
    // Predicated region
    $region33: #{classifier_forward.6} parent=5 // pred_check
      %p255 = pneg %p254
    $region34: #{classifier_forward.6} parent=5 // pred_check_branch
      %257 = sbr.rel (%p255) target = $region36
    $region35: #{classifier_forward.6} parent=5 // pred_region
      // Predicated region
      $region37: #{classifier_forward.6} parent=35 // pred_check
        %p258 = pneg %p35
      $region38: #{classifier_forward.6} parent=35 // pred_check_branch
        %260 = sbr.rel (%p258) target = $region40
      $region39: #{classifier_forward.6} parent=35 // pred_region
        %s261 = smul.u32 8, %s15
        %p262 = scmp.lt.s32.totalorder %s261, 15
        %s263 = scalar_select %p262, %s261, 15
        %s264 = smul.addr %s263, 4
        %s265 = scalar_lea.vmem %s0, %s264
        %s266 = smul.u32 8, %s15
      $region40: #{classifier_forward.6} parent=35 // pred_fallthru
        _
      // Predicated region
      $region41: #{classifier_forward.6} parent=35 // pred_check
        %p267 = pneg %p61
      $region42: #{classifier_forward.6} parent=35 // pred_check_branch
        %269 = sbr.rel (%p267) target = $region44
      $region43: #{classifier_forward.6} parent=35 // pred_region
        %s270 = smul.u32 8, %s15
        %p271 = scmp.lt.s32.totalorder %s270, 15
        %s272 = scalar_select %p271, %s270, 15
        %s273 = smul.addr %s272, 4
        %s274 = scalar_lea.vmem %s1, %s273
        %s275 = smul.u32 8, %s15
      $region44: #{classifier_forward.6} parent=35 // pred_fallthru
        _
    $region36: #{classifier_forward.6} parent=5 // pred_fallthru
      _
    %p276 = scmp.le.s32.totalorder 1, %s15
    %p277 = scmp.lt.s32.totalorder %s15, 3
    %p278 = pnand %p276, %p277
    %p279 = pneg %p278
    // Predicated region
    $region45: #{classifier_forward.6} parent=5 // pred_check
      _
    $region46: #{classifier_forward.6} parent=5 // pred_check_branch
      %281 = sbr.rel (%p278) target = $region48
    $region47: #{classifier_forward.6} parent=5 // pred_region
      %s282 = ssub.s32 %s15, 1
      %s283 = smul.u32 8, %s20
      %p284 = scmp.lt.s32.totalorder %s283, 15
      %s285 = scalar_select %p284, %s283, 15
      %s286 = smul.addr %s285, 4
      %s287 = scalar_lea.vmem %s0, %s286
      %p288 = pneg %p41
      %p289 = pneg %p38
      %s290 = smul.u32 8, %s20
      %p291 = scmp.lt.s32.totalorder %s290, 15
      %s292 = scalar_select %p291, %s290, 15
      %s293 = smul.addr %s292, 4
      %s294 = scalar_lea.vmem %s1, %s293
      %p295 = pneg %p67
      %p296 = pneg %p64
      %p297 = pneg %p88
      %p298 = pneg %p85
      %p299 = pneg %p109
      %p300 = pneg %p106
      %p301 = pneg %p130
      %p302 = pneg %p127
      %p303 = pneg %p151
      %p304 = pneg %p148
      %p305 = pneg %p172
      %p306 = pneg %p169
      %p307 = pneg %p198
      %p308 = pneg %p195
      %s309 = smul.u32 8, %s20
      %p310 = scmp.lt.s32.totalorder %s309, 15
      %s311 = scalar_select %p310, %s309, 15
      %s312 = smul.addr %s311, 4
      %s313 = scalar_lea.vmem %s7, %s312
      %p314 = pneg %p224
      %p315 = pneg %p221
      %s316 = smul.u32 8, %s20
      %p317 = scmp.lt.s32.totalorder %s316, 15
      %s318 = scalar_select %p317, %s316, 15
      %s319 = smul.addr %s318, 8
      %s320 = scalar_lea.vmem %s8, %s319
      %s321 = smul.u32 8, %s20
      %p322 = scmp.lt.s32.totalorder %s321, 15
      %s323 = scalar_select %p322, %s321, 15
      %s324 = smul.addr %s323, 4
      %s325 = scalar_lea.vmem %s0, %s324
      %s326 = smul.u32 8, %s20
      %s327 = smul.u32 8, %s20
      %p328 = scmp.lt.s32.totalorder %s327, 15
      %s329 = scalar_select %p328, %s327, 15
      %s330 = smul.addr %s329, 4
      %s331 = scalar_lea.vmem %s1, %s330
      %s332 = smul.u32 8, %s20
      %s333 = smul.u32 8, %s20
      %p334 = scmp.lt.s32.totalorder %s333, 15
      %s335 = scalar_select %p334, %s333, 15
      %s336 = smul.addr %s335, 4
      %s337 = scalar_lea.vmem %s7, %s336
      %s338 = smul.u32 8, %s20
      %s339 = smul.u32 8, %s20
      %p340 = scmp.lt.s32.totalorder %s339, 15
      %s341 = scalar_select %p340, %s339, 15
      %s342 = smul.addr %s341, 8
      %s343 = scalar_lea.vmem %s8, %s342
      %s344 = smul.u32 8, %s20
      %v346 = vld [vmem:[%s325] sm:$0xf]
      %v347 = vld [vmem:[%s325 + $0x4] sm:$0xf]
      %v348 = vld [vmem:[%s325 + $0x8] sm:$0xf]
      %v349 = vld [vmem:[%s325 + $0xc] sm:$0xf]
      %v350 = vld [vmem:[%s325 + $0x10] sm:$0xf]
      %v351 = vld [vmem:[%s325 + $0x14] sm:$0xf]
      %v352 = vld [vmem:[%s325 + $0x18] sm:$0xf]
      %v353 = vld [vmem:[%s325 + $0x1c] sm:$0xf]
      %v354 = vld [vmem:[%s2] sm:$0xf]
      %v355 = vld [vmem:[%s2 + $0x4] sm:$0xf]
      %v356 = vld [vmem:[%s2 + $0x8] sm:$0xf]
      %v357 = vld [vmem:[%s2 + $0xc] sm:$0xf]
      %v358 = vld [vmem:[%s2 + $0x10] sm:$0xf]
      %v359 = vld [vmem:[%s2 + $0x14] sm:$0xf]
      %v360 = vld [vmem:[%s2 + $0x18] sm:$0xf]
      %v361 = vld [vmem:[%s2 + $0x1c] sm:$0xf]
      %v362 = vld [vmem:[%s2 + $0x20] sm:$0xf]
      %v363 = vld [vmem:[%s2 + $0x24] sm:$0xf]
      %v364 = vld [vmem:[%s2 + $0x28] sm:$0xf]
      %v365 = vld [vmem:[%s2 + $0x2c] sm:$0xf]
      %v366 = vld [vmem:[%s2 + $0x30] sm:$0xf]
      %v367 = vld [vmem:[%s2 + $0x34] sm:$0xf]
      %v368 = vld [vmem:[%s2 + $0x38] sm:$0xf]
      %v369 = vld [vmem:[%s2 + $0x3c] sm:$0xf]
      %v378 = vunpack.c.l.b16 %v346
      %v379 = vunpack.c.l.b16 %v347
      %v380 = vunpack.c.l.b16 %v348
      %v381 = vunpack.c.l.b16 %v349
      %v382 = vunpack.c.l.b16 %v350
      %v383 = vunpack.c.l.b16 %v351
      %v384 = vunpack.c.l.b16 %v352
      %v385 = vunpack.c.l.b16 %v353
      %v386 = vpack.c.b16 %v379, %v378
      %v387 = vpack.c.b16 %v381, %v380
      %v388 = vpack.c.b16 %v383, %v382
      %v389 = vpack.c.b16 %v385, %v384
      %v410 = vunpack.c.l.b16 %v354
      %v411 = vunpack.c.l.b16 %v355
      %v412 = vunpack.c.l.b16 %v356
      %v413 = vunpack.c.l.b16 %v357
      %v414 = vunpack.c.l.b16 %v358
      %v415 = vunpack.c.l.b16 %v359
      %v416 = vunpack.c.l.b16 %v360
      %v417 = vunpack.c.l.b16 %v361
      %v418 = vunpack.c.l.b16 %v362
      %v419 = vunpack.c.l.b16 %v363
      %v420 = vunpack.c.l.b16 %v364
      %v421 = vunpack.c.l.b16 %v365
      %v422 = vunpack.c.l.b16 %v366
      %v423 = vunpack.c.l.b16 %v367
      %v424 = vunpack.c.l.b16 %v368
      %v425 = vunpack.c.l.b16 %v369
      %v426 = vpack.c.b16 %v411, %v410
      %v427 = vpack.c.b16 %v413, %v412
      %v428 = vpack.c.b16 %v415, %v414
      %v429 = vpack.c.b16 %v417, %v416
      %v430 = vpack.c.b16 %v419, %v418
      %v431 = vpack.c.b16 %v421, %v420
      %v432 = vpack.c.b16 %v423, %v422
      %v433 = vpack.c.b16 %v425, %v424
      %442 = vmatprep.subr.bf16.mxu0 0
      %443 = vmatpush1.bf16.msra.mxu0 %v426
      %444 = vmatprep.subr.bf16.mxu0 0
      %445 = vmatpush1.bf16.msra.mxu0 %v427
      %446 = vmatprep.subr.bf16.mxu0 0
      %447 = vmatpush1.bf16.msra.mxu0 %v428
      %448 = vmatprep.subr.bf16.mxu0 0
      %449 = vmatpush1.bf16.msra.mxu0 %v429
      %450 = vmatprep.subr.bf16.mxu0 0
      %451 = vmatpush1.bf16.msra.mxu0 %v430
      %452 = vmatprep.subr.bf16.mxu0 0
      %453 = vmatpush1.bf16.msra.mxu0 %v431
      %454 = vmatprep.subr.bf16.mxu0 0
      %455 = vmatpush1.bf16.msra.mxu0 %v432
      %456 = vmatprep.subr.bf16.mxu0 0
      %457 = vmatpush1.bf16.msra.mxu0 %v433
      %458 = vmatprep.subr.bf16.mxu0 0
      %459 = vmatpush1.bf16.msra.mxu0 0
      %460 = vmatprep.subr.bf16.mxu0 0
      %461 = vmatpush1.bf16.msra.mxu0 0
      %462 = vmatprep.subr.bf16.mxu0 0
      %463 = vmatpush1.bf16.msra.mxu0 0
      %464 = vmatprep.subr.bf16.mxu0 0
      %465 = vmatpush1.bf16.msra.mxu0 0
      %466 = vmatprep.subr.bf16.mxu0 0
      %467 = vmatpush1.bf16.msra.mxu0 0
      %468 = vmatprep.subr.bf16.mxu0 0
      %469 = vmatpush1.bf16.msra.mxu0 0
      %470 = vmatprep.subr.bf16.mxu0 0
      %471 = vmatpush1.bf16.msra.mxu0 0
      %472 = vmatprep.subr.bf16.mxu0 0
      %473 = vmatpush1.bf16.msra.mxu0 0
      %474 = vmatprep.mubr.bf16.mxu0 0
      %475 = vmatmul.mubr.bf16.gmra.mrb[0].mxu0 %v386
      %v476 = vpop.f32.mrb[0].mxu0
      %v477 = vadd.f32 0.0, %v476
      %v478 = vpop.f32.mrb[0].mxu0
      %v479 = vpop.f32.mrb[0].mxu0
      %v480 = vadd.f32 0.0, %v479
      %v481 = vpop.f32.mrb[0].mxu0
      %482 = vmatprep.mubr.bf16.mxu0 0
      %483 = vmatmul.mubr.bf16.gmra.mrb[0].mxu0 %v387
      %v484 = vpop.f32.mrb[0].mxu0
      %v485 = vadd.f32 0.0, %v484
      %v486 = vpop.f32.mrb[0].mxu0
      %v487 = vpop.f32.mrb[0].mxu0
      %v488 = vadd.f32 0.0, %v487
      %v489 = vpop.f32.mrb[0].mxu0
      %490 = vmatprep.mubr.bf16.mxu0 0
      %491 = vmatmul.mubr.bf16.gmra.mrb[0].mxu0 %v388
      %v492 = vpop.f32.mrb[0].mxu0
      %v493 = vadd.f32 0.0, %v492
      %v494 = vpop.f32.mrb[0].mxu0
      %v495 = vpop.f32.mrb[0].mxu0
      %v496 = vadd.f32 0.0, %v495
      %v497 = vpop.f32.mrb[0].mxu0
      %498 = vmatprep.mubr.bf16.mxu0 0
      %499 = vmatmul.mubr.bf16.gmra.mrb[0].mxu0 %v389
      %v500 = vpop.f32.mrb[0].mxu0
      %v501 = vadd.f32 0.0, %v500
      %v502 = vpop.f32.mrb[0].mxu0
      %v503 = vpop.f32.mrb[0].mxu0
      %v504 = vadd.f32 0.0, %v503
      %v505 = vpop.f32.mrb[0].mxu0
      %506 = vdwg.mxu0
      %v507 = vpack.c.bf16 %v480, %v477
      %v508 = vpack.c.bf16 %v488, %v485
      %v509 = vpack.c.bf16 %v496, %v493
      %v510 = vpack.c.bf16 %v504, %v501
      %v515 = vunpack.c.l.b16 %v507
      %v516 = vunpack.c.h.b16 %v507
      %v517 = vunpack.c.l.b16 %v508
      %v518 = vunpack.c.h.b16 %v508
      %v519 = vunpack.c.l.b16 %v509
      %v520 = vunpack.c.h.b16 %v509
      %v521 = vunpack.c.l.b16 %v510
      %v522 = vunpack.c.h.b16 %v510
      %v523 = vpack.c.b16 %v515, %v515
      %v524 = vpack.c.b16 %v516, %v516
      %v525 = vpack.c.b16 %v517, %v517
      %v526 = vpack.c.b16 %v518, %v518
      %v527 = vpack.c.b16 %v519, %v519
      %v528 = vpack.c.b16 %v520, %v520
      %v529 = vpack.c.b16 %v521, %v521
      %v530 = vpack.c.b16 %v522, %v522
      %539 = vst [vmem:[%s337] sm:$0xf] %v523
      %540 = vst [vmem:[%s337 + $0x4] sm:$0xf] %v524
      %541 = vst [vmem:[%s337 + $0x8] sm:$0xf] %v525
      %542 = vst [vmem:[%s337 + $0xc] sm:$0xf] %v526
      %543 = vst [vmem:[%s337 + $0x10] sm:$0xf] %v527
      %544 = vst [vmem:[%s337 + $0x14] sm:$0xf] %v528
      %545 = vst [vmem:[%s337 + $0x18] sm:$0xf] %v529
      %546 = vst [vmem:[%s337 + $0x1c] sm:$0xf] %v530
      %v547 = vld [vmem:[%s331] sm:$0xf]
      %v548 = vld [vmem:[%s331 + $0x4] sm:$0xf]
      %v549 = vld [vmem:[%s331 + $0x8] sm:$0xf]
      %v550 = vld [vmem:[%s331 + $0xc] sm:$0xf]
      %v551 = vld [vmem:[%s331 + $0x10] sm:$0xf]
      %v552 = vld [vmem:[%s331 + $0x14] sm:$0xf]
      %v553 = vld [vmem:[%s331 + $0x18] sm:$0xf]
      %v554 = vld [vmem:[%s331 + $0x1c] sm:$0xf]
      %v555 = vld [vmem:[%s4] sm:$0xf]
      %v556 = vld [vmem:[%s4 + $0x4] sm:$0xf]
      %v557 = vld [vmem:[%s4 + $0x8] sm:$0xf]
      %v558 = vld [vmem:[%s4 + $0xc] sm:$0xf]
      %v559 = vld [vmem:[%s4 + $0x10] sm:$0xf]
      %v560 = vld [vmem:[%s4 + $0x14] sm:$0xf]
      %v561 = vld [vmem:[%s4 + $0x18] sm:$0xf]
      %v562 = vld [vmem:[%s4 + $0x1c] sm:$0xf]
      %v563 = vld [vmem:[%s4 + $0x20] sm:$0xf]
      %v564 = vld [vmem:[%s4 + $0x24] sm:$0xf]
      %v565 = vld [vmem:[%s4 + $0x28] sm:$0xf]
      %v566 = vld [vmem:[%s4 + $0x2c] sm:$0xf]
      %v567 = vld [vmem:[%s4 + $0x30] sm:$0xf]
      %v568 = vld [vmem:[%s4 + $0x34] sm:$0xf]
      %v569 = vld [vmem:[%s4 + $0x38] sm:$0xf]
      %v570 = vld [vmem:[%s4 + $0x3c] sm:$0xf]
      %v571 = vld [vmem:[%s6] sm:$0x1]
      %v573 = vlaneseq
      %v574 = vshrl.u32 %v573, 7
      %v575 = vsub.s32 0, %v574
      %v576 = vrot.slane %v571, %v575
      %v586 = vunpack.c.l.b16 %v547
      %v587 = vunpack.c.l.b16 %v548
      %v588 = vunpack.c.l.b16 %v549
      %v589 = vunpack.c.l.b16 %v550
      %v590 = vunpack.c.l.b16 %v551
      %v591 = vunpack.c.l.b16 %v552
      %v592 = vunpack.c.l.b16 %v553
      %v593 = vunpack.c.l.b16 %v554
      %v594 = vpack.c.b16 %v587, %v586
      %v595 = vpack.c.b16 %v589, %v588
      %v596 = vpack.c.b16 %v591, %v590
      %v597 = vpack.c.b16 %v593, %v592
      %v618 = vunpack.c.l.b16 %v555
      %v619 = vunpack.c.l.b16 %v556
      %v620 = vunpack.c.l.b16 %v557
      %v621 = vunpack.c.l.b16 %v558
      %v622 = vunpack.c.l.b16 %v559
      %v623 = vunpack.c.l.b16 %v560
      %v624 = vunpack.c.l.b16 %v561
      %v625 = vunpack.c.l.b16 %v562
      %v626 = vunpack.c.l.b16 %v563
      %v627 = vunpack.c.l.b16 %v564
      %v628 = vunpack.c.l.b16 %v565
      %v629 = vunpack.c.l.b16 %v566
      %v630 = vunpack.c.l.b16 %v567
      %v631 = vunpack.c.l.b16 %v568
      %v632 = vunpack.c.l.b16 %v569
      %v633 = vunpack.c.l.b16 %v570
      %v634 = vpack.c.b16 %v619, %v618
      %v635 = vpack.c.b16 %v621, %v620
      %v636 = vpack.c.b16 %v623, %v622
      %v637 = vpack.c.b16 %v625, %v624
      %v638 = vpack.c.b16 %v627, %v626
      %v639 = vpack.c.b16 %v629, %v628
      %v640 = vpack.c.b16 %v631, %v630
      %v641 = vpack.c.b16 %v633, %v632
      %650 = vmatprep.subr.bf16.mxu0 0
      %651 = vmatpush1.bf16.msra.mxu0 %v634
      %652 = vmatprep.subr.bf16.mxu0 0
      %653 = vmatpush1.bf16.msra.mxu0 %v635
      %654 = vmatprep.subr.bf16.mxu0 0
      %655 = vmatpush1.bf16.msra.mxu0 %v636
      %656 = vmatprep.subr.bf16.mxu0 0
      %657 = vmatpush1.bf16.msra.mxu0 %v637
      %658 = vmatprep.subr.bf16.mxu0 0
      %659 = vmatpush1.bf16.msra.mxu0 %v638
      %660 = vmatprep.subr.bf16.mxu0 0
      %661 = vmatpush1.bf16.msra.mxu0 %v639
      %662 = vmatprep.subr.bf16.mxu0 0
      %663 = vmatpush1.bf16.msra.mxu0 %v640
      %664 = vmatprep.subr.bf16.mxu0 0
      %665 = vmatpush1.bf16.msra.mxu0 %v641
      %666 = vmatprep.subr.bf16.mxu0 0
      %667 = vmatpush1.bf16.msra.mxu0 0
      %668 = vmatprep.subr.bf16.mxu0 0
      %669 = vmatpush1.bf16.msra.mxu0 0
      %670 = vmatprep.subr.bf16.mxu0 0
      %671 = vmatpush1.bf16.msra.mxu0 0
      %672 = vmatprep.subr.bf16.mxu0 0
      %673 = vmatpush1.bf16.msra.mxu0 0
      %674 = vmatprep.subr.bf16.mxu0 0
      %675 = vmatpush1.bf16.msra.mxu0 0
      %676 = vmatprep.subr.bf16.mxu0 0
      %677 = vmatpush1.bf16.msra.mxu0 0
      %678 = vmatprep.subr.bf16.mxu0 0
      %679 = vmatpush1.bf16.msra.mxu0 0
      %680 = vmatprep.subr.bf16.mxu0 0
      %681 = vmatpush1.bf16.msra.mxu0 0
      %682 = vmatprep.mubr.bf16.mxu0 0
      %683 = vmatmul.mubr.bf16.gmra.mrb[0].mxu0 %v594
      %v684 = vpop.f32.mrb[0].mxu0
      %v685 = vadd.f32 %v576, %v684
      %v686 = vpop.f32.mrb[0].mxu0
      %v687 = vpop.f32.mrb[0].mxu0
      %v688 = vadd.f32 %v576, %v687
      %v689 = vpop.f32.mrb[0].mxu0
      %690 = vmatprep.mubr.bf16.mxu0 0
      %691 = vmatmul.mubr.bf16.gmra.mrb[0].mxu0 %v595
      %v692 = vpop.f32.mrb[0].mxu0
      %v693 = vadd.f32 %v576, %v692
      %v694 = vpop.f32.mrb[0].mxu0
      %v695 = vpop.f32.mrb[0].mxu0
      %v696 = vadd.f32 %v576, %v695
      %v697 = vpop.f32.mrb[0].mxu0
      %698 = vmatprep.mubr.bf16.mxu0 0
      %699 = vmatmul.mubr.bf16.gmra.mrb[0].mxu0 %v596
      %v700 = vpop.f32.mrb[0].mxu0
      %v701 = vadd.f32 %v576, %v700
      %v702 = vpop.f32.mrb[0].mxu0
      %v703 = vpop.f32.mrb[0].mxu0
      %v704 = vadd.f32 %v576, %v703
      %v705 = vpop.f32.mrb[0].mxu0
      %706 = vmatprep.mubr.bf16.mxu0 0
      %707 = vmatmul.mubr.bf16.gmra.mrb[0].mxu0 %v597
      %v708 = vpop.f32.mrb[0].mxu0
      %v709 = vadd.f32 %v576, %v708
      %v710 = vpop.f32.mrb[0].mxu0
      %v711 = vpop.f32.mrb[0].mxu0
      %v712 = vadd.f32 %v576, %v711
      %v713 = vpop.f32.mrb[0].mxu0
      %714 = vdwg.mxu0
      %v715 = vld [vmem:[%s325] sm:$0xf]
      %v716 = vld [vmem:[%s325 + $0x4] sm:$0xf]
      %v717 = vld [vmem:[%s325 + $0x8] sm:$0xf]
      %v718 = vld [vmem:[%s325 + $0xc] sm:$0xf]
      %v719 = vld [vmem:[%s325 + $0x10] sm:$0xf]
      %v720 = vld [vmem:[%s325 + $0x14] sm:$0xf]
      %v721 = vld [vmem:[%s325 + $0x18] sm:$0xf]
      %v722 = vld [vmem:[%s325 + $0x1c] sm:$0xf]
      %v723 = vld [vmem:[%s3] sm:$0xf]
      %v724 = vld [vmem:[%s3 + $0x4] sm:$0xf]
      %v725 = vld [vmem:[%s3 + $0x8] sm:$0xf]
      %v726 = vld [vmem:[%s3 + $0xc] sm:$0xf]
      %v727 = vld [vmem:[%s3 + $0x10] sm:$0xf]
      %v728 = vld [vmem:[%s3 + $0x14] sm:$0xf]
      %v729 = vld [vmem:[%s3 + $0x18] sm:$0xf]
      %v730 = vld [vmem:[%s3 + $0x1c] sm:$0xf]
      %v731 = vld [vmem:[%s3 + $0x20] sm:$0xf]
      %v732 = vld [vmem:[%s3 + $0x24] sm:$0xf]
      %v733 = vld [vmem:[%s3 + $0x28] sm:$0xf]
      %v734 = vld [vmem:[%s3 + $0x2c] sm:$0xf]
      %v735 = vld [vmem:[%s3 + $0x30] sm:$0xf]
      %v736 = vld [vmem:[%s3 + $0x34] sm:$0xf]
      %v737 = vld [vmem:[%s3 + $0x38] sm:$0xf]
      %v738 = vld [vmem:[%s3 + $0x3c] sm:$0xf]
      %v739 = vld [vmem:[%s5] sm:$0x1]
      %v741 = vlaneseq
      %v742 = vshrl.u32 %v741, 7
      %v743 = vsub.s32 0, %v742
      %v744 = vrot.slane %v739, %v743
      %v754 = vunpack.c.l.b16 %v715
      %v755 = vunpack.c.l.b16 %v716
      %v756 = vunpack.c.l.b16 %v717
      %v757 = vunpack.c.l.b16 %v718
      %v758 = vunpack.c.l.b16 %v719
      %v759 = vunpack.c.l.b16 %v720
      %v760 = vunpack.c.l.b16 %v721
      %v761 = vunpack.c.l.b16 %v722
      %v762 = vpack.c.b16 %v755, %v754
      %v763 = vpack.c.b16 %v757, %v756
      %v764 = vpack.c.b16 %v759, %v758
      %v765 = vpack.c.b16 %v761, %v760
      %v786 = vunpack.c.l.b16 %v723
      %v787 = vunpack.c.l.b16 %v724
      %v788 = vunpack.c.l.b16 %v725
      %v789 = vunpack.c.l.b16 %v726
      %v790 = vunpack.c.l.b16 %v727
      %v791 = vunpack.c.l.b16 %v728
      %v792 = vunpack.c.l.b16 %v729
      %v793 = vunpack.c.l.b16 %v730
      %v794 = vunpack.c.l.b16 %v731
      %v795 = vunpack.c.l.b16 %v732
      %v796 = vunpack.c.l.b16 %v733
      %v797 = vunpack.c.l.b16 %v734
      %v798 = vunpack.c.l.b16 %v735
      %v799 = vunpack.c.l.b16 %v736
      %v800 = vunpack.c.l.b16 %v737
      %v801 = vunpack.c.l.b16 %v738
      %v802 = vpack.c.b16 %v787, %v786
      %v803 = vpack.c.b16 %v789, %v788
      %v804 = vpack.c.b16 %v791, %v790
      %v805 = vpack.c.b16 %v793, %v792
      %v806 = vpack.c.b16 %v795, %v794
      %v807 = vpack.c.b16 %v797, %v796
      %v808 = vpack.c.b16 %v799, %v798
      %v809 = vpack.c.b16 %v801, %v800
      %818 = vmatprep.subr.bf16.mxu0 0
      %819 = vmatpush1.bf16.msra.mxu0 %v802
      %820 = vmatprep.subr.bf16.mxu0 0
      %821 = vmatpush1.bf16.msra.mxu0 %v803
      %822 = vmatprep.subr.bf16.mxu0 0
      %823 = vmatpush1.bf16.msra.mxu0 %v804
      %824 = vmatprep.subr.bf16.mxu0 0
      %825 = vmatpush1.bf16.msra.mxu0 %v805
      %826 = vmatprep.subr.bf16.mxu0 0
      %827 = vmatpush1.bf16.msra.mxu0 %v806
      %828 = vmatprep.subr.bf16.mxu0 0
      %829 = vmatpush1.bf16.msra.mxu0 %v807
      %830 = vmatprep.subr.bf16.mxu0 0
      %831 = vmatpush1.bf16.msra.mxu0 %v808
      %832 = vmatprep.subr.bf16.mxu0 0
      %833 = vmatpush1.bf16.msra.mxu0 %v809
      %834 = vmatprep.subr.bf16.mxu0 0
      %835 = vmatpush1.bf16.msra.mxu0 0
      %836 = vmatprep.subr.bf16.mxu0 0
      %837 = vmatpush1.bf16.msra.mxu0 0
      %838 = vmatprep.subr.bf16.mxu0 0
      %839 = vmatpush1.bf16.msra.mxu0 0
      %840 = vmatprep.subr.bf16.mxu0 0
      %841 = vmatpush1.bf16.msra.mxu0 0
      %842 = vmatprep.subr.bf16.mxu0 0
      %843 = vmatpush1.bf16.msra.mxu0 0
      %844 = vmatprep.subr.bf16.mxu0 0
      %845 = vmatpush1.bf16.msra.mxu0 0
      %846 = vmatprep.subr.bf16.mxu0 0
      %847 = vmatpush1.bf16.msra.mxu0 0
      %848 = vmatprep.subr.bf16.mxu0 0
      %849 = vmatpush1.bf16.msra.mxu0 0
      %850 = vmatprep.mubr.bf16.mxu0 0
      %851 = vmatmul.mubr.bf16.gmra.mrb[0].mxu0 %v762
      %v852 = vpop.f32.mrb[0].mxu0
      %v853 = vadd.f32 %v744, %v852
      %v854 = vpop.f32.mrb[0].mxu0
      %v855 = vpop.f32.mrb[0].mxu0
      %v856 = vadd.f32 %v744, %v855
      %v857 = vpop.f32.mrb[0].mxu0
      %858 = vmatprep.mubr.bf16.mxu0 0
      %859 = vmatmul.mubr.bf16.gmra.mrb[0].mxu0 %v763
      %v860 = vpop.f32.mrb[0].mxu0
      %v861 = vadd.f32 %v744, %v860
      %v862 = vpop.f32.mrb[0].mxu0
      %v863 = vpop.f32.mrb[0].mxu0
      %v864 = vadd.f32 %v744, %v863
      %v865 = vpop.f32.mrb[0].mxu0
      %866 = vmatprep.mubr.bf16.mxu0 0
      %867 = vmatmul.mubr.bf16.gmra.mrb[0].mxu0 %v764
      %v868 = vpop.f32.mrb[0].mxu0
      %v869 = vadd.f32 %v744, %v868
      %v870 = vpop.f32.mrb[0].mxu0
      %v871 = vpop.f32.mrb[0].mxu0
      %v872 = vadd.f32 %v744, %v871
      %v873 = vpop.f32.mrb[0].mxu0
      %874 = vmatprep.mubr.bf16.mxu0 0
      %875 = vmatmul.mubr.bf16.gmra.mrb[0].mxu0 %v765
      %v876 = vpop.f32.mrb[0].mxu0
      %v877 = vadd.f32 %v744, %v876
      %v878 = vpop.f32.mrb[0].mxu0
      %v879 = vpop.f32.mrb[0].mxu0
      %v880 = vadd.f32 %v744, %v879
      %v881 = vpop.f32.mrb[0].mxu0
      %882 = vdwg.mxu0
      %v883 = vadd.f32 %v853, %v685
      %v884 = vadd.f32 %v856, %v688
      %v885 = vadd.f32 %v861, %v693
      %v886 = vadd.f32 %v864, %v696
      %v887 = vadd.f32 %v869, %v701
      %v888 = vadd.f32 %v872, %v704
      %v889 = vadd.f32 %v877, %v709
      %v890 = vadd.f32 %v880, %v712
      %891 = vst [vmem:[%s343] sm:$0xff] %v883
      %892 = vst [vmem:[%s343 + $0x8] sm:$0xff] %v884
      %893 = vst [vmem:[%s343 + $0x10] sm:$0xff] %v885
      %894 = vst [vmem:[%s343 + $0x18] sm:$0xff] %v886
      %895 = vst [vmem:[%s343 + $0x20] sm:$0xff] %v887
      %896 = vst [vmem:[%s343 + $0x28] sm:$0xff] %v888
      %897 = vst [vmem:[%s343 + $0x30] sm:$0xff] %v889
      %898 = vst [vmem:[%s343 + $0x38] sm:$0xff] %v890
      %s899 = smul.u32 8, %s20
      %p900 = scmp.lt.s32.totalorder %s899, 15
      %s901 = scalar_select %p900, %s899, 15
      %s902 = smul.addr %s901, 4
      %s903 = scalar_lea.vmem %s7, %s902
      %s904 = smul.u32 8, %s20
      %p905 = scmp.lt.s32.totalorder %s904, 15
      %s906 = scalar_select %p905, %s904, 15
      %s907 = smul.addr %s906, 8
      %s908 = scalar_lea.vmem %s8, %s907
      // Predicated region
      $region49: #{classifier_forward.6} parent=47 // pred_check
        %p909 = pneg %p195
      $region50: #{classifier_forward.6} parent=47 // pred_check_branch
        %911 = sbr.rel (%p909) target = $region52
      $region51: #{classifier_forward.6} parent=47 // pred_region
        %s912 = smul.u32 8, %s20
      $region52: #{classifier_forward.6} parent=47 // pred_fallthru
        _
      // Predicated region
      $region53: #{classifier_forward.6} parent=47 // pred_check
        %p913 = pneg %p221
      $region54: #{classifier_forward.6} parent=47 // pred_check_branch
        %915 = sbr.rel (%p913) target = $region56
      $region55: #{classifier_forward.6} parent=47 // pred_region
        %s916 = smul.u32 8, %s20
      $region56: #{classifier_forward.6} parent=47 // pred_fallthru
        _
    $region48: #{classifier_forward.6} parent=5 // pred_fallthru
      _
    %p917 = scmp.le.s32.totalorder 2, %s15
    // Predicated region
    $region57: #{classifier_forward.6} parent=5 // pred_check
      %p918 = pneg %p917
    $region58: #{classifier_forward.6} parent=5 // pred_check_branch
      %920 = sbr.rel (%p918) target = $region60
    $region59: #{classifier_forward.6} parent=5 // pred_region
      %s921 = ssub.s32 %s15, 2
      // Predicated region
      $region61: #{classifier_forward.6} parent=59 // pred_check
        %p922 = pneg %p201
      $region62: #{classifier_forward.6} parent=59 // pred_check_branch
        %924 = sbr.rel (%p922) target = $region64
      $region63: #{classifier_forward.6} parent=59 // pred_region
        %s925 = smul.u32 8, %s21
        %p926 = scmp.lt.s32.totalorder %s925, 15
        %s927 = scalar_select %p926, %s925, 15
        %s928 = smul.addr %s927, 4
        %s929 = scalar_lea.vmem %s7, %s928
      $region64: #{classifier_forward.6} parent=59 // pred_fallthru
        _
      // Predicated region
      $region65: #{classifier_forward.6} parent=59 // pred_check
        %p930 = pneg %p227
      $region66: #{classifier_forward.6} parent=59 // pred_check_branch
        %932 = sbr.rel (%p930) target = $region68
      $region67: #{classifier_forward.6} parent=59 // pred_region
        %s933 = smul.u32 8, %s21
        %p934 = scmp.lt.s32.totalorder %s933, 15
        %s935 = scalar_select %p934, %s933, 15
        %s936 = smul.addr %s935, 8
        %s937 = scalar_lea.vmem %s8, %s936
      $region68: #{classifier_forward.6} parent=59 // pred_fallthru
        _
    $region60: #{classifier_forward.6} parent=5 // pred_fallthru
      _
  $region6: #{classifier_forward.6} parent=0 // loop_footer
    %s19 = sadd.s32 1, %s15
  $region7: #{classifier_forward.6} parent=0 // loop_footer_branch
    %14 = sbr.rel target = $region3
  $region8: #{classifier_forward.6} parent=0 // loop_exit
    _

</llo_original>
